<compile_context>
chip_gen: v7x
topology: tpu7x:2x2x1
jax: 0.10.0
libtpu: 0.0.40
codegen_flags: <defaults>
</compile_context>

<pallas_src>
import math
import functools

import jax
import jax.numpy as jnp
from jax.experimental import pallas as pl
from jax.experimental.pallas import tpu as pltpu


# ---------------------------------------------------------------- kernels ---

def _lin_qkv_kernel(x_ref, wlin_ref, blin_ref, wq_ref, bq_ref, wk_ref, bk_ref,
                    wv_ref, bv_ref, y_ref, q_ref, k_ref, v_ref,
                    *, num_heads, head_dim):
    # One (batch, seq-tile) block per grid step: input Linear + fused Q/K/V.
    x = x_ref[0].astype(jnp.bfloat16)                                # (TS, Din)
    y = jnp.dot(x, wlin_ref[...], preferred_element_type=jnp.float32) + blin_ref[...]
    yb = y.astype(jnp.bfloat16)
    y_ref[0] = yb
    # Q weights/bias are pre-scaled by 1/sqrt(head_dim) in prepare_params().
    q = jnp.dot(yb, wq_ref[...], preferred_element_type=jnp.float32) + bq_ref[...]
    k = jnp.dot(yb, wk_ref[...], preferred_element_type=jnp.float32) + bk_ref[...]
    v = jnp.dot(yb, wv_ref[...], preferred_element_type=jnp.float32) + bv_ref[...]
    # Head split done here with static lane slices (no XLA transpose / extra
    # HBM round-trip); outputs are already (B, nh, S, hd).
    for h in range(num_heads):
        sl = slice(h * head_dim, (h + 1) * head_dim)
        q_ref[0, h] = q[:, sl].astype(jnp.bfloat16)
        k_ref[0, h] = k[:, sl].astype(jnp.bfloat16)
        v_ref[0, h] = v[:, sl].astype(jnp.bfloat16)


def _attn_proj_ln1_kernel(q_ref, k_ref, v_ref, y_ref, wo_ref, bo_ref,
                          g1_ref, b1_ref, z_ref, attn_sc,
                          *, num_heads, head_dim, eps):
    # Blocks are (1, nh, TQ/S, hd); heads ride the batch axis of the einsum,
    # so the MXU sees one instruction stream for all heads (no per-head dots).
    q = q_ref[0]                                                     # (nh, TQ, hd) bf16
    k = k_ref[0]                                                     # (nh, S,  hd) bf16
    v = v_ref[0]                                                     # (nh, S,  hd) bf16
    s = jnp.einsum("hqd,hkd->hqk", q, k,
                   preferred_element_type=jnp.float32)               # (nh, TQ, S) f32
    s = s - jnp.max(s, axis=-1, keepdims=True)
    p = jnp.exp(s)
    p = p * pl.reciprocal(jnp.sum(p, axis=-1, keepdims=True), approx=True)
    o = jnp.einsum("hqk,hkd->hqd", p.astype(jnp.bfloat16), v,
                   preferred_element_type=jnp.float32)               # (nh, TQ, hd) f32
    # Merge heads into a lane-dense (TQ, H) buffer (static lane-offset stores).
    for h in range(num_heads):
        attn_sc[:, h * head_dim:(h + 1) * head_dim] = o[h]
    attn = attn_sc[...].astype(jnp.bfloat16)                         # (TQ, H)
    # Output projection + residual + LayerNorm1 (post-norm), fused here so the
    # FFN kernel's reduction steps stay uniform.
    proj = jnp.dot(attn, wo_ref[...], preferred_element_type=jnp.float32) + bo_ref[...]
    zres = y_ref[0].astype(jnp.float32) + proj
    mean = jnp.mean(zres, axis=-1, keepdims=True)
    var = jnp.mean((zres - mean) ** 2, axis=-1, keepdims=True)
    z = (zres - mean) * jax.lax.rsqrt(var + eps) * g1_ref[...] + b1_ref[...]
    z_ref[0] = z.astype(jnp.bfloat16)


def _ffn_ln2_kernel(z_ref, w1_ref, b1_ref, w2_ref, b2_ref, g2_ref, bn2_ref,
                    o_ref, acc_sc, *, eps):
    # grid = (M_tiles, F_tiles); F is the (last) reduction axis.
    f_idx = pl.program_id(1)

    @pl.when(f_idx == 0)
    def _():
        acc_sc[...] = jnp.zeros_like(acc_sc)

    # FFN first layer on this F-block + partial second-layer contraction.
    h = jnp.dot(z_ref[...], w1_ref[...], preferred_element_type=jnp.float32) + b1_ref[...]
    h = jnp.maximum(h, 0.0).astype(jnp.bfloat16)                     # ReLU -> bf16
    acc_sc[...] += jnp.dot(h, w2_ref[...], preferred_element_type=jnp.float32)

    @pl.when(f_idx == pl.num_programs(1) - 1)
    def _():
        r = z_ref[...].astype(jnp.float32) + acc_sc[...] + b2_ref[...]   # residual
        mean = jnp.mean(r, axis=-1, keepdims=True)
        var = jnp.mean((r - mean) ** 2, axis=-1, keepdims=True)
        o_ref[...] = ((r - mean) * jax.lax.rsqrt(var + eps)
                      * g2_ref[...] + bn2_ref[...]).astype(o_ref.dtype)


# ---------------------------------------------------------------- wrapper ---

def prepare_params(p, num_heads):
    """One-time weight re-layout: transposes, scale folding, bf16 casts."""
    H = p["w_lin"].shape[0]
    hd = H // num_heads
    scale = 1.0 / math.sqrt(hd)
    wq, wk, wv = jnp.split(p["w_qkv"], 3, axis=0)          # each (H, H), torch (out, in)
    bq, bk, bv = jnp.split(p["b_qkv"], 3, axis=0)
    F = p["w1"].shape[0]
    bf, f32 = jnp.bfloat16, jnp.float32
    return {
        "w_lin_t": p["w_lin"].T.astype(bf),                 # (Din, H)
        "b_lin": p["b_lin"].reshape(1, H).astype(f32),
        "wq_t": (wq.T * scale).astype(bf),                  # scale folded into Q proj
        "bq": (bq * scale).reshape(1, H).astype(f32),
        "wk_t": wk.T.astype(bf), "bk": bk.reshape(1, H).astype(f32),
        "wv_t": wv.T.astype(bf), "bv": bv.reshape(1, H).astype(f32),
        "wo_t": p["w_out"].T.astype(bf), "bo": p["b_out"].reshape(1, H).astype(f32),
        "ln1_g": p["ln1_g"].reshape(1, H).astype(f32),
        "ln1_b": p["ln1_b"].reshape(1, H).astype(f32),
        "w1_t": p["w1"].T.astype(bf),                       # (H, F)
        "b1": p["b1"].reshape(1, F).astype(f32),
        "w2_t": p["w2"].T.astype(bf),                       # (F, H)
        "b2": p["b2"].reshape(1, H).astype(f32),
        "ln2_g": p["ln2_g"].reshape(1, H).astype(f32),
        "ln2_b": p["ln2_b"].reshape(1, H).astype(f32),
    }


def encoder_llata_forward(x, pp, *, num_heads, eps=1e-5,
                          ts=512, tq=256, tm=512, tf=1024, vmem_limit_mb=64):
    B, S, Din = x.shape
    H = pp["w_lin_t"].shape[1]
    F = pp["w1_t"].shape[1]
    hd = H // num_heads
    M = B * S

    TS = min(ts, S)
    if S % TS:
        TS = S          # padded S rows would corrupt attention keys: keep exact
    TQ = min(tq, S)
    if S % TQ:
        TQ = S
    TM = min(tm, M)     # padded M rows are benign (row-local ops only)
    TF = min(tf, F)
    assert F % TF == 0, "tf must evenly divide dim_feedforward (reduction tail)"

    n_st = pl.cdiv(S, TS)
    n_qt = pl.cdiv(S, TQ)
    n_mt = pl.cdiv(M, TM)
    n_ft = F // TF

    vmem_limit = int(vmem_limit_mb) * 1024 * 1024

    # advisory cost estimates (whole-call totals)
    ce1 = pl.CostEstimate(
        flops=2 * M * Din * H + 6 * M * H * H, transcendentals=0,
        bytes_accessed=M * Din * 4 + (Din * H + 3 * H * H) * 2 + 4 * M * H * 2)
    ce2 = pl.CostEstimate(
        flops=4 * B * S * S * H + 2 * M * H * H,
        transcendentals=B * num_heads * S * S,
        bytes_accessed=6 * M * H * 2 + H * H * 2)
    ce3 = pl.CostEstimate(
        flops=4 * M * H * F, transcendentals=M,
        bytes_accessed=M * H * 2 + 4 * H * F + M * H * 4)

    # 1) input Linear + fused Q/K/V projections; q/k/v written head-split.
    y, q, k, v = pl.pallas_call(
        functools.partial(_lin_qkv_kernel, num_heads=num_heads, head_dim=hd),
        out_shape=(
            jax.ShapeDtypeStruct((B, S, H), jnp.bfloat16),
            jax.ShapeDtypeStruct((B, num_heads, S, hd), jnp.bfloat16),
            jax.ShapeDtypeStruct((B, num_heads, S, hd), jnp.bfloat16),
            jax.ShapeDtypeStruct((B, num_heads, S, hd), jnp.bfloat16),
        ),
        grid=(B, n_st),
        in_specs=[
            pl.BlockSpec((1, TS, Din), lambda b, s: (b, s, 0)),
            pl.BlockSpec((Din, H), lambda b, s: (0, 0)),
            pl.BlockSpec((1, H), lambda b, s: (0, 0)),
            pl.BlockSpec((H, H), lambda b, s: (0, 0)),
            pl.BlockSpec((1, H), lambda b, s: (0, 0)),
            pl.BlockSpec((H, H), lambda b, s: (0, 0)),
            pl.BlockSpec((1, H), lambda b, s: (0, 0)),
            pl.BlockSpec((H, H), lambda b, s: (0, 0)),
            pl.BlockSpec((1, H), lambda b, s: (0, 0)),
        ],
        out_specs=(
            pl.BlockSpec((1, TS, H), lambda b, s: (b, s, 0)),
            pl.BlockSpec((1, num_heads, TS, hd), lambda b, s: (b, 0, s, 0)),
            pl.BlockSpec((1, num_heads, TS, hd), lambda b, s: (b, 0, s, 0)),
            pl.BlockSpec((1, num_heads, TS, hd), lambda b, s: (b, 0, s, 0)),
        ),
        compiler_params=pltpu.CompilerParams(
            dimension_semantics=("parallel", "parallel"),
            vmem_limit_bytes=vmem_limit),
        cost_estimate=ce1,
    )(x, pp["w_lin_t"], pp["b_lin"], pp["wq_t"], pp["bq"],
      pp["wk_t"], pp["bk"], pp["wv_t"], pp["bv"])

    # 2) multi-head self-attention + output projection + residual + LayerNorm1.
    z = pl.pallas_call(
        functools.partial(_attn_proj_ln1_kernel, num_heads=num_heads,
                          head_dim=hd, eps=eps),
        out_shape=jax.ShapeDtypeStruct((B, S, H), jnp.bfloat16),
        grid=(B, n_qt),
        in_specs=[
            pl.BlockSpec((1, num_heads, TQ, hd), lambda b, qi: (b, 0, qi, 0)),
            pl.BlockSpec((1, num_heads, S, hd), lambda b, qi: (b, 0, 0, 0)),
            pl.BlockSpec((1, num_heads, S, hd), lambda b, qi: (b, 0, 0, 0)),
            pl.BlockSpec((1, TQ, H), lambda b, qi: (b, qi, 0)),
            pl.BlockSpec((H, H), lambda b, qi: (0, 0)),
            pl.BlockSpec((1, H), lambda b, qi: (0, 0)),
            pl.BlockSpec((1, H), lambda b, qi: (0, 0)),
            pl.BlockSpec((1, H), lambda b, qi: (0, 0)),
        ],
        out_specs=pl.BlockSpec((1, TQ, H), lambda b, qi: (b, qi, 0)),
        scratch_shapes=[pltpu.VMEM((TQ, H), jnp.float32)],   # merged-head buffer
        compiler_params=pltpu.CompilerParams(
            dimension_semantics=("parallel", "parallel"),
            vmem_limit_bytes=vmem_limit),
        cost_estimate=ce2,
    )(q, k, v, y, pp["wo_t"], pp["bo"], pp["ln1_g"], pp["ln1_b"])

    # 3) FFN (F-axis reduction with accumulator) + residual + LayerNorm2.
    out = pl.pallas_call(
        functools.partial(_ffn_ln2_kernel, eps=eps),
        out_shape=jax.ShapeDtypeStruct((M, H), jnp.float32),
        grid=(n_mt, n_ft),
        in_specs=[
            pl.BlockSpec((TM, H), lambda i, f: (i, 0)),   # z (LN1 output, bf16)
            pl.BlockSpec((H, TF), lambda i, f: (0, f)),   # w1 block
            pl.BlockSpec((1, TF), lambda i, f: (0, f)),   # b1 block
            pl.BlockSpec((TF, H), lambda i, f: (f, 0)),   # w2 block
            pl.BlockSpec((1, H), lambda i, f: (0, 0)),    # b2
            pl.BlockSpec((1, H), lambda i, f: (0, 0)),    # ln2 gamma
            pl.BlockSpec((1, H), lambda i, f: (0, 0)),    # ln2 beta
        ],
        out_specs=pl.BlockSpec((TM, H), lambda i, f: (i, 0)),
        scratch_shapes=[pltpu.VMEM((TM, H), jnp.float32)],   # FFN accumulator
        compiler_params=pltpu.CompilerParams(
            dimension_semantics=("parallel", "arbitrary"),
            vmem_limit_bytes=vmem_limit),
        cost_estimate=ce3,
    )(z.reshape(M, H), pp["w1_t"], pp["b1"], pp["w2_t"], pp["b2"],
      pp["ln2_g"], pp["ln2_b"])

    return out.reshape(B, S, H)


# ------------------------------------------------------- params & reference -

def init_params(key, input_dim, hidden_dim, ffn_dim):
    ks = jax.random.split(key, 8)

    def u(k, shape, fan_in):
        bound = 1.0 / math.sqrt(fan_in)
        return jax.random.uniform(k, shape, jnp.float32, -bound, bound)

    return {
        "w_lin": u(ks[0], (hidden_dim, input_dim), input_dim),
        "b_lin": u(ks[1], (hidden_dim,), input_dim),
        "w_qkv": u(ks[2], (3 * hidden_dim, hidden_dim), hidden_dim),
        "b_qkv": jnp.zeros((3 * hidden_dim,), jnp.float32),
        "w_out": u(ks[3], (hidden_dim, hidden_dim), hidden_dim),
        "b_out": jnp.zeros((hidden_dim,), jnp.float32),
        "ln1_g": jnp.ones((hidden_dim,), jnp.float32),
        "ln1_b": jnp.zeros((hidden_dim,), jnp.float32),
        "w1": u(ks[4], (ffn_dim, hidden_dim), hidden_dim),
        "b1": u(ks[5], (ffn_dim,), hidden_dim),
        "w2": u(ks[6], (hidden_dim, ffn_dim), ffn_dim),
        "b2": u(ks[7], (hidden_dim,), ffn_dim),
        "ln2_g": jnp.ones((hidden_dim,), jnp.float32),
        "ln2_b": jnp.zeros((hidden_dim,), jnp.float32),
    }


def reference(x, p, num_heads, eps=1e-5):
    y = x @ p["w_lin"].T + p["b_lin"]
    B, S, H = y.shape
    hd = H // num_heads
    qkv = y @ p["w_qkv"].T + p["b_qkv"]
    q, k, v = jnp.split(qkv, 3, axis=-1)

    def heads(t):
        return t.reshape(B, S, num_heads, hd).transpose(0, 2, 1, 3)

    qh, kh, vh = heads(q), heads(k), heads(v)
    s = jnp.einsum("bhqd,bhkd->bhqk", qh, kh) / math.sqrt(hd)
    a = jax.nn.softmax(s, axis=-1)
    o = jnp.einsum("bhqk,bhkd->bhqd", a, vh).transpose(0, 2, 1, 3).reshape(B, S, H)
    o = o @ p["w_out"].T + p["b_out"]
    z = y + o
    z = ((z - z.mean(-1, keepdims=True))
         / jnp.sqrt(z.var(-1, keepdims=True) + eps)) * p["ln1_g"] + p["ln1_b"]
    f = jax.nn.relu(z @ p["w1"].T + p["b1"]) @ p["w2"].T + p["b2"]
    r = z + f
    r = ((r - r.mean(-1, keepdims=True))
         / jnp.sqrt(r.var(-1, keepdims=True) + eps)) * p["ln2_g"] + p["ln2_b"]
    return r


# ------------------------------------------------------------------- main ---

if __name__ == "__main__":
    B, S, Din = 2, 8, 16          # batch, seq, input_dim
    H, NH, FF = 32, 4, 2048       # hidden_dim, num_heads, dim_feedforward (torch default)

    key = jax.random.PRNGKey(0)
    kx, kp = jax.random.split(key)
    x = jax.random.normal(kx, (B, S, Din), jnp.float32)
    params = init_params(kp, Din, H, FF)
    pp = prepare_params(params, NH)      # one-time weight re-layout (bf16)

    fwd = jax.jit(functools.partial(encoder_llata_forward, num_heads=NH))
    out = jax.block_until_ready(fwd(x, pp))

    ref = reference(x, params, NH)       # f32 reference
    assert out.shape == (B, S, H)
    # bf16 MXU inputs + bf16 HBM intermediates -> compare at bf16 accuracy.
    rel = float(jnp.linalg.norm(out - ref) / jnp.linalg.norm(ref))
    assert rel < 2e-2, rel

    print("KERNEL_OK")
</pallas_src>

<mosaic_0001>
module attributes {stable_mosaic.version = 11 : i64} {
  func.func @_lin_qkv_kernel(%arg0: i32, %arg1: i32, %arg2: memref<1x8x16xf32, #tpu.memory_space<vmem>>, %arg3: memref<16x32xbf16, #tpu.memory_space<vmem>>, %arg4: memref<1x32xf32, #tpu.memory_space<vmem>>, %arg5: memref<32x32xbf16, #tpu.memory_space<vmem>>, %arg6: memref<1x32xf32, #tpu.memory_space<vmem>>, %arg7: memref<32x32xbf16, #tpu.memory_space<vmem>>, %arg8: memref<1x32xf32, #tpu.memory_space<vmem>>, %arg9: memref<32x32xbf16, #tpu.memory_space<vmem>>, %arg10: memref<1x32xf32, #tpu.memory_space<vmem>>, %arg11: memref<1x8x32xbf16, #tpu.memory_space<vmem>>, %arg12: memref<1x4x8x8xbf16, #tpu.memory_space<vmem>>, %arg13: memref<1x4x8x8xbf16, #tpu.memory_space<vmem>>, %arg14: memref<1x4x8x8xbf16, #tpu.memory_space<vmem>>) attributes {dimension_semantics = [#tpu.dimension_semantics<parallel>, #tpu.dimension_semantics<parallel>], iteration_bounds = array<i64: 2, 1>, scalar_prefetch = 0 : i64, scratch_operands = 0 : i64, tpu.core_type = #tpu.core_type<tc>, window_params = [{transform_indices = @transform_0, window_bounds = array<i64: 1, 8, 16>}, {pipeline_mode = #tpu.pipeline_mode<synchronous>, transform_indices = @transform_1, window_bounds = array<i64: 16, 32>}, {pipeline_mode = #tpu.pipeline_mode<synchronous>, transform_indices = @transform_2, window_bounds = array<i64: 1, 32>}, {pipeline_mode = #tpu.pipeline_mode<synchronous>, transform_indices = @transform_3, window_bounds = array<i64: 32, 32>}, {pipeline_mode = #tpu.pipeline_mode<synchronous>, transform_indices = @transform_4, window_bounds = array<i64: 1, 32>}, {pipeline_mode = #tpu.pipeline_mode<synchronous>, transform_indices = @transform_5, window_bounds = array<i64: 32, 32>}, {pipeline_mode = #tpu.pipeline_mode<synchronous>, transform_indices = @transform_6, window_bounds = array<i64: 1, 32>}, {pipeline_mode = #tpu.pipeline_mode<synchronous>, transform_indices = @transform_7, window_bounds = array<i64: 32, 32>}, {pipeline_mode = #tpu.pipeline_mode<synchronous>, transform_indices = @transform_8, window_bounds = array<i64: 1, 32>}, {transform_indices = @transform_9, window_bounds = array<i64: 1, 8, 32>}, {transform_indices = @transform_10, window_bounds = array<i64: 1, 4, 8, 8>}, {transform_indices = @transform_11, window_bounds = array<i64: 1, 4, 8, 8>}, {transform_indices = @transform_12, window_bounds = array<i64: 1, 4, 8, 8>}]} {
    %c0 = arith.constant 0 : index
    %c0_0 = arith.constant 0 : index
    %c0_1 = arith.constant 0 : index
    %0 = vector.load %arg2[%c0, %c0_0, %c0_1] : memref<1x8x16xf32, #tpu.memory_space<vmem>>, vector<1x8x16xf32>
    %1 = vector.shape_cast %0 : vector<1x8x16xf32> to vector<8x16xf32>
    %2 = arith.truncf %1 : vector<8x16xf32> to vector<8x16xbf16>
    %c0_2 = arith.constant 0 : index
    %c0_3 = arith.constant 0 : index
    %3 = vector.load %arg3[%c0_2, %c0_3] : memref<16x32xbf16, #tpu.memory_space<vmem>>, vector<16x32xbf16>
    %cst = arith.constant dense<0.000000e+00> : vector<8x32xf32>
    %4 = tpu.matmul %2, %3, %cst {dimension_numbers = #tpu.dot_dimension_numbers<[1], [0], [0], [1], [0, 0, 1, 1], [], []>} : vector<8x16xbf16>, vector<16x32xbf16>, vector<8x32xf32> -> vector<8x32xf32>
    %c0_4 = arith.constant 0 : index
    %c0_5 = arith.constant 0 : index
    %5 = vector.load %arg4[%c0_4, %c0_5] : memref<1x32xf32, #tpu.memory_space<vmem>>, vector<1x32xf32>
    %6 = vector.broadcast %5 : vector<1x32xf32> to vector<8x32xf32>
    %7 = arith.addf %4, %6 : vector<8x32xf32>
    %8 = arith.truncf %7 : vector<8x32xf32> to vector<8x32xbf16>
    %c0_6 = arith.constant 0 : index
    %c0_7 = arith.constant 0 : index
    %c0_8 = arith.constant 0 : index
    %9 = vector.load %arg11[%c0_6, %c0_7, %c0_8] : memref<1x8x32xbf16, #tpu.memory_space<vmem>>, vector<1x8x32xbf16>
    %10 = vector.shape_cast %9 : vector<1x8x32xbf16> to vector<8x32xbf16>
    %11 = vector.shape_cast %8 : vector<8x32xbf16> to vector<1x8x32xbf16>
    tpu.vector_store %arg11[%c0_6, %c0_7, %c0_8], %11 {strides = array<i32>} : memref<1x8x32xbf16, #tpu.memory_space<vmem>>, vector<1x8x32xbf16>,
    %c0_9 = arith.constant 0 : index
    %c0_10 = arith.constant 0 : index
    %12 = vector.load %arg5[%c0_9, %c0_10] : memref<32x32xbf16, #tpu.memory_space<vmem>>, vector<32x32xbf16>
    %cst_11 = arith.constant dense<0.000000e+00> : vector<8x32xf32>
    %13 = tpu.matmul %8, %12, %cst_11 {dimension_numbers = #tpu.dot_dimension_numbers<[1], [0], [0], [1], [0, 0, 1, 1], [], []>} : vector<8x32xbf16>, vector<32x32xbf16>, vector<8x32xf32> -> vector<8x32xf32>
    %c0_12 = arith.constant 0 : index
    %c0_13 = arith.constant 0 : index
    %14 = vector.load %arg6[%c0_12, %c0_13] : memref<1x32xf32, #tpu.memory_space<vmem>>, vector<1x32xf32>
    %15 = vector.broadcast %14 : vector<1x32xf32> to vector<8x32xf32>
    %16 = arith.addf %13, %15 : vector<8x32xf32>
    %c0_14 = arith.constant 0 : index
    %c0_15 = arith.constant 0 : index
    %17 = vector.load %arg7[%c0_14, %c0_15] : memref<32x32xbf16, #tpu.memory_space<vmem>>, vector<32x32xbf16>
    %cst_16 = arith.constant dense<0.000000e+00> : vector<8x32xf32>
    %18 = tpu.matmul %8, %17, %cst_16 {dimension_numbers = #tpu.dot_dimension_numbers<[1], [0], [0], [1], [0, 0, 1, 1], [], []>} : vector<8x32xbf16>, vector<32x32xbf16>, vector<8x32xf32> -> vector<8x32xf32>
    %c0_17 = arith.constant 0 : index
    %c0_18 = arith.constant 0 : index
    %19 = vector.load %arg8[%c0_17, %c0_18] : memref<1x32xf32, #tpu.memory_space<vmem>>, vector<1x32xf32>
    %20 = vector.broadcast %19 : vector<1x32xf32> to vector<8x32xf32>
    %21 = arith.addf %18, %20 : vector<8x32xf32>
    %c0_19 = arith.constant 0 : index
    %c0_20 = arith.constant 0 : index
    %22 = vector.load %arg9[%c0_19, %c0_20] : memref<32x32xbf16, #tpu.memory_space<vmem>>, vector<32x32xbf16>
    %cst_21 = arith.constant dense<0.000000e+00> : vector<8x32xf32>
    %23 = tpu.matmul %8, %22, %cst_21 {dimension_numbers = #tpu.dot_dimension_numbers<[1], [0], [0], [1], [0, 0, 1, 1], [], []>} : vector<8x32xbf16>, vector<32x32xbf16>, vector<8x32xf32> -> vector<8x32xf32>
    %c0_22 = arith.constant 0 : index
    %c0_23 = arith.constant 0 : index
    %24 = vector.load %arg10[%c0_22, %c0_23] : memref<1x32xf32, #tpu.memory_space<vmem>>, vector<1x32xf32>
    %25 = vector.broadcast %24 : vector<1x32xf32> to vector<8x32xf32>
    %26 = arith.addf %23, %25 : vector<8x32xf32>
    %27 = vector.extract_strided_slice %16 {offsets = [0, 0], sizes = [8, 8], strides = [1, 1]} : vector<8x32xf32> to vector<8x8xf32>
    %28 = arith.truncf %27 : vector<8x8xf32> to vector<8x8xbf16>
    %c0_24 = arith.constant 0 : index
    %c0_25 = arith.constant 0 : index
    %c0_26 = arith.constant 0 : index
    %c0_27 = arith.constant 0 : index
    %29 = vector.load %arg12[%c0_24, %c0_25, %c0_26, %c0_27] : memref<1x4x8x8xbf16, #tpu.memory_space<vmem>>, vector<1x1x8x8xbf16>
    %30 = vector.shape_cast %29 : vector<1x1x8x8xbf16> to vector<8x8xbf16>
    %31 = vector.shape_cast %28 : vector<8x8xbf16> to vector<1x1x8x8xbf16>
    tpu.vector_store %arg12[%c0_24, %c0_25, %c0_26, %c0_27], %31 {strides = array<i32>} : memref<1x4x8x8xbf16, #tpu.memory_space<vmem>>, vector<1x1x8x8xbf16>,
    %32 = vector.extract_strided_slice %21 {offsets = [0, 0], sizes = [8, 8], strides = [1, 1]} : vector<8x32xf32> to vector<8x8xf32>
    %33 = arith.truncf %32 : vector<8x8xf32> to vector<8x8xbf16>
    %c0_28 = arith.constant 0 : index
    %c0_29 = arith.constant 0 : index
    %c0_30 = arith.constant 0 : index
    %c0_31 = arith.constant 0 : index
    %34 = vector.load %arg13[%c0_28, %c0_29, %c0_30, %c0_31] : memref<1x4x8x8xbf16, #tpu.memory_space<vmem>>, vector<1x1x8x8xbf16>
    %35 = vector.shape_cast %34 : vector<1x1x8x8xbf16> to vector<8x8xbf16>
    %36 = vector.shape_cast %33 : vector<8x8xbf16> to vector<1x1x8x8xbf16>
    tpu.vector_store %arg13[%c0_28, %c0_29, %c0_30, %c0_31], %36 {strides = array<i32>} : memref<1x4x8x8xbf16, #tpu.memory_space<vmem>>, vector<1x1x8x8xbf16>,
    %37 = vector.extract_strided_slice %26 {offsets = [0, 0], sizes = [8, 8], strides = [1, 1]} : vector<8x32xf32> to vector<8x8xf32>
    %38 = arith.truncf %37 : vector<8x8xf32> to vector<8x8xbf16>
    %c0_32 = arith.constant 0 : index
    %c0_33 = arith.constant 0 : index
    %c0_34 = arith.constant 0 : index
    %c0_35 = arith.constant 0 : index
    %39 = vector.load %arg14[%c0_32, %c0_33, %c0_34, %c0_35] : memref<1x4x8x8xbf16, #tpu.memory_space<vmem>>, vector<1x1x8x8xbf16>
    %40 = vector.shape_cast %39 : vector<1x1x8x8xbf16> to vector<8x8xbf16>
    %41 = vector.shape_cast %38 : vector<8x8xbf16> to vector<1x1x8x8xbf16>
    tpu.vector_store %arg14[%c0_32, %c0_33, %c0_34, %c0_35], %41 {strides = array<i32>} : memref<1x4x8x8xbf16, #tpu.memory_space<vmem>>, vector<1x1x8x8xbf16>,
    %42 = vector.extract_strided_slice %16 {offsets = [0, 8], sizes = [8, 8], strides = [1, 1]} : vector<8x32xf32> to vector<8x8xf32>
    %43 = arith.truncf %42 : vector<8x8xf32> to vector<8x8xbf16>
    %c0_36 = arith.constant 0 : index
    %c1 = arith.constant 1 : index
    %c0_37 = arith.constant 0 : index
    %c0_38 = arith.constant 0 : index
    %44 = vector.load %arg12[%c0_36, %c1, %c0_37, %c0_38] : memref<1x4x8x8xbf16, #tpu.memory_space<vmem>>, vector<1x1x8x8xbf16>
    %45 = vector.shape_cast %44 : vector<1x1x8x8xbf16> to vector<8x8xbf16>
    %46 = vector.shape_cast %43 : vector<8x8xbf16> to vector<1x1x8x8xbf16>
    tpu.vector_store %arg12[%c0_36, %c1, %c0_37, %c0_38], %46 {strides = array<i32>} : memref<1x4x8x8xbf16, #tpu.memory_space<vmem>>, vector<1x1x8x8xbf16>,
    %47 = vector.extract_strided_slice %21 {offsets = [0, 8], sizes = [8, 8], strides = [1, 1]} : vector<8x32xf32> to vector<8x8xf32>
    %48 = arith.truncf %47 : vector<8x8xf32> to vector<8x8xbf16>
    %c0_39 = arith.constant 0 : index
    %c1_40 = arith.constant 1 : index
    %c0_41 = arith.constant 0 : index
    %c0_42 = arith.constant 0 : index
    %49 = vector.load %arg13[%c0_39, %c1_40, %c0_41, %c0_42] : memref<1x4x8x8xbf16, #tpu.memory_space<vmem>>, vector<1x1x8x8xbf16>
    %50 = vector.shape_cast %49 : vector<1x1x8x8xbf16> to vector<8x8xbf16>
    %51 = vector.shape_cast %48 : vector<8x8xbf16> to vector<1x1x8x8xbf16>
    tpu.vector_store %arg13[%c0_39, %c1_40, %c0_41, %c0_42], %51 {strides = array<i32>} : memref<1x4x8x8xbf16, #tpu.memory_space<vmem>>, vector<1x1x8x8xbf16>,
    %52 = vector.extract_strided_slice %26 {offsets = [0, 8], sizes = [8, 8], strides = [1, 1]} : vector<8x32xf32> to vector<8x8xf32>
    %53 = arith.truncf %52 : vector<8x8xf32> to vector<8x8xbf16>
    %c0_43 = arith.constant 0 : index
    %c1_44 = arith.constant 1 : index
    %c0_45 = arith.constant 0 : index
    %c0_46 = arith.constant 0 : index
    %54 = vector.load %arg14[%c0_43, %c1_44, %c0_45, %c0_46] : memref<1x4x8x8xbf16, #tpu.memory_space<vmem>>, vector<1x1x8x8xbf16>
    %55 = vector.shape_cast %54 : vector<1x1x8x8xbf16> to vector<8x8xbf16>
    %56 = vector.shape_cast %53 : vector<8x8xbf16> to vector<1x1x8x8xbf16>
    tpu.vector_store %arg14[%c0_43, %c1_44, %c0_45, %c0_46], %56 {strides = array<i32>} : memref<1x4x8x8xbf16, #tpu.memory_space<vmem>>, vector<1x1x8x8xbf16>,
    %57 = vector.extract_strided_slice %16 {offsets = [0, 16], sizes = [8, 8], strides = [1, 1]} : vector<8x32xf32> to vector<8x8xf32>
    %58 = arith.truncf %57 : vector<8x8xf32> to vector<8x8xbf16>
    %c0_47 = arith.constant 0 : index
    %c2 = arith.constant 2 : index
    %c0_48 = arith.constant 0 : index
    %c0_49 = arith.constant 0 : index
    %59 = vector.load %arg12[%c0_47, %c2, %c0_48, %c0_49] : memref<1x4x8x8xbf16, #tpu.memory_space<vmem>>, vector<1x1x8x8xbf16>
    %60 = vector.shape_cast %59 : vector<1x1x8x8xbf16> to vector<8x8xbf16>
    %61 = vector.shape_cast %58 : vector<8x8xbf16> to vector<1x1x8x8xbf16>
    tpu.vector_store %arg12[%c0_47, %c2, %c0_48, %c0_49], %61 {strides = array<i32>} : memref<1x4x8x8xbf16, #tpu.memory_space<vmem>>, vector<1x1x8x8xbf16>,
    %62 = vector.extract_strided_slice %21 {offsets = [0, 16], sizes = [8, 8], strides = [1, 1]} : vector<8x32xf32> to vector<8x8xf32>
    %63 = arith.truncf %62 : vector<8x8xf32> to vector<8x8xbf16>
    %c0_50 = arith.constant 0 : index
    %c2_51 = arith.constant 2 : index
    %c0_52 = arith.constant 0 : index
    %c0_53 = arith.constant 0 : index
    %64 = vector.load %arg13[%c0_50, %c2_51, %c0_52, %c0_53] : memref<1x4x8x8xbf16, #tpu.memory_space<vmem>>, vector<1x1x8x8xbf16>
    %65 = vector.shape_cast %64 : vector<1x1x8x8xbf16> to vector<8x8xbf16>
    %66 = vector.shape_cast %63 : vector<8x8xbf16> to vector<1x1x8x8xbf16>
    tpu.vector_store %arg13[%c0_50, %c2_51, %c0_52, %c0_53], %66 {strides = array<i32>} : memref<1x4x8x8xbf16, #tpu.memory_space<vmem>>, vector<1x1x8x8xbf16>,
    %67 = vector.extract_strided_slice %26 {offsets = [0, 16], sizes = [8, 8], strides = [1, 1]} : vector<8x32xf32> to vector<8x8xf32>
    %68 = arith.truncf %67 : vector<8x8xf32> to vector<8x8xbf16>
    %c0_54 = arith.constant 0 : index
    %c2_55 = arith.constant 2 : index
    %c0_56 = arith.constant 0 : index
    %c0_57 = arith.constant 0 : index
    %69 = vector.load %arg14[%c0_54, %c2_55, %c0_56, %c0_57] : memref<1x4x8x8xbf16, #tpu.memory_space<vmem>>, vector<1x1x8x8xbf16>
    %70 = vector.shape_cast %69 : vector<1x1x8x8xbf16> to vector<8x8xbf16>
    %71 = vector.shape_cast %68 : vector<8x8xbf16> to vector<1x1x8x8xbf16>
    tpu.vector_store %arg14[%c0_54, %c2_55, %c0_56, %c0_57], %71 {strides = array<i32>} : memref<1x4x8x8xbf16, #tpu.memory_space<vmem>>, vector<1x1x8x8xbf16>,
    %72 = vector.extract_strided_slice %16 {offsets = [0, 24], sizes = [8, 8], strides = [1, 1]} : vector<8x32xf32> to vector<8x8xf32>
    %73 = arith.truncf %72 : vector<8x8xf32> to vector<8x8xbf16>
    %c0_58 = arith.constant 0 : index
    %c3 = arith.constant 3 : index
    %c0_59 = arith.constant 0 : index
    %c0_60 = arith.constant 0 : index
    %74 = vector.load %arg12[%c0_58, %c3, %c0_59, %c0_60] : memref<1x4x8x8xbf16, #tpu.memory_space<vmem>>, vector<1x1x8x8xbf16>
    %75 = vector.shape_cast %74 : vector<1x1x8x8xbf16> to vector<8x8xbf16>
    %76 = vector.shape_cast %73 : vector<8x8xbf16> to vector<1x1x8x8xbf16>
    tpu.vector_store %arg12[%c0_58, %c3, %c0_59, %c0_60], %76 {strides = array<i32>} : memref<1x4x8x8xbf16, #tpu.memory_space<vmem>>, vector<1x1x8x8xbf16>,
    %77 = vector.extract_strided_slice %21 {offsets = [0, 24], sizes = [8, 8], strides = [1, 1]} : vector<8x32xf32> to vector<8x8xf32>
    %78 = arith.truncf %77 : vector<8x8xf32> to vector<8x8xbf16>
    %c0_61 = arith.constant 0 : index
    %c3_62 = arith.constant 3 : index
    %c0_63 = arith.constant 0 : index
    %c0_64 = arith.constant 0 : index
    %79 = vector.load %arg13[%c0_61, %c3_62, %c0_63, %c0_64] : memref<1x4x8x8xbf16, #tpu.memory_space<vmem>>, vector<1x1x8x8xbf16>
    %80 = vector.shape_cast %79 : vector<1x1x8x8xbf16> to vector<8x8xbf16>
    %81 = vector.shape_cast %78 : vector<8x8xbf16> to vector<1x1x8x8xbf16>
    tpu.vector_store %arg13[%c0_61, %c3_62, %c0_63, %c0_64], %81 {strides = array<i32>} : memref<1x4x8x8xbf16, #tpu.memory_space<vmem>>, vector<1x1x8x8xbf16>,
    %82 = vector.extract_strided_slice %26 {offsets = [0, 24], sizes = [8, 8], strides = [1, 1]} : vector<8x32xf32> to vector<8x8xf32>
    %83 = arith.truncf %82 : vector<8x8xf32> to vector<8x8xbf16>
    %c0_65 = arith.constant 0 : index
    %c3_66 = arith.constant 3 : index
    %c0_67 = arith.constant 0 : index
    %c0_68 = arith.constant 0 : index
    %84 = vector.load %arg14[%c0_65, %c3_66, %c0_67, %c0_68] : memref<1x4x8x8xbf16, #tpu.memory_space<vmem>>, vector<1x1x8x8xbf16>
    %85 = vector.shape_cast %84 : vector<1x1x8x8xbf16> to vector<8x8xbf16>
    %86 = vector.shape_cast %83 : vector<8x8xbf16> to vector<1x1x8x8xbf16>
    tpu.vector_store %arg14[%c0_65, %c3_66, %c0_67, %c0_68], %86 {strides = array<i32>} : memref<1x4x8x8xbf16, #tpu.memory_space<vmem>>, vector<1x1x8x8xbf16>,
    return
  }
  func.func @transform_0(%arg0: i32, %arg1: i32) -> (i32, i32, i32) {
    %c0_i32 = arith.constant 0 : i32
    %c0_i32_0 = arith.constant 0 : i32
    return %arg0, %arg1, %c0_i32 : i32, i32, i32
  }
  func.func @transform_1(%arg0: i32, %arg1: i32) -> (i32, i32) {
    %c0_i32 = arith.constant 0 : i32
    %c0_i32_0 = arith.constant 0 : i32
    %c0_i32_1 = arith.constant 0 : i32
    return %c0_i32, %c0_i32_0 : i32, i32
  }
  func.func @transform_2(%arg0: i32, %arg1: i32) -> (i32, i32) {
    %c0_i32 = arith.constant 0 : i32
    %c0_i32_0 = arith.constant 0 : i32
    %c0_i32_1 = arith.constant 0 : i32
    return %c0_i32, %c0_i32_0 : i32, i32
  }
  func.func @transform_3(%arg0: i32, %arg1: i32) -> (i32, i32) {
    %c0_i32 = arith.constant 0 : i32
    %c0_i32_0 = arith.constant 0 : i32
    %c0_i32_1 = arith.constant 0 : i32
    return %c0_i32, %c0_i32_0 : i32, i32
  }
  func.func @transform_4(%arg0: i32, %arg1: i32) -> (i32, i32) {
    %c0_i32 = arith.constant 0 : i32
    %c0_i32_0 = arith.constant 0 : i32
    %c0_i32_1 = arith.constant 0 : i32
    return %c0_i32, %c0_i32_0 : i32, i32
  }
  func.func @transform_5(%arg0: i32, %arg1: i32) -> (i32, i32) {
    %c0_i32 = arith.constant 0 : i32
    %c0_i32_0 = arith.constant 0 : i32
    %c0_i32_1 = arith.constant 0 : i32
    return %c0_i32, %c0_i32_0 : i32, i32
  }
  func.func @transform_6(%arg0: i32, %arg1: i32) -> (i32, i32) {
    %c0_i32 = arith.constant 0 : i32
    %c0_i32_0 = arith.constant 0 : i32
    %c0_i32_1 = arith.constant 0 : i32
    return %c0_i32, %c0_i32_0 : i32, i32
  }
  func.func @transform_7(%arg0: i32, %arg1: i32) -> (i32, i32) {
    %c0_i32 = arith.constant 0 : i32
    %c0_i32_0 = arith.constant 0 : i32
    %c0_i32_1 = arith.constant 0 : i32
    return %c0_i32, %c0_i32_0 : i32, i32
  }
  func.func @transform_8(%arg0: i32, %arg1: i32) -> (i32, i32) {
    %c0_i32 = arith.constant 0 : i32
    %c0_i32_0 = arith.constant 0 : i32
    %c0_i32_1 = arith.constant 0 : i32
    return %c0_i32, %c0_i32_0 : i32, i32
  }
  func.func @transform_9(%arg0: i32, %arg1: i32) -> (i32, i32, i32) {
    %c0_i32 = arith.constant 0 : i32
    %c0_i32_0 = arith.constant 0 : i32
    return %arg0, %arg1, %c0_i32 : i32, i32, i32
  }
  func.func @transform_10(%arg0: i32, %arg1: i32) -> (i32, i32, i32, i32) {
    %c0_i32 = arith.constant 0 : i32
    %c0_i32_0 = arith.constant 0 : i32
    %c0_i32_1 = arith.constant 0 : i32
    return %arg0, %c0_i32, %arg1, %c0_i32_0 : i32, i32, i32, i32
  }
  func.func @transform_11(%arg0: i32, %arg1: i32) -> (i32, i32, i32, i32) {
    %c0_i32 = arith.constant 0 : i32
    %c0_i32_0 = arith.constant 0 : i32
    %c0_i32_1 = arith.constant 0 : i32
    return %arg0, %c0_i32, %arg1, %c0_i32_0 : i32, i32, i32, i32
  }
  func.func @transform_12(%arg0: i32, %arg1: i32) -> (i32, i32, i32, i32) {
    %c0_i32 = arith.constant 0 : i32
    %c0_i32_0 = arith.constant 0 : i32
    %c0_i32_1 = arith.constant 0 : i32
    return %arg0, %c0_i32, %arg1, %c0_i32_0 : i32, i32, i32, i32
  }
}

module attributes {stable_mosaic.version = 11 : i64} {
  func.func @_attn_proj_ln1_kernel(%arg0: i32, %arg1: i32, %arg2: memref<1x4x8x8xbf16, #tpu.memory_space<vmem>>, %arg3: memref<1x4x8x8xbf16, #tpu.memory_space<vmem>>, %arg4: memref<1x4x8x8xbf16, #tpu.memory_space<vmem>>, %arg5: memref<1x8x32xbf16, #tpu.memory_space<vmem>>, %arg6: memref<32x32xbf16, #tpu.memory_space<vmem>>, %arg7: memref<1x32xf32, #tpu.memory_space<vmem>>, %arg8: memref<1x32xf32, #tpu.memory_space<vmem>>, %arg9: memref<1x32xf32, #tpu.memory_space<vmem>>, %arg10: memref<1x8x32xbf16, #tpu.memory_space<vmem>>, %arg11: memref<8x32xf32, #tpu.memory_space<vmem>>) attributes {dimension_semantics = [#tpu.dimension_semantics<parallel>, #tpu.dimension_semantics<parallel>], iteration_bounds = array<i64: 2, 1>, scalar_prefetch = 0 : i64, scratch_operands = 1 : i64, tpu.core_type = #tpu.core_type<tc>, window_params = [{transform_indices = @transform_0, window_bounds = array<i64: 1, 4, 8, 8>}, {transform_indices = @transform_1, window_bounds = array<i64: 1, 4, 8, 8>}, {transform_indices = @transform_2, window_bounds = array<i64: 1, 4, 8, 8>}, {transform_indices = @transform_3, window_bounds = array<i64: 1, 8, 32>}, {pipeline_mode = #tpu.pipeline_mode<synchronous>, transform_indices = @transform_4, window_bounds = array<i64: 32, 32>}, {pipeline_mode = #tpu.pipeline_mode<synchronous>, transform_indices = @transform_5, window_bounds = array<i64: 1, 32>}, {pipeline_mode = #tpu.pipeline_mode<synchronous>, transform_indices = @transform_6, window_bounds = array<i64: 1, 32>}, {pipeline_mode = #tpu.pipeline_mode<synchronous>, transform_indices = @transform_7, window_bounds = array<i64: 1, 32>}, {transform_indices = @transform_8, window_bounds = array<i64: 1, 8, 32>}]} {
    %c0 = arith.constant 0 : index
    %c0_0 = arith.constant 0 : index
    %c0_1 = arith.constant 0 : index
    %c0_2 = arith.constant 0 : index
    %0 = vector.load %arg2[%c0, %c0_0, %c0_1, %c0_2] : memref<1x4x8x8xbf16, #tpu.memory_space<vmem>>, vector<1x4x8x8xbf16>
    %1 = vector.shape_cast %0 : vector<1x4x8x8xbf16> to vector<4x8x8xbf16>
    %c0_3 = arith.constant 0 : index
    %c0_4 = arith.constant 0 : index
    %c0_5 = arith.constant 0 : index
    %c0_6 = arith.constant 0 : index
    %2 = vector.load %arg3[%c0_3, %c0_4, %c0_5, %c0_6] : memref<1x4x8x8xbf16, #tpu.memory_space<vmem>>, vector<1x4x8x8xbf16>
    %3 = vector.shape_cast %2 : vector<1x4x8x8xbf16> to vector<4x8x8xbf16>
    %c0_7 = arith.constant 0 : index
    %c0_8 = arith.constant 0 : index
    %c0_9 = arith.constant 0 : index
    %c0_10 = arith.constant 0 : index
    %4 = vector.load %arg4[%c0_7, %c0_8, %c0_9, %c0_10] : memref<1x4x8x8xbf16, #tpu.memory_space<vmem>>, vector<1x4x8x8xbf16>
    %5 = vector.shape_cast %4 : vector<1x4x8x8xbf16> to vector<4x8x8xbf16>
    "tpu.trace_start"() <{level = 10 : i32, message = "hqd,hkd->hqk"}> : () -> ()
    %cst = arith.constant dense<0.000000e+00> : vector<4x8x8xf32>
    %6 = tpu.matmul %1, %3, %cst {dimension_numbers = #tpu.dot_dimension_numbers<[2], [2], [1], [1], [0, 0, 0, 1, 1, 1], [0], [0]>} : vector<4x8x8xbf16>, vector<4x8x8xbf16>, vector<4x8x8xf32> -> vector<4x8x8xf32>
    "tpu.trace_stop"() : () -> ()
    %cst_11 = arith.constant dense<0xFF800000> : vector<4x8xf32>
    %7 = vector.multi_reduction <maximumf>, %6, %cst_11 [2] : vector<4x8x8xf32> to vector<4x8xf32>
    %8 = vector.shape_cast %7 : vector<4x8xf32> to vector<4x8x1xf32>
    %9 = vector.broadcast %8 : vector<4x8x1xf32> to vector<4x8x8xf32>
    %10 = arith.subf %6, %9 : vector<4x8x8xf32>
    %11 = math.exp %10 : vector<4x8x8xf32>
    %cst_12 = arith.constant dense<0.000000e+00> : vector<4x8xf32>
    %12 = vector.multi_reduction <add>, %11, %cst_12 [2] : vector<4x8x8xf32> to vector<4x8xf32>
    %13 = vector.shape_cast %12 : vector<4x8xf32> to vector<4x8x1xf32>
    %14 = tpu.reciprocal %13 {approx = true} : vector<4x8x1xf32> -> vector<4x8x1xf32>
    %15 = vector.broadcast %14 : vector<4x8x1xf32> to vector<4x8x8xf32>
    %16 = arith.mulf %11, %15 : vector<4x8x8xf32>
    %17 = arith.truncf %16 : vector<4x8x8xf32> to vector<4x8x8xbf16>
    "tpu.trace_start"() <{level = 10 : i32, message = "hqk,hkd->hqd"}> : () -> ()
    %cst_13 = arith.constant dense<0.000000e+00> : vector<4x8x8xf32>
    %18 = tpu.matmul %17, %5, %cst_13 {dimension_numbers = #tpu.dot_dimension_numbers<[2], [1], [1], [2], [0, 0, 0, 1, 1, 2], [0], [0]>} : vector<4x8x8xbf16>, vector<4x8x8xbf16>, vector<4x8x8xf32> -> vector<4x8x8xf32>
    "tpu.trace_stop"() : () -> ()
    %19 = vector.extract_strided_slice %18 {offsets = [0, 0, 0], sizes = [1, 8, 8], strides = [1, 1, 1]} : vector<4x8x8xf32> to vector<1x8x8xf32>
    %20 = vector.shape_cast %19 : vector<1x8x8xf32> to vector<8x8xf32>
    %c0_14 = arith.constant 0 : index
    %c0_15 = arith.constant 0 : index
    %21 = vector.load %arg11[%c0_14, %c0_15] : memref<8x32xf32, #tpu.memory_space<vmem>>, vector<8x8xf32>
    tpu.vector_store %arg11[%c0_14, %c0_15], %20 {strides = array<i32>} : memref<8x32xf32, #tpu.memory_space<vmem>>, vector<8x8xf32>,
    %22 = vector.extract_strided_slice %18 {offsets = [1, 0, 0], sizes = [1, 8, 8], strides = [1, 1, 1]} : vector<4x8x8xf32> to vector<1x8x8xf32>
    %23 = vector.shape_cast %22 : vector<1x8x8xf32> to vector<8x8xf32>
    %c0_16 = arith.constant 0 : index
    %c8 = arith.constant 8 : index
    %24 = vector.load %arg11[%c0_16, %c8] : memref<8x32xf32, #tpu.memory_space<vmem>>, vector<8x8xf32>
    tpu.vector_store %arg11[%c0_16, %c8], %23 {strides = array<i32>} : memref<8x32xf32, #tpu.memory_space<vmem>>, vector<8x8xf32>,
    %25 = vector.extract_strided_slice %18 {offsets = [2, 0, 0], sizes = [1, 8, 8], strides = [1, 1, 1]} : vector<4x8x8xf32> to vector<1x8x8xf32>
    %26 = vector.shape_cast %25 : vector<1x8x8xf32> to vector<8x8xf32>
    %c0_17 = arith.constant 0 : index
    %c16 = arith.constant 16 : index
    %27 = vector.load %arg11[%c0_17, %c16] : memref<8x32xf32, #tpu.memory_space<vmem>>, vector<8x8xf32>
    tpu.vector_store %arg11[%c0_17, %c16], %26 {strides = array<i32>} : memref<8x32xf32, #tpu.memory_space<vmem>>, vector<8x8xf32>,
    %28 = vector.extract_strided_slice %18 {offsets = [3, 0, 0], sizes = [1, 8, 8], strides = [1, 1, 1]} : vector<4x8x8xf32> to vector<1x8x8xf32>
    %29 = vector.shape_cast %28 : vector<1x8x8xf32> to vector<8x8xf32>
    %c0_18 = arith.constant 0 : index
    %c24 = arith.constant 24 : index
    %30 = vector.load %arg11[%c0_18, %c24] : memref<8x32xf32, #tpu.memory_space<vmem>>, vector<8x8xf32>
    tpu.vector_store %arg11[%c0_18, %c24], %29 {strides = array<i32>} : memref<8x32xf32, #tpu.memory_space<vmem>>, vector<8x8xf32>,
    %c0_19 = arith.constant 0 : index
    %c0_20 = arith.constant 0 : index
    %31 = vector.load %arg11[%c0_19, %c0_20] : memref<8x32xf32, #tpu.memory_space<vmem>>, vector<8x32xf32>
    %32 = arith.truncf %31 : vector<8x32xf32> to vector<8x32xbf16>
    %c0_21 = arith.constant 0 : index
    %c0_22 = arith.constant 0 : index
    %33 = vector.load %arg6[%c0_21, %c0_22] : memref<32x32xbf16, #tpu.memory_space<vmem>>, vector<32x32xbf16>
    %cst_23 = arith.constant dense<0.000000e+00> : vector<8x32xf32>
    %34 = tpu.matmul %32, %33, %cst_23 {dimension_numbers = #tpu.dot_dimension_numbers<[1], [0], [0], [1], [0, 0, 1, 1], [], []>} : vector<8x32xbf16>, vector<32x32xbf16>, vector<8x32xf32> -> vector<8x32xf32>
    %c0_24 = arith.constant 0 : index
    %c0_25 = arith.constant 0 : index
    %35 = vector.load %arg7[%c0_24, %c0_25] : memref<1x32xf32, #tpu.memory_space<vmem>>, vector<1x32xf32>
    %36 = vector.broadcast %35 : vector<1x32xf32> to vector<8x32xf32>
    %37 = arith.addf %34, %36 : vector<8x32xf32>
    %c0_26 = arith.constant 0 : index
    %c0_27 = arith.constant 0 : index
    %c0_28 = arith.constant 0 : index
    %38 = vector.load %arg5[%c0_26, %c0_27, %c0_28] : memref<1x8x32xbf16, #tpu.memory_space<vmem>>, vector<1x8x32xbf16>
    %39 = vector.shape_cast %38 : vector<1x8x32xbf16> to vector<8x32xbf16>
    %40 = arith.extf %39 : vector<8x32xbf16> to vector<8x32xf32>
    %41 = arith.addf %40, %37 : vector<8x32xf32>
    %cst_29 = arith.constant dense<0.000000e+00> : vector<8xf32>
    %42 = vector.multi_reduction <add>, %41, %cst_29 [1] : vector<8x32xf32> to vector<8xf32>
    %43 = vector.shape_cast %42 : vector<8xf32> to vector<8x1xf32>
    %cst_30 = arith.constant 3.200000e+01 : f32
    %44 = vector.broadcast %cst_30 : f32 to vector<8x1xf32>
    %45 = arith.divf %43, %44 : vector<8x1xf32>
    %46 = vector.broadcast %45 : vector<8x1xf32> to vector<8x32xf32>
    %47 = arith.subf %41, %46 : vector<8x32xf32>
    %48 = arith.mulf %47, %47 : vector<8x32xf32>
    %cst_31 = arith.constant dense<0.000000e+00> : vector<8xf32>
    %49 = vector.multi_reduction <add>, %48, %cst_31 [1] : vector<8x32xf32> to vector<8xf32>
    %50 = vector.shape_cast %49 : vector<8xf32> to vector<8x1xf32>
    %cst_32 = arith.constant 3.200000e+01 : f32
    %51 = vector.broadcast %cst_32 : f32 to vector<8x1xf32>
    %52 = arith.divf %50, %51 : vector<8x1xf32>
    %53 = vector.broadcast %45 : vector<8x1xf32> to vector<8x32xf32>
    %54 = arith.subf %41, %53 : vector<8x32xf32>
    %cst_33 = arith.constant 9.99999974E-6 : f32
    %55 = vector.broadcast %cst_33 : f32 to vector<8x1xf32>
    %56 = arith.addf %52, %55 : vector<8x1xf32>
    %57 = math.rsqrt %56 : vector<8x1xf32>
    %58 = vector.broadcast %57 : vector<8x1xf32> to vector<8x32xf32>
    %59 = arith.mulf %54, %58 : vector<8x32xf32>
    %c0_34 = arith.constant 0 : index
    %c0_35 = arith.constant 0 : index
    %60 = vector.load %arg8[%c0_34, %c0_35] : memref<1x32xf32, #tpu.memory_space<vmem>>, vector<1x32xf32>
    %61 = vector.broadcast %60 : vector<1x32xf32> to vector<8x32xf32>
    %62 = arith.mulf %59, %61 : vector<8x32xf32>
    %c0_36 = arith.constant 0 : index
    %c0_37 = arith.constant 0 : index
    %63 = vector.load %arg9[%c0_36, %c0_37] : memref<1x32xf32, #tpu.memory_space<vmem>>, vector<1x32xf32>
    %64 = vector.broadcast %63 : vector<1x32xf32> to vector<8x32xf32>
    %65 = arith.addf %62, %64 : vector<8x32xf32>
    %66 = arith.truncf %65 : vector<8x32xf32> to vector<8x32xbf16>
    %c0_38 = arith.constant 0 : index
    %c0_39 = arith.constant 0 : index
    %c0_40 = arith.constant 0 : index
    %67 = vector.load %arg10[%c0_38, %c0_39, %c0_40] : memref<1x8x32xbf16, #tpu.memory_space<vmem>>, vector<1x8x32xbf16>
    %68 = vector.shape_cast %67 : vector<1x8x32xbf16> to vector<8x32xbf16>
    %69 = vector.shape_cast %66 : vector<8x32xbf16> to vector<1x8x32xbf16>
    tpu.vector_store %arg10[%c0_38, %c0_39, %c0_40], %69 {strides = array<i32>} : memref<1x8x32xbf16, #tpu.memory_space<vmem>>, vector<1x8x32xbf16>,
    return
  }
  func.func @transform_0(%arg0: i32, %arg1: i32) -> (i32, i32, i32, i32) {
    %c0_i32 = arith.constant 0 : i32
    %c0_i32_0 = arith.constant 0 : i32
    %c0_i32_1 = arith.constant 0 : i32
    return %arg0, %c0_i32, %arg1, %c0_i32_0 : i32, i32, i32, i32
  }
  func.func @transform_1(%arg0: i32, %arg1: i32) -> (i32, i32, i32, i32) {
    %c0_i32 = arith.constant 0 : i32
    %c0_i32_0 = arith.constant 0 : i32
    %c0_i32_1 = arith.constant 0 : i32
    %c0_i32_2 = arith.constant 0 : i32
    return %arg0, %c0_i32, %c0_i32_0, %c0_i32_1 : i32, i32, i32, i32
  }
  func.func @transform_2(%arg0: i32, %arg1: i32) -> (i32, i32, i32, i32) {
    %c0_i32 = arith.constant 0 : i32
    %c0_i32_0 = arith.constant 0 : i32
    %c0_i32_1 = arith.constant 0 : i32
    %c0_i32_2 = arith.constant 0 : i32
    return %arg0, %c0_i32, %c0_i32_0, %c0_i32_1 : i32, i32, i32, i32
  }
  func.func @transform_3(%arg0: i32, %arg1: i32) -> (i32, i32, i32) {
    %c0_i32 = arith.constant 0 : i32
    %c0_i32_0 = arith.constant 0 : i32
    return %arg0, %arg1, %c0_i32 : i32, i32, i32
  }
  func.func @transform_4(%arg0: i32, %arg1: i32) -> (i32, i32) {
    %c0_i32 = arith.constant 0 : i32
    %c0_i32_0 = arith.constant 0 : i32
    %c0_i32_1 = arith.constant 0 : i32
    return %c0_i32, %c0_i32_0 : i32, i32
  }
  func.func @transform_5(%arg0: i32, %arg1: i32) -> (i32, i32) {
    %c0_i32 = arith.constant 0 : i32
    %c0_i32_0 = arith.constant 0 : i32
    %c0_i32_1 = arith.constant 0 : i32
    return %c0_i32, %c0_i32_0 : i32, i32
  }
  func.func @transform_6(%arg0: i32, %arg1: i32) -> (i32, i32) {
    %c0_i32 = arith.constant 0 : i32
    %c0_i32_0 = arith.constant 0 : i32
    %c0_i32_1 = arith.constant 0 : i32
    return %c0_i32, %c0_i32_0 : i32, i32
  }
  func.func @transform_7(%arg0: i32, %arg1: i32) -> (i32, i32) {
    %c0_i32 = arith.constant 0 : i32
    %c0_i32_0 = arith.constant 0 : i32
    %c0_i32_1 = arith.constant 0 : i32
    return %c0_i32, %c0_i32_0 : i32, i32
  }
  func.func @transform_8(%arg0: i32, %arg1: i32) -> (i32, i32, i32) {
    %c0_i32 = arith.constant 0 : i32
    %c0_i32_0 = arith.constant 0 : i32
    return %arg0, %arg1, %c0_i32 : i32, i32, i32
  }
}

module attributes {stable_mosaic.version = 11 : i64} {
  func.func @_ffn_ln2_kernel(%arg0: i32, %arg1: i32, %arg2: memref<16x32xbf16, #tpu.memory_space<vmem>>, %arg3: memref<32x1024xbf16, #tpu.memory_space<vmem>>, %arg4: memref<1x1024xf32, #tpu.memory_space<vmem>>, %arg5: memref<1024x32xbf16, #tpu.memory_space<vmem>>, %arg6: memref<1x32xf32, #tpu.memory_space<vmem>>, %arg7: memref<1x32xf32, #tpu.memory_space<vmem>>, %arg8: memref<1x32xf32, #tpu.memory_space<vmem>>, %arg9: memref<16x32xf32, #tpu.memory_space<vmem>>, %arg10: memref<16x32xf32, #tpu.memory_space<vmem>>) attributes {dimension_semantics = [#tpu.dimension_semantics<parallel>, #tpu.dimension_semantics<arbitrary>], iteration_bounds = array<i64: 1, 2>, scalar_prefetch = 0 : i64, scratch_operands = 1 : i64, tpu.core_type = #tpu.core_type<tc>, window_params = [{transform_indices = @transform_0, window_bounds = array<i64: 16, 32>}, {transform_indices = @transform_1, window_bounds = array<i64: 32, 1024>}, {transform_indices = @transform_2, window_bounds = array<i64: 1, 1024>}, {transform_indices = @transform_3, window_bounds = array<i64: 1024, 32>}, {pipeline_mode = #tpu.pipeline_mode<synchronous>, transform_indices = @transform_4, window_bounds = array<i64: 1, 32>}, {pipeline_mode = #tpu.pipeline_mode<synchronous>, transform_indices = @transform_5, window_bounds = array<i64: 1, 32>}, {pipeline_mode = #tpu.pipeline_mode<synchronous>, transform_indices = @transform_6, window_bounds = array<i64: 1, 32>}, {transform_indices = @transform_7, window_bounds = array<i64: 16, 32>}]} {
    %c0_i32 = arith.constant 0 : i32
    %0 = arith.cmpi eq, %arg1, %c0_i32 : i32
    %1 = arith.extui %0 : i1 to i32
    %c0_i32_0 = arith.constant 0 : i32
    %2 = arith.cmpi ne, %1, %c0_i32_0 : i32
    scf.if %2 {
      %cst_15 = arith.constant 0.000000e+00 : f32
      %20 = vector.broadcast %cst_15 : f32 to vector<16x32xf32>
      %c0_16 = arith.constant 0 : index
      %c0_17 = arith.constant 0 : index
      %21 = vector.load %arg10[%c0_16, %c0_17] : memref<16x32xf32, #tpu.memory_space<vmem>>, vector<16x32xf32>
      tpu.vector_store %arg10[%c0_16, %c0_17], %20 {strides = array<i32>} : memref<16x32xf32, #tpu.memory_space<vmem>>, vector<16x32xf32>,
    } else {
    }
    %c0 = arith.constant 0 : index
    %c0_1 = arith.constant 0 : index
    %3 = vector.load %arg2[%c0, %c0_1] : memref<16x32xbf16, #tpu.memory_space<vmem>>, vector<16x32xbf16>
    %c0_2 = arith.constant 0 : index
    %c0_3 = arith.constant 0 : index
    %4 = vector.load %arg3[%c0_2, %c0_3] : memref<32x1024xbf16, #tpu.memory_space<vmem>>, vector<32x1024xbf16>
    %cst = arith.constant dense<0.000000e+00> : vector<16x1024xf32>
    %5 = tpu.matmul %3, %4, %cst {dimension_numbers = #tpu.dot_dimension_numbers<[1], [0], [0], [1], [0, 0, 1, 1], [], []>} : vector<16x32xbf16>, vector<32x1024xbf16>, vector<16x1024xf32> -> vector<16x1024xf32>
    %c0_4 = arith.constant 0 : index
    %c0_5 = arith.constant 0 : index
    %6 = vector.load %arg4[%c0_4, %c0_5] : memref<1x1024xf32, #tpu.memory_space<vmem>>, vector<1x1024xf32>
    %7 = vector.broadcast %6 : vector<1x1024xf32> to vector<16x1024xf32>
    %8 = arith.addf %5, %7 : vector<16x1024xf32>
    %cst_6 = arith.constant 0.000000e+00 : f32
    %9 = vector.broadcast %cst_6 : f32 to vector<16x1024xf32>
    %10 = arith.maximumf %8, %9 : vector<16x1024xf32>
    %11 = arith.truncf %10 : vector<16x1024xf32> to vector<16x1024xbf16>
    %c0_7 = arith.constant 0 : index
    %c0_8 = arith.constant 0 : index
    %12 = vector.load %arg10[%c0_7, %c0_8] : memref<16x32xf32, #tpu.memory_space<vmem>>, vector<16x32xf32>
    %c0_9 = arith.constant 0 : index
    %c0_10 = arith.constant 0 : index
    %13 = vector.load %arg5[%c0_9, %c0_10] : memref<1024x32xbf16, #tpu.memory_space<vmem>>, vector<1024x32xbf16>
    %cst_11 = arith.constant dense<0.000000e+00> : vector<16x32xf32>
    %14 = tpu.matmul %11, %13, %cst_11 {dimension_numbers = #tpu.dot_dimension_numbers<[1], [0], [0], [1], [0, 0, 1, 1], [], []>} : vector<16x1024xbf16>, vector<1024x32xbf16>, vector<16x32xf32> -> vector<16x32xf32>
    %15 = arith.addf %12, %14 : vector<16x32xf32>
    %c0_12 = arith.constant 0 : index
    %c0_13 = arith.constant 0 : index
    %16 = vector.load %arg10[%c0_12, %c0_13] : memref<16x32xf32, #tpu.memory_space<vmem>>, vector<16x32xf32>
    tpu.vector_store %arg10[%c0_12, %c0_13], %15 {strides = array<i32>} : memref<16x32xf32, #tpu.memory_space<vmem>>, vector<16x32xf32>,
    %c1_i32 = arith.constant 1 : i32
    %17 = arith.cmpi eq, %arg1, %c1_i32 : i32
    %18 = arith.extui %17 : i1 to i32
    %c0_i32_14 = arith.constant 0 : i32
    %19 = arith.cmpi ne, %18, %c0_i32_14 : i32
    scf.if %19 {
      %c0_15 = arith.constant 0 : index
      %c0_16 = arith.constant 0 : index
      %20 = vector.load %arg2[%c0_15, %c0_16] : memref<16x32xbf16, #tpu.memory_space<vmem>>, vector<16x32xbf16>
      %21 = arith.extf %20 : vector<16x32xbf16> to vector<16x32xf32>
      %c0_17 = arith.constant 0 : index
      %c0_18 = arith.constant 0 : index
      %22 = vector.load %arg10[%c0_17, %c0_18] : memref<16x32xf32, #tpu.memory_space<vmem>>, vector<16x32xf32>
      %23 = arith.addf %21, %22 : vector<16x32xf32>
      %c0_19 = arith.constant 0 : index
      %c0_20 = arith.constant 0 : index
      %24 = vector.load %arg6[%c0_19, %c0_20] : memref<1x32xf32, #tpu.memory_space<vmem>>, vector<1x32xf32>
      %25 = vector.broadcast %24 : vector<1x32xf32> to vector<16x32xf32>
      %26 = arith.addf %23, %25 : vector<16x32xf32>
      %cst_21 = arith.constant dense<0.000000e+00> : vector<16xf32>
      %27 = vector.multi_reduction <add>, %26, %cst_21 [1] : vector<16x32xf32> to vector<16xf32>
      %28 = vector.shape_cast %27 : vector<16xf32> to vector<16x1xf32>
      %cst_22 = arith.constant 3.200000e+01 : f32
      %29 = vector.broadcast %cst_22 : f32 to vector<16x1xf32>
      %30 = arith.divf %28, %29 : vector<16x1xf32>
      %31 = vector.broadcast %30 : vector<16x1xf32> to vector<16x32xf32>
      %32 = arith.subf %26, %31 : vector<16x32xf32>
      %33 = arith.mulf %32, %32 : vector<16x32xf32>
      %cst_23 = arith.constant dense<0.000000e+00> : vector<16xf32>
      %34 = vector.multi_reduction <add>, %33, %cst_23 [1] : vector<16x32xf32> to vector<16xf32>
      %35 = vector.shape_cast %34 : vector<16xf32> to vector<16x1xf32>
      %cst_24 = arith.constant 3.200000e+01 : f32
      %36 = vector.broadcast %cst_24 : f32 to vector<16x1xf32>
      %37 = arith.divf %35, %36 : vector<16x1xf32>
      %38 = vector.broadcast %30 : vector<16x1xf32> to vector<16x32xf32>
      %39 = arith.subf %26, %38 : vector<16x32xf32>
      %cst_25 = arith.constant 9.99999974E-6 : f32
      %40 = vector.broadcast %cst_25 : f32 to vector<16x1xf32>
      %41 = arith.addf %37, %40 : vector<16x1xf32>
      %42 = math.rsqrt %41 : vector<16x1xf32>
      %43 = vector.broadcast %42 : vector<16x1xf32> to vector<16x32xf32>
      %44 = arith.mulf %39, %43 : vector<16x32xf32>
      %c0_26 = arith.constant 0 : index
      %c0_27 = arith.constant 0 : index
      %45 = vector.load %arg7[%c0_26, %c0_27] : memref<1x32xf32, #tpu.memory_space<vmem>>, vector<1x32xf32>
      %46 = vector.broadcast %45 : vector<1x32xf32> to vector<16x32xf32>
      %47 = arith.mulf %44, %46 : vector<16x32xf32>
      %c0_28 = arith.constant 0 : index
      %c0_29 = arith.constant 0 : index
      %48 = vector.load %arg8[%c0_28, %c0_29] : memref<1x32xf32, #tpu.memory_space<vmem>>, vector<1x32xf32>
      %49 = vector.broadcast %48 : vector<1x32xf32> to vector<16x32xf32>
      %50 = arith.addf %47, %49 : vector<16x32xf32>
      %c0_30 = arith.constant 0 : index
      %c0_31 = arith.constant 0 : index
      %51 = vector.load %arg9[%c0_30, %c0_31] : memref<16x32xf32, #tpu.memory_space<vmem>>, vector<16x32xf32>
      tpu.vector_store %arg9[%c0_30, %c0_31], %50 {strides = array<i32>} : memref<16x32xf32, #tpu.memory_space<vmem>>, vector<16x32xf32>,
    } else {
    }
    return
  }
  func.func @transform_0(%arg0: i32, %arg1: i32) -> (i32, i32) {
    %c0_i32 = arith.constant 0 : i32
    %c0_i32_0 = arith.constant 0 : i32
    return %arg0, %c0_i32 : i32, i32
  }
  func.func @transform_1(%arg0: i32, %arg1: i32) -> (i32, i32) {
    %c0_i32 = arith.constant 0 : i32
    %c0_i32_0 = arith.constant 0 : i32
    return %c0_i32, %arg1 : i32, i32
  }
  func.func @transform_2(%arg0: i32, %arg1: i32) -> (i32, i32) {
    %c0_i32 = arith.constant 0 : i32
    %c0_i32_0 = arith.constant 0 : i32
    return %c0_i32, %arg1 : i32, i32
  }
  func.func @transform_3(%arg0: i32, %arg1: i32) -> (i32, i32) {
    %c0_i32 = arith.constant 0 : i32
    %c0_i32_0 = arith.constant 0 : i32
    return %arg1, %c0_i32 : i32, i32
  }
  func.func @transform_4(%arg0: i32, %arg1: i32) -> (i32, i32) {
    %c0_i32 = arith.constant 0 : i32
    %c0_i32_0 = arith.constant 0 : i32
    %c0_i32_1 = arith.constant 0 : i32
    return %c0_i32, %c0_i32_0 : i32, i32
  }
  func.func @transform_5(%arg0: i32, %arg1: i32) -> (i32, i32) {
    %c0_i32 = arith.constant 0 : i32
    %c0_i32_0 = arith.constant 0 : i32
    %c0_i32_1 = arith.constant 0 : i32
    return %c0_i32, %c0_i32_0 : i32, i32
  }
  func.func @transform_6(%arg0: i32, %arg1: i32) -> (i32, i32) {
    %c0_i32 = arith.constant 0 : i32
    %c0_i32_0 = arith.constant 0 : i32
    %c0_i32_1 = arith.constant 0 : i32
    return %c0_i32, %c0_i32_0 : i32, i32
  }
  func.func @transform_7(%arg0: i32, %arg1: i32) -> (i32, i32) {
    %c0_i32 = arith.constant 0 : i32
    %c0_i32_0 = arith.constant 0 : i32
    return %arg0, %c0_i32 : i32, i32
  }
}

</mosaic_0001>

<llo_original>
// kernel: encoder_llata_forward.3
$region0: #{encoder_llata_forward.3}
  #allocation0 [shape = 'u32[]', space=smem, size = 0x4, offset = 0x4, fixed_abs, tag = 'smem constant byte address 0x4 - core index']
  #allocation1 [shape = 'u32[144,128]{1,0:T(1,128)}', space=vmem, size = 0x12000, scoped, tag = 'internal scratch']
  %s0 = inlined_call_operand.hbm [shape: f32[2,8,16], index: 0, kind: input, shape index: {}]
  %s1 = inlined_call_operand.hbm [shape: bf16[16,32], index: 1, kind: input, shape index: {}]
  %s2 = inlined_call_operand.hbm [shape: f32[1,32], index: 2, kind: input, shape index: {}]
  %s3 = inlined_call_operand.hbm [shape: bf16[32,32], index: 3, kind: input, shape index: {}]
  %s4 = inlined_call_operand.hbm [shape: f32[1,32], index: 4, kind: input, shape index: {}]
  %s5 = inlined_call_operand.hbm [shape: bf16[32,32], index: 5, kind: input, shape index: {}]
  %s6 = inlined_call_operand.hbm [shape: f32[1,32], index: 6, kind: input, shape index: {}]
  %s7 = inlined_call_operand.hbm [shape: bf16[32,32], index: 7, kind: input, shape index: {}]
  %s8 = inlined_call_operand.hbm [shape: f32[1,32], index: 8, kind: input, shape index: {}]
  %s9 = inlined_call_operand.hbm [shape: bf16[2,8,32], index: 9, kind: output, shape index: {0}]
  %s10 = inlined_call_operand.hbm [shape: bf16[2,4,8,8], index: 10, kind: output, shape index: {1}]
  %s11 = inlined_call_operand.hbm [shape: bf16[2,4,8,8], index: 11, kind: output, shape index: {2}]
  %s12 = inlined_call_operand.hbm [shape: bf16[2,4,8,8], index: 12, kind: output, shape index: {3}]
  %13 = xla_tuple %s9, %s10, %s11, %s12
  %s14 = sld [smem:[#allocation0]]
  $region129: #{encoder_llata_forward.3} parent=0
    _
  %s16 = ssub.s32 1, %s14
  %s17 = scalar_select 0, %s16, %s14
  $region1: #{encoder_llata_forward.3} parent=0
    #allocation2 [shape = 'u8[8192]{0}', space=vmem, size = 0x2000, scoped, tag = 'input window, operand 0']
    #allocation3 [shape = 's32[2]{0}', space=sflag, size = 0x8, scoped, tag = 'scoped memory for encoder_llata_forward.3']
    #allocation4 [shape = 's32[2]{0}', space=sflag, size = 0x8, scoped, tag = 'scoped memory for encoder_llata_forward.3']
    #allocation5 [shape = 'u8[4096]{0}', space=vmem, size = 0x1000, scoped, tag = 'input window, operand 1, single buffered']
    #allocation6 [shape = 's32[1]{0}', space=sflag, size = 0x4, scoped, tag = 'scoped memory for encoder_llata_forward.3']
    #allocation7 [shape = 'u8[512]{0}', space=vmem, size = 0x400, scoped, tag = 'input window, operand 2, single buffered']
    #allocation8 [shape = 'u8[8192]{0}', space=vmem, size = 0x2000, scoped, tag = 'input window, operand 3, single buffered']
    #allocation9 [shape = 's32[1]{0}', space=sflag, size = 0x4, scoped, tag = 'scoped memory for encoder_llata_forward.3']
    #allocation10 [shape = 'u8[512]{0}', space=vmem, size = 0x400, scoped, tag = 'input window, operand 4, single buffered']
    #allocation11 [shape = 'u8[8192]{0}', space=vmem, size = 0x2000, scoped, tag = 'input window, operand 5, single buffered']
    #allocation12 [shape = 's32[1]{0}', space=sflag, size = 0x4, scoped, tag = 'scoped memory for encoder_llata_forward.3']
    #allocation13 [shape = 'u8[512]{0}', space=vmem, size = 0x400, scoped, tag = 'input window, operand 6, single buffered']
    #allocation14 [shape = 'u8[8192]{0}', space=vmem, size = 0x2000, scoped, tag = 'input window, operand 7, single buffered']
    #allocation15 [shape = 's32[1]{0}', space=sflag, size = 0x4, scoped, tag = 'scoped memory for encoder_llata_forward.3']
    #allocation16 [shape = 'u8[512]{0}', space=vmem, size = 0x400, scoped, tag = 'input window, operand 8, single buffered']
    #allocation17 [shape = 'u8[4096]{0}', space=vmem, size = 0x1000, scoped, tag = 'output window, operand 0']
    #allocation18 [shape = 'u8[16384]{0}', space=vmem, size = 0x4000, scoped, tag = 'output window, operand 1']
    #allocation19 [shape = 's32[2]{0}', space=sflag, size = 0x8, scoped, tag = 'scoped memory for encoder_llata_forward.3']
    #allocation20 [shape = 'u8[16384]{0}', space=vmem, size = 0x4000, scoped, tag = 'output window, operand 2']
    #allocation21 [shape = 'u8[16384]{0}', space=vmem, size = 0x4000, scoped, tag = 'output window, operand 3']
    #allocation22 [shape = 's32[2]{0}', space=sflag, size = 0x8, scoped, tag = 'scoped memory for encoder_llata_forward.3']
    %18 = vsyncpa [#allocation3], 0
    %s19 = scalar_lea.sflag [#allocation3], 1
    %20 = vsyncpa %s19, 0
    %21 = vsyncpa [#allocation6], 0
    %22 = vsyncpa [#allocation9], 0
    %23 = vsyncpa [#allocation12], 0
    %24 = vsyncpa [#allocation15], 0
    %25 = vsyncpa [#allocation4], 0
    %s26 = scalar_lea.sflag [#allocation4], 1
    %27 = vsyncpa %s26, 0
    %28 = vsyncpa [#allocation19], 0
    %s29 = scalar_lea.sflag [#allocation19], 1
    %30 = vsyncpa %s29, 0
    %31 = vsyncpa [#allocation22], 0
    %s32 = scalar_lea.sflag [#allocation22], 1
    %33 = vsyncpa %s32, 0
    loop: start=0, step=1, limit=4
    $region2: #{encoder_llata_forward.3} parent=1 // loop_pre_header
      _
    $region3: #{encoder_llata_forward.3} parent=1 // loop_header
      %s35 = sphi 0, %s39
      %p36 = scmp.ge.s32.totalorder %s35, 4
      %s42 = sphi 0, %s54
      %s43 = sphi 0, %s50
      %s44 = sphi 0, %s42
      %s45 = sphi 0, %s43
      %s46 = sphi 0, %s44
      %s47 = sphi 0, %s45
      %s59 = sphi 0, %s61
      %s62 = sphi 0, %s59
      %s63 = sphi 0, %s62
      %s79 = sphi 0, %s63
      %s83 = sphi 0, %s83
      %s85 = sphi 0, %s83
      %s86 = sphi 0, %s85
      %s100 = sphi 0, %s86
      %s104 = sphi 0, %s104
      %s106 = sphi 0, %s104
      %s107 = sphi 0, %s106
      %s121 = sphi 0, %s107
      %s125 = sphi 0, %s125
      %s127 = sphi 0, %s125
      %s128 = sphi 0, %s127
      %s142 = sphi 0, %s128
      %s146 = sphi 0, %s146
      %s148 = sphi 0, %s146
      %s149 = sphi 0, %s148
      %s163 = sphi 0, %s149
      %s167 = sphi 0, %s167
      %s169 = sphi 0, %s167
      %s170 = sphi 0, %s169
      %s184 = sphi 0, %s170
      %s188 = sphi 0, %s188
      %s190 = sphi 0, %s188
      %s191 = sphi 0, %s190
      %s205 = sphi 0, %s191
      %s209 = sphi 0, %s209
      %s211 = sphi 0, %s209
      %s212 = sphi 0, %s211
      %s226 = sphi 0, %s212
      %s230 = sphi 0, %s230
      %s232 = sphi 0, %s230
      %s233 = sphi 0, %s232
      %s247 = sphi 0, %s233
      %s255 = sphi 0, %s257
      %s258 = sphi 0, %s255
      %s259 = sphi 0, %s258
      %s275 = sphi 0, %s259
      %s283 = sphi 0, %s285
      %s286 = sphi 0, %s283
      %s287 = sphi 0, %s286
      %s303 = sphi 0, %s287
      %s311 = sphi 0, %s313
      %s314 = sphi 0, %s311
      %s315 = sphi 0, %s314
      %s331 = sphi 0, %s315
      %s339 = sphi 0, %s341
      %s342 = sphi 0, %s339
      %s343 = sphi 0, %s342
      %s359 = sphi 0, %s343
    $region4: #{encoder_llata_forward.3} parent=1 // loop_header_branch
      %38 = sbr.rel (%p36) target = $region8
    $region5: #{encoder_llata_forward.3} parent=1 // loop_body
      %s40 = ssub.s32 %s35, 1
      %s41 = ssub.s32 %s35, 2
      %s48 = sadd.s32 1, %s43
      %p49 = scmp.ge.s32.totalorder %s48, 1
      %s50 = scalar_select %p49, 0, %s48
      %s51 = sadd.s32 1, %s42
      %s52 = scalar_select %p49, %s51, %s42
      %p53 = scmp.ge.s32.totalorder %s52, 2
      %s54 = scalar_select %p53, 0, %s52
      %s55 = ssub.s32 %s42, %s54
      %s56 = ssub.s32 %s43, %s50
      %s57 = sor.u32 %s55, %s56
      %p58 = scmp.eq.s32.totalorder %s57, 0
      %s60 = sadd.s32 %s59, 1
      %s61 = scalar_select %p58, %s59, %s60
      %p64 = pneg %p58
      %p65 = scmp.eq.s32.totalorder %s35, 1
      %p66 = por %p64, %p65
      %p67 = scmp.ne.s32.totalorder %s59, %s62
      %p68 = scmp.eq.s32.totalorder %s35, 0
      %p69 = por %p67, %p68
      %p70 = scmp.ne.s32.totalorder %s59, %s62
      %p71 = scmp.eq.s32.totalorder %s40, 1
      %p72 = por %p70, %p71
      %p73 = scmp.ne.s32.totalorder %s62, %s63
      %p74 = scmp.eq.s32.totalorder %s40, 0
      %p75 = por %p73, %p74
      %p76 = scmp.ne.s32.totalorder %s62, %s63
      %p77 = scmp.eq.s32.totalorder %s41, 1
      %p78 = por %p76, %p77
      %p80 = scmp.ne.s32.totalorder %s63, %s79
      %p81 = scmp.eq.s32.totalorder %s41, 0
      %p82 = por %p80, %p81
      %s84 = sadd.s32 %s83, 1
      %p87 = scmp.eq.s32.totalorder %s35, 1
      %p88 = scmp.ne.s32.totalorder %s83, %s85
      %p89 = scmp.eq.s32.totalorder %s35, 0
      %p90 = por %p88, %p89
      %p91 = scmp.ne.s32.totalorder %s83, %s85
      %p92 = scmp.eq.s32.totalorder %s40, 1
      %p93 = por %p91, %p92
      %p94 = scmp.ne.s32.totalorder %s85, %s86
      %p95 = scmp.eq.s32.totalorder %s40, 0
      %p96 = por %p94, %p95
      %p97 = scmp.ne.s32.totalorder %s85, %s86
      %p98 = scmp.eq.s32.totalorder %s41, 1
      %p99 = por %p97, %p98
      %p101 = scmp.ne.s32.totalorder %s86, %s100
      %p102 = scmp.eq.s32.totalorder %s41, 0
      %p103 = por %p101, %p102
      %s105 = sadd.s32 %s104, 1
      %p108 = scmp.eq.s32.totalorder %s35, 1
      %p109 = scmp.ne.s32.totalorder %s104, %s106
      %p110 = scmp.eq.s32.totalorder %s35, 0
      %p111 = por %p109, %p110
      %p112 = scmp.ne.s32.totalorder %s104, %s106
      %p113 = scmp.eq.s32.totalorder %s40, 1
      %p114 = por %p112, %p113
      %p115 = scmp.ne.s32.totalorder %s106, %s107
      %p116 = scmp.eq.s32.totalorder %s40, 0
      %p117 = por %p115, %p116
      %p118 = scmp.ne.s32.totalorder %s106, %s107
      %p119 = scmp.eq.s32.totalorder %s41, 1
      %p120 = por %p118, %p119
      %p122 = scmp.ne.s32.totalorder %s107, %s121
      %p123 = scmp.eq.s32.totalorder %s41, 0
      %p124 = por %p122, %p123
      %s126 = sadd.s32 %s125, 1
      %p129 = scmp.eq.s32.totalorder %s35, 1
      %p130 = scmp.ne.s32.totalorder %s125, %s127
      %p131 = scmp.eq.s32.totalorder %s35, 0
      %p132 = por %p130, %p131
      %p133 = scmp.ne.s32.totalorder %s125, %s127
      %p134 = scmp.eq.s32.totalorder %s40, 1
      %p135 = por %p133, %p134
      %p136 = scmp.ne.s32.totalorder %s127, %s128
      %p137 = scmp.eq.s32.totalorder %s40, 0
      %p138 = por %p136, %p137
      %p139 = scmp.ne.s32.totalorder %s127, %s128
      %p140 = scmp.eq.s32.totalorder %s41, 1
      %p141 = por %p139, %p140
      %p143 = scmp.ne.s32.totalorder %s128, %s142
      %p144 = scmp.eq.s32.totalorder %s41, 0
      %p145 = por %p143, %p144
      %s147 = sadd.s32 %s146, 1
      %p150 = scmp.eq.s32.totalorder %s35, 1
      %p151 = scmp.ne.s32.totalorder %s146, %s148
      %p152 = scmp.eq.s32.totalorder %s35, 0
      %p153 = por %p151, %p152
      %p154 = scmp.ne.s32.totalorder %s146, %s148
      %p155 = scmp.eq.s32.totalorder %s40, 1
      %p156 = por %p154, %p155
      %p157 = scmp.ne.s32.totalorder %s148, %s149
      %p158 = scmp.eq.s32.totalorder %s40, 0
      %p159 = por %p157, %p158
      %p160 = scmp.ne.s32.totalorder %s148, %s149
      %p161 = scmp.eq.s32.totalorder %s41, 1
      %p162 = por %p160, %p161
      %p164 = scmp.ne.s32.totalorder %s149, %s163
      %p165 = scmp.eq.s32.totalorder %s41, 0
      %p166 = por %p164, %p165
      %s168 = sadd.s32 %s167, 1
      %p171 = scmp.eq.s32.totalorder %s35, 1
      %p172 = scmp.ne.s32.totalorder %s167, %s169
      %p173 = scmp.eq.s32.totalorder %s35, 0
      %p174 = por %p172, %p173
      %p175 = scmp.ne.s32.totalorder %s167, %s169
      %p176 = scmp.eq.s32.totalorder %s40, 1
      %p177 = por %p175, %p176
      %p178 = scmp.ne.s32.totalorder %s169, %s170
      %p179 = scmp.eq.s32.totalorder %s40, 0
      %p180 = por %p178, %p179
      %p181 = scmp.ne.s32.totalorder %s169, %s170
      %p182 = scmp.eq.s32.totalorder %s41, 1
      %p183 = por %p181, %p182
      %p185 = scmp.ne.s32.totalorder %s170, %s184
      %p186 = scmp.eq.s32.totalorder %s41, 0
      %p187 = por %p185, %p186
      %s189 = sadd.s32 %s188, 1
      %p192 = scmp.eq.s32.totalorder %s35, 1
      %p193 = scmp.ne.s32.totalorder %s188, %s190
      %p194 = scmp.eq.s32.totalorder %s35, 0
      %p195 = por %p193, %p194
      %p196 = scmp.ne.s32.totalorder %s188, %s190
      %p197 = scmp.eq.s32.totalorder %s40, 1
      %p198 = por %p196, %p197
      %p199 = scmp.ne.s32.totalorder %s190, %s191
      %p200 = scmp.eq.s32.totalorder %s40, 0
      %p201 = por %p199, %p200
      %p202 = scmp.ne.s32.totalorder %s190, %s191
      %p203 = scmp.eq.s32.totalorder %s41, 1
      %p204 = por %p202, %p203
      %p206 = scmp.ne.s32.totalorder %s191, %s205
      %p207 = scmp.eq.s32.totalorder %s41, 0
      %p208 = por %p206, %p207
      %s210 = sadd.s32 %s209, 1
      %p213 = scmp.eq.s32.totalorder %s35, 1
      %p214 = scmp.ne.s32.totalorder %s209, %s211
      %p215 = scmp.eq.s32.totalorder %s35, 0
      %p216 = por %p214, %p215
      %p217 = scmp.ne.s32.totalorder %s209, %s211
      %p218 = scmp.eq.s32.totalorder %s40, 1
      %p219 = por %p217, %p218
      %p220 = scmp.ne.s32.totalorder %s211, %s212
      %p221 = scmp.eq.s32.totalorder %s40, 0
      %p222 = por %p220, %p221
      %p223 = scmp.ne.s32.totalorder %s211, %s212
      %p224 = scmp.eq.s32.totalorder %s41, 1
      %p225 = por %p223, %p224
      %p227 = scmp.ne.s32.totalorder %s212, %s226
      %p228 = scmp.eq.s32.totalorder %s41, 0
      %p229 = por %p227, %p228
      %s231 = sadd.s32 %s230, 1
      %p234 = scmp.eq.s32.totalorder %s35, 1
      %p235 = scmp.ne.s32.totalorder %s230, %s232
      %p236 = scmp.eq.s32.totalorder %s35, 0
      %p237 = por %p235, %p236
      %p238 = scmp.ne.s32.totalorder %s230, %s232
      %p239 = scmp.eq.s32.totalorder %s40, 1
      %p240 = por %p238, %p239
      %p241 = scmp.ne.s32.totalorder %s232, %s233
      %p242 = scmp.eq.s32.totalorder %s40, 0
      %p243 = por %p241, %p242
      %p244 = scmp.ne.s32.totalorder %s232, %s233
      %p245 = scmp.eq.s32.totalorder %s41, 1
      %p246 = por %p244, %p245
      %p248 = scmp.ne.s32.totalorder %s233, %s247
      %p249 = scmp.eq.s32.totalorder %s41, 0
      %p250 = por %p248, %p249
      %s251 = ssub.s32 %s42, %s54
      %s252 = ssub.s32 %s43, %s50
      %s253 = sor.u32 %s251, %s252
      %p254 = scmp.eq.s32.totalorder %s253, 0
      %s256 = sadd.s32 %s255, 1
      %s257 = scalar_select %p254, %s255, %s256
      %p260 = pneg %p254
      %p261 = scmp.eq.s32.totalorder %s35, 1
      %p262 = por %p260, %p261
      %p263 = scmp.ne.s32.totalorder %s255, %s258
      %p264 = scmp.eq.s32.totalorder %s35, 0
      %p265 = por %p263, %p264
      %p266 = scmp.ne.s32.totalorder %s255, %s258
      %p267 = scmp.eq.s32.totalorder %s40, 1
      %p268 = por %p266, %p267
      %p269 = scmp.ne.s32.totalorder %s258, %s259
      %p270 = scmp.eq.s32.totalorder %s40, 0
      %p271 = por %p269, %p270
      %p272 = scmp.ne.s32.totalorder %s258, %s259
      %p273 = scmp.eq.s32.totalorder %s41, 1
      %p274 = por %p272, %p273
      %p276 = scmp.ne.s32.totalorder %s259, %s275
      %p277 = scmp.eq.s32.totalorder %s41, 0
      %p278 = por %p276, %p277
      %s279 = ssub.s32 %s42, %s54
      %s280 = ssub.s32 %s43, %s50
      %s281 = sor.u32 %s279, %s280
      %p282 = scmp.eq.s32.totalorder %s281, 0
      %s284 = sadd.s32 %s283, 1
      %s285 = scalar_select %p282, %s283, %s284
      %p288 = pneg %p282
      %p289 = scmp.eq.s32.totalorder %s35, 1
      %p290 = por %p288, %p289
      %p291 = scmp.ne.s32.totalorder %s283, %s286
      %p292 = scmp.eq.s32.totalorder %s35, 0
      %p293 = por %p291, %p292
      %p294 = scmp.ne.s32.totalorder %s283, %s286
      %p295 = scmp.eq.s32.totalorder %s40, 1
      %p296 = por %p294, %p295
      %p297 = scmp.ne.s32.totalorder %s286, %s287
      %p298 = scmp.eq.s32.totalorder %s40, 0
      %p299 = por %p297, %p298
      %p300 = scmp.ne.s32.totalorder %s286, %s287
      %p301 = scmp.eq.s32.totalorder %s41, 1
      %p302 = por %p300, %p301
      %p304 = scmp.ne.s32.totalorder %s287, %s303
      %p305 = scmp.eq.s32.totalorder %s41, 0
      %p306 = por %p304, %p305
      %s307 = ssub.s32 %s42, %s54
      %s308 = ssub.s32 %s43, %s50
      %s309 = sor.u32 %s307, %s308
      %p310 = scmp.eq.s32.totalorder %s309, 0
      %s312 = sadd.s32 %s311, 1
      %s313 = scalar_select %p310, %s311, %s312
      %p316 = pneg %p310
      %p317 = scmp.eq.s32.totalorder %s35, 1
      %p318 = por %p316, %p317
      %p319 = scmp.ne.s32.totalorder %s311, %s314
      %p320 = scmp.eq.s32.totalorder %s35, 0
      %p321 = por %p319, %p320
      %p322 = scmp.ne.s32.totalorder %s311, %s314
      %p323 = scmp.eq.s32.totalorder %s40, 1
      %p324 = por %p322, %p323
      %p325 = scmp.ne.s32.totalorder %s314, %s315
      %p326 = scmp.eq.s32.totalorder %s40, 0
      %p327 = por %p325, %p326
      %p328 = scmp.ne.s32.totalorder %s314, %s315
      %p329 = scmp.eq.s32.totalorder %s41, 1
      %p330 = por %p328, %p329
      %p332 = scmp.ne.s32.totalorder %s315, %s331
      %p333 = scmp.eq.s32.totalorder %s41, 0
      %p334 = por %p332, %p333
      %s335 = ssub.s32 %s42, %s54
      %s336 = ssub.s32 %s43, %s50
      %s337 = sor.u32 %s335, %s336
      %p338 = scmp.eq.s32.totalorder %s337, 0
      %s340 = sadd.s32 %s339, 1
      %s341 = scalar_select %p338, %s339, %s340
      %p344 = pneg %p338
      %p345 = scmp.eq.s32.totalorder %s35, 1
      %p346 = por %p344, %p345
      %p347 = scmp.ne.s32.totalorder %s339, %s342
      %p348 = scmp.eq.s32.totalorder %s35, 0
      %p349 = por %p347, %p348
      %p350 = scmp.ne.s32.totalorder %s339, %s342
      %p351 = scmp.eq.s32.totalorder %s40, 1
      %p352 = por %p350, %p351
      %p353 = scmp.ne.s32.totalorder %s342, %s343
      %p354 = scmp.eq.s32.totalorder %s40, 0
      %p355 = por %p353, %p354
      %p356 = scmp.ne.s32.totalorder %s342, %s343
      %p357 = scmp.eq.s32.totalorder %s41, 1
      %p358 = por %p356, %p357
      %p360 = scmp.ne.s32.totalorder %s343, %s359
      %p361 = scmp.eq.s32.totalorder %s41, 0
      %p362 = por %p360, %p361
      %p363 = scmp.le.s32.totalorder 1, %s35
      %p364 = scmp.lt.s32.totalorder %s35, 3
      %p365 = pnand %p363, %p364
      %p366 = pneg %p365
      // Predicated region
      $region9: #{encoder_llata_forward.3} parent=5 // pred_check
        _
      $region10: #{encoder_llata_forward.3} parent=5 // pred_check_branch
        %368 = sbr.rel (%p365) target = $region12
      $region11: #{encoder_llata_forward.3} parent=5 // pred_region
        %s369 = ssub.s32 %s35, 1
        // Predicated region
        $region13: #{encoder_llata_forward.3} parent=11 // pred_check
          %p370 = pneg %p96
        $region14: #{encoder_llata_forward.3} parent=11 // pred_check_branch
          %372 = sbr.rel (%p370) target = $region16
        $region15: #{encoder_llata_forward.3} parent=11 // pred_region
          %s374 = ssub.s32 128, 128
          %375 = vsyncadd [#allocation6], %s374
          %s376 = sshll.u32 [#allocation5], 4
          %s377 = int_to_ptr.vmem [resolvable:$true] %s376
          %382 = dma.hbm_to_vmem [thread:$0]  %s1, 128, %s377, [#allocation6], 64, 64, 4
        $region16: #{encoder_llata_forward.3} parent=11 // pred_fallthru
          _
        // Predicated region
        $region17: #{encoder_llata_forward.3} parent=11 // pred_check
          %p383 = pneg %p117
        $region18: #{encoder_llata_forward.3} parent=11 // pred_check_branch
          %385 = sbr.rel (%p383) target = $region20
        $region19: #{encoder_llata_forward.3} parent=11 // pred_region
          %s387 = ssub.s32 16, 16
          %388 = vsyncadd [#allocation6], %s387
          %s390 = sshll.u32 [#allocation7], 4
          %s391 = int_to_ptr.vmem [resolvable:$true] %s390
          %393 = dma.hbm_to_vmem [thread:$0]  %s2, 16, %s391, [#allocation6]
        $region20: #{encoder_llata_forward.3} parent=11 // pred_fallthru
          _
        // Predicated region
        $region21: #{encoder_llata_forward.3} parent=11 // pred_check
          %p394 = pneg %p138
        $region22: #{encoder_llata_forward.3} parent=11 // pred_check_branch
          %396 = sbr.rel (%p394) target = $region24
        $region23: #{encoder_llata_forward.3} parent=11 // pred_region
          %s398 = ssub.s32 256, 256
          %399 = vsyncadd [#allocation9], %s398
          %s400 = sshll.u32 [#allocation8], 4
          %s401 = int_to_ptr.vmem [resolvable:$true] %s400
          %406 = dma.hbm_to_vmem [thread:$0]  %s3, 256, %s401, [#allocation9], 64, 64, 4
        $region24: #{encoder_llata_forward.3} parent=11 // pred_fallthru
          _
        // Predicated region
        $region25: #{encoder_llata_forward.3} parent=11 // pred_check
          %p407 = pneg %p159
        $region26: #{encoder_llata_forward.3} parent=11 // pred_check_branch
          %409 = sbr.rel (%p407) target = $region28
        $region27: #{encoder_llata_forward.3} parent=11 // pred_region
          %s411 = ssub.s32 16, 16
          %412 = vsyncadd [#allocation9], %s411
          %s414 = sshll.u32 [#allocation10], 4
          %s415 = int_to_ptr.vmem [resolvable:$true] %s414
          %417 = dma.hbm_to_vmem [thread:$0]  %s4, 16, %s415, [#allocation9]
        $region28: #{encoder_llata_forward.3} parent=11 // pred_fallthru
          _
        // Predicated region
        $region29: #{encoder_llata_forward.3} parent=11 // pred_check
          %p418 = pneg %p180
        $region30: #{encoder_llata_forward.3} parent=11 // pred_check_branch
          %420 = sbr.rel (%p418) target = $region32
        $region31: #{encoder_llata_forward.3} parent=11 // pred_region
          %s422 = ssub.s32 256, 256
          %423 = vsyncadd [#allocation12], %s422
          %s424 = sshll.u32 [#allocation11], 4
          %s425 = int_to_ptr.vmem [resolvable:$true] %s424
          %430 = dma.hbm_to_vmem [thread:$0]  %s5, 256, %s425, [#allocation12], 64, 64, 4
        $region32: #{encoder_llata_forward.3} parent=11 // pred_fallthru
          _
        // Predicated region
        $region33: #{encoder_llata_forward.3} parent=11 // pred_check
          %p431 = pneg %p201
        $region34: #{encoder_llata_forward.3} parent=11 // pred_check_branch
          %433 = sbr.rel (%p431) target = $region36
        $region35: #{encoder_llata_forward.3} parent=11 // pred_region
          %s435 = ssub.s32 16, 16
          %436 = vsyncadd [#allocation12], %s435
          %s438 = sshll.u32 [#allocation13], 4
          %s439 = int_to_ptr.vmem [resolvable:$true] %s438
          %441 = dma.hbm_to_vmem [thread:$0]  %s6, 16, %s439, [#allocation12]
        $region36: #{encoder_llata_forward.3} parent=11 // pred_fallthru
          _
        // Predicated region
        $region37: #{encoder_llata_forward.3} parent=11 // pred_check
          %p442 = pneg %p222
        $region38: #{encoder_llata_forward.3} parent=11 // pred_check_branch
          %444 = sbr.rel (%p442) target = $region40
        $region39: #{encoder_llata_forward.3} parent=11 // pred_region
          %s446 = ssub.s32 256, 256
          %447 = vsyncadd [#allocation15], %s446
          %s448 = sshll.u32 [#allocation14], 4
          %s449 = int_to_ptr.vmem [resolvable:$true] %s448
          %454 = dma.hbm_to_vmem [thread:$0]  %s7, 256, %s449, [#allocation15], 64, 64, 4
        $region40: #{encoder_llata_forward.3} parent=11 // pred_fallthru
          _
        // Predicated region
        $region41: #{encoder_llata_forward.3} parent=11 // pred_check
          %p455 = pneg %p243
        $region42: #{encoder_llata_forward.3} parent=11 // pred_check_branch
          %457 = sbr.rel (%p455) target = $region44
        $region43: #{encoder_llata_forward.3} parent=11 // pred_region
          %s459 = ssub.s32 16, 16
          %460 = vsyncadd [#allocation15], %s459
          %s462 = sshll.u32 [#allocation16], 4
          %s463 = int_to_ptr.vmem [resolvable:$true] %s462
          %465 = dma.hbm_to_vmem [thread:$0]  %s8, 16, %s463, [#allocation15]
        $region44: #{encoder_llata_forward.3} parent=11 // pred_fallthru
          _
      $region12: #{encoder_llata_forward.3} parent=5 // pred_fallthru
        _
      %p466 = scmp.lt.s32.totalorder %s35, 2
      // Predicated region
      $region45: #{encoder_llata_forward.3} parent=5 // pred_check
        %p467 = pneg %p466
      $region46: #{encoder_llata_forward.3} parent=5 // pred_check_branch
        %469 = sbr.rel (%p467) target = $region48
      $region47: #{encoder_llata_forward.3} parent=5 // pred_region
        // Predicated region
        $region49: #{encoder_llata_forward.3} parent=47 // pred_check
          %p470 = pneg %p69
        $region50: #{encoder_llata_forward.3} parent=47 // pred_check_branch
          %472 = sbr.rel (%p470) target = $region52
        $region51: #{encoder_llata_forward.3} parent=47 // pred_region
          %s473 = sand.u32 %s59, 1
          %s474 = scalar_lea.sflag [#allocation3], %s473
          %s475 = sand.u32 %s59, 1
          %s476 = smul.addr %s475, 8
          %s477 = scalar_lea.vmem [#allocation2], %s476
          %s479 = ssub.s32 128, 128
          %480 = vsyncadd %s474, %s479
          %s481 = sadd.s32 %s43, %s42
          %s482 = smul.addr %s481, 128
          %s483 = scalar_lea.hbm %s0, %s482
          %s485 = sshll.u32 %s477, 4
          %s486 = int_to_ptr.vmem [resolvable:$true] %s485
          %488 = dma.hbm_to_vmem [thread:$0]  %s483, 128, %s486, %s474
        $region52: #{encoder_llata_forward.3} parent=47 // pred_fallthru
          _
      $region48: #{encoder_llata_forward.3} parent=5 // pred_fallthru
        _
      %p489 = scmp.le.s32.totalorder 1, %s35
      %p490 = scmp.lt.s32.totalorder %s35, 3
      %p491 = pnand %p489, %p490
      %p492 = pneg %p491
      // Predicated region
      $region53: #{encoder_llata_forward.3} parent=5 // pred_check
        _
      $region54: #{encoder_llata_forward.3} parent=5 // pred_check_branch
        %494 = sbr.rel (%p491) target = $region56
      $region55: #{encoder_llata_forward.3} parent=5 // pred_region
        %s495 = ssub.s32 %s35, 1
        %s496 = sand.u32 %s62, 1
        %s497 = scalar_lea.sflag [#allocation3], %s496
        %s498 = sand.u32 %s62, 1
        %s499 = smul.addr %s498, 8
        %s500 = scalar_lea.vmem [#allocation2], %s499
        // Predicated region
        $region57: #{encoder_llata_forward.3} parent=55 // pred_check
          %p501 = pneg %p75
        $region58: #{encoder_llata_forward.3} parent=55 // pred_check_branch
          %503 = sbr.rel (%p501) target = $region60
        $region59: #{encoder_llata_forward.3} parent=55 // pred_region
          %504 = dma.done %s497, 128
        $region60: #{encoder_llata_forward.3} parent=55 // pred_fallthru
          _
        // Predicated region
        $region61: #{encoder_llata_forward.3} parent=55 // pred_check
          %p505 = pneg %p96
        $region62: #{encoder_llata_forward.3} parent=55 // pred_check_branch
          %507 = sbr.rel (%p505) target = $region64
        $region63: #{encoder_llata_forward.3} parent=55 // pred_region
          %508 = dma.done [#allocation6], 128
        $region64: #{encoder_llata_forward.3} parent=55 // pred_fallthru
          _
        // Predicated region
        $region65: #{encoder_llata_forward.3} parent=55 // pred_check
          %p509 = pneg %p117
        $region66: #{encoder_llata_forward.3} parent=55 // pred_check_branch
          %511 = sbr.rel (%p509) target = $region68
        $region67: #{encoder_llata_forward.3} parent=55 // pred_region
          %512 = dma.done [#allocation6], 16
        $region68: #{encoder_llata_forward.3} parent=55 // pred_fallthru
          _
        // Predicated region
        $region69: #{encoder_llata_forward.3} parent=55 // pred_check
          %p513 = pneg %p138
        $region70: #{encoder_llata_forward.3} parent=55 // pred_check_branch
          %515 = sbr.rel (%p513) target = $region72
        $region71: #{encoder_llata_forward.3} parent=55 // pred_region
          %516 = dma.done [#allocation9], 256
        $region72: #{encoder_llata_forward.3} parent=55 // pred_fallthru
          _
        // Predicated region
        $region73: #{encoder_llata_forward.3} parent=55 // pred_check
          %p517 = pneg %p159
        $region74: #{encoder_llata_forward.3} parent=55 // pred_check_branch
          %519 = sbr.rel (%p517) target = $region76
        $region75: #{encoder_llata_forward.3} parent=55 // pred_region
          %520 = dma.done [#allocation9], 16
        $region76: #{encoder_llata_forward.3} parent=55 // pred_fallthru
          _
        // Predicated region
        $region77: #{encoder_llata_forward.3} parent=55 // pred_check
          %p521 = pneg %p180
        $region78: #{encoder_llata_forward.3} parent=55 // pred_check_branch
          %523 = sbr.rel (%p521) target = $region80
        $region79: #{encoder_llata_forward.3} parent=55 // pred_region
          %524 = dma.done [#allocation12], 256
        $region80: #{encoder_llata_forward.3} parent=55 // pred_fallthru
          _
        // Predicated region
        $region81: #{encoder_llata_forward.3} parent=55 // pred_check
          %p525 = pneg %p201
        $region82: #{encoder_llata_forward.3} parent=55 // pred_check_branch
          %527 = sbr.rel (%p525) target = $region84
        $region83: #{encoder_llata_forward.3} parent=55 // pred_region
          %528 = dma.done [#allocation12], 16
        $region84: #{encoder_llata_forward.3} parent=55 // pred_fallthru
          _
        // Predicated region
        $region85: #{encoder_llata_forward.3} parent=55 // pred_check
          %p529 = pneg %p222
        $region86: #{encoder_llata_forward.3} parent=55 // pred_check_branch
          %531 = sbr.rel (%p529) target = $region88
        $region87: #{encoder_llata_forward.3} parent=55 // pred_region
          %532 = dma.done [#allocation15], 256
        $region88: #{encoder_llata_forward.3} parent=55 // pred_fallthru
          _
        // Predicated region
        $region89: #{encoder_llata_forward.3} parent=55 // pred_check
          %p533 = pneg %p243
        $region90: #{encoder_llata_forward.3} parent=55 // pred_check_branch
          %535 = sbr.rel (%p533) target = $region92
        $region91: #{encoder_llata_forward.3} parent=55 // pred_region
          %536 = dma.done [#allocation15], 16
        $region92: #{encoder_llata_forward.3} parent=55 // pred_fallthru
          _
        %s537 = sand.u32 %s62, 1
        %s538 = scalar_lea.sflag [#allocation3], %s537
        %s539 = sand.u32 %s62, 1
        %s540 = smul.addr %s539, 8
        %s541 = scalar_lea.vmem [#allocation2], %s540
        %p542 = pneg %p75
        %p543 = pneg %p72
        %p544 = pneg %p96
        %p545 = pneg %p93
        %p546 = pneg %p117
        %p547 = pneg %p114
        %p548 = pneg %p138
        %p549 = pneg %p135
        %p550 = pneg %p159
        %p551 = pneg %p156
        %p552 = pneg %p180
        %p553 = pneg %p177
        %p554 = pneg %p201
        %p555 = pneg %p198
        %p556 = pneg %p222
        %p557 = pneg %p219
        %p558 = pneg %p243
        %p559 = pneg %p240
        %p560 = pneg %p271
        %p561 = pneg %p268
        %s562 = sand.u32 %s258, 1
        %s563 = scalar_lea.sflag [#allocation4], %s562
        %s564 = sand.u32 %s258, 1
        %s565 = smul.addr %s564, 4
        %s566 = scalar_lea.vmem [#allocation17], %s565
        %p567 = pneg %p299
        %p568 = pneg %p296
        %s569 = sand.u32 %s40, 1
        %s570 = scalar_lea.sflag [#allocation19], %s569
        %s571 = sand.u32 %s286, 1
        %s572 = smul.addr %s571, 16
        %s573 = scalar_lea.vmem [#allocation18], %s572
        %p574 = pneg %p327
        %p575 = pneg %p324
        %s576 = sand.u32 %s40, 1
        %s577 = scalar_lea.sflag [#allocation19], %s576
        %s578 = sand.u32 %s314, 1
        %s579 = smul.addr %s578, 16
        %s580 = scalar_lea.vmem [#allocation20], %s579
        %p581 = pneg %p355
        %p582 = pneg %p352
        %s583 = sand.u32 %s342, 1
        %s584 = scalar_lea.sflag [#allocation22], %s583
        %s585 = sand.u32 %s342, 1
        %s586 = smul.addr %s585, 16
        %s587 = scalar_lea.vmem [#allocation21], %s586
        %v589 = vld [vmem:[%s500] sm:$0xff]
        %v590 = vpack.c.bf16 %v589, %v589
        %v591 = vld [vmem:[#allocation5] sm:$0xf]
        %v592 = vld [vmem:[#allocation5 + $0x4] sm:$0xf]
        %v593 = vld [vmem:[#allocation7] sm:$0x1]
        %v595 = vlaneseq
        %v596 = vshrl.u32 %v595, 7
        %v597 = vsub.s32 0, %v596
        %v598 = vrot.slane %v593, %v597
        %v602 = vunpack.c.l.b16 %v591
        %v603 = vunpack.c.l.b16 %v592
        %v604 = vpack.c.b16 %v603, %v602
        %vm606 = vcmask 130048
        %v608 = vsel %vm606, %v590, 0
        %610 = vmatprep.subr.bf16.mxu0 0
        %611 = vmatpush1.bf16.msra.mxu0 %v604
        %612 = vmatprep.subr.bf16.mxu0 0
        %613 = vmatpush1.bf16.msra.mxu0 0
        %614 = vmatprep.subr.bf16.mxu0 0
        %615 = vmatpush1.bf16.msra.mxu0 0
        %616 = vmatprep.subr.bf16.mxu0 0
        %617 = vmatpush1.bf16.msra.mxu0 0
        %618 = vmatprep.subr.bf16.mxu0 0
        %619 = vmatpush1.bf16.msra.mxu0 0
        %620 = vmatprep.subr.bf16.mxu0 0
        %621 = vmatpush1.bf16.msra.mxu0 0
        %622 = vmatprep.subr.bf16.mxu0 0
        %623 = vmatpush1.bf16.msra.mxu0 0
        %624 = vmatprep.subr.bf16.mxu0 0
        %625 = vmatpush1.bf16.msra.mxu0 0
        %626 = vmatprep.subr.bf16.mxu0 0
        %627 = vmatpush1.bf16.msra.mxu0 0
        %628 = vmatprep.subr.bf16.mxu0 0
        %629 = vmatpush1.bf16.msra.mxu0 0
        %630 = vmatprep.subr.bf16.mxu0 0
        %631 = vmatpush1.bf16.msra.mxu0 0
        %632 = vmatprep.subr.bf16.mxu0 0
        %633 = vmatpush1.bf16.msra.mxu0 0
        %634 = vmatprep.subr.bf16.mxu0 0
        %635 = vmatpush1.bf16.msra.mxu0 0
        %636 = vmatprep.subr.bf16.mxu0 0
        %637 = vmatpush1.bf16.msra.mxu0 0
        %638 = vmatprep.subr.bf16.mxu0 0
        %639 = vmatpush1.bf16.msra.mxu0 0
        %640 = vmatprep.subr.bf16.mxu0 0
        %641 = vmatpush1.bf16.msra.mxu0 0
        %642 = vmatprep.mubr.bf16.mxu0 0
        %643 = vmatmul.mubr.bf16.gmra.mrb[0].mxu0 %v608
        %v644 = vpop.f32.mrb[0].mxu0
        %v645 = vadd.f32 %v598, %v644
        %v646 = vpop.f32.mrb[0].mxu0
        %v647 = vpop.f32.mrb[0].mxu0
        %v648 = vpop.f32.mrb[0].mxu0
        %649 = vdwg.mxu0
        %v650 = vpack.c.bf16 %v645, %v645
        %vm651 = vcmask 257024
        %652 = vst.msk [vmem:[%s566] sm:$0xf] %vm651, %v650
        %v653 = vld [vmem:[#allocation8] sm:$0xf]
        %v654 = vld [vmem:[#allocation8 + $0x4] sm:$0xf]
        %v655 = vld [vmem:[#allocation8 + $0x8] sm:$0xf]
        %v656 = vld [vmem:[#allocation8 + $0xc] sm:$0xf]
        %v657 = vld [vmem:[#allocation10] sm:$0x1]
        %v659 = vlaneseq
        %v660 = vshrl.u32 %v659, 7
        %v661 = vsub.s32 0, %v660
        %v662 = vrot.slane %v657, %v661
        %v668 = vunpack.c.l.b16 %v653
        %v669 = vunpack.c.l.b16 %v654
        %v670 = vunpack.c.l.b16 %v655
        %v671 = vunpack.c.l.b16 %v656
        %v672 = vpack.c.b16 %v669, %v668
        %v673 = vpack.c.b16 %v671, %v670
        %vm676 = vcmask 261120
        %v678 = vsel %vm676, %v650, 0
        %680 = vmatprep.subr.bf16.mxu0 0
        %681 = vmatpush1.bf16.msra.mxu0 %v672
        %682 = vmatprep.subr.bf16.mxu0 0
        %683 = vmatpush1.bf16.msra.mxu0 %v673
        %684 = vmatprep.subr.bf16.mxu0 0
        %685 = vmatpush1.bf16.msra.mxu0 0
        %686 = vmatprep.subr.bf16.mxu0 0
        %687 = vmatpush1.bf16.msra.mxu0 0
        %688 = vmatprep.subr.bf16.mxu0 0
        %689 = vmatpush1.bf16.msra.mxu0 0
        %690 = vmatprep.subr.bf16.mxu0 0
        %691 = vmatpush1.bf16.msra.mxu0 0
        %692 = vmatprep.subr.bf16.mxu0 0
        %693 = vmatpush1.bf16.msra.mxu0 0
        %694 = vmatprep.subr.bf16.mxu0 0
        %695 = vmatpush1.bf16.msra.mxu0 0
        %696 = vmatprep.subr.bf16.mxu0 0
        %697 = vmatpush1.bf16.msra.mxu0 0
        %698 = vmatprep.subr.bf16.mxu0 0
        %699 = vmatpush1.bf16.msra.mxu0 0
        %700 = vmatprep.subr.bf16.mxu0 0
        %701 = vmatpush1.bf16.msra.mxu0 0
        %702 = vmatprep.subr.bf16.mxu0 0
        %703 = vmatpush1.bf16.msra.mxu0 0
        %704 = vmatprep.subr.bf16.mxu0 0
        %705 = vmatpush1.bf16.msra.mxu0 0
        %706 = vmatprep.subr.bf16.mxu0 0
        %707 = vmatpush1.bf16.msra.mxu0 0
        %708 = vmatprep.subr.bf16.mxu0 0
        %709 = vmatpush1.bf16.msra.mxu0 0
        %710 = vmatprep.subr.bf16.mxu0 0
        %711 = vmatpush1.bf16.msra.mxu0 0
        %712 = vmatprep.mubr.bf16.mxu0 0
        %713 = vmatmul.mubr.bf16.gmra.mrb[0].mxu0 %v678
        %v714 = vpop.f32.mrb[0].mxu0
        %v715 = vadd.f32 %v662, %v714
        %v716 = vpop.f32.mrb[0].mxu0
        %v717 = vpop.f32.mrb[0].mxu0
        %v718 = vpop.f32.mrb[0].mxu0
        %719 = vdwg.mxu0
        %v720 = vld [vmem:[#allocation11] sm:$0xf]
        %v721 = vld [vmem:[#allocation11 + $0x4] sm:$0xf]
        %v722 = vld [vmem:[#allocation11 + $0x8] sm:$0xf]
        %v723 = vld [vmem:[#allocation11 + $0xc] sm:$0xf]
        %v724 = vld [vmem:[#allocation13] sm:$0x1]
        %v726 = vlaneseq
        %v727 = vshrl.u32 %v726, 7
        %v728 = vsub.s32 0, %v727
        %v729 = vrot.slane %v724, %v728
        %v735 = vunpack.c.l.b16 %v720
        %v736 = vunpack.c.l.b16 %v721
        %v737 = vunpack.c.l.b16 %v722
        %v738 = vunpack.c.l.b16 %v723
        %v739 = vpack.c.b16 %v736, %v735
        %v740 = vpack.c.b16 %v738, %v737
        %743 = vmatprep.subr.bf16.mxu0 0
        %744 = vmatpush1.bf16.msra.mxu0 %v739
        %745 = vmatprep.subr.bf16.mxu0 0
        %746 = vmatpush1.bf16.msra.mxu0 %v740
        %747 = vmatprep.subr.bf16.mxu0 0
        %748 = vmatpush1.bf16.msra.mxu0 0
        %749 = vmatprep.subr.bf16.mxu0 0
        %750 = vmatpush1.bf16.msra.mxu0 0
        %751 = vmatprep.subr.bf16.mxu0 0
        %752 = vmatpush1.bf16.msra.mxu0 0
        %753 = vmatprep.subr.bf16.mxu0 0
        %754 = vmatpush1.bf16.msra.mxu0 0
        %755 = vmatprep.subr.bf16.mxu0 0
        %756 = vmatpush1.bf16.msra.mxu0 0
        %757 = vmatprep.subr.bf16.mxu0 0
        %758 = vmatpush1.bf16.msra.mxu0 0
        %759 = vmatprep.subr.bf16.mxu0 0
        %760 = vmatpush1.bf16.msra.mxu0 0
        %761 = vmatprep.subr.bf16.mxu0 0
        %762 = vmatpush1.bf16.msra.mxu0 0
        %763 = vmatprep.subr.bf16.mxu0 0
        %764 = vmatpush1.bf16.msra.mxu0 0
        %765 = vmatprep.subr.bf16.mxu0 0
        %766 = vmatpush1.bf16.msra.mxu0 0
        %767 = vmatprep.subr.bf16.mxu0 0
        %768 = vmatpush1.bf16.msra.mxu0 0
        %769 = vmatprep.subr.bf16.mxu0 0
        %770 = vmatpush1.bf16.msra.mxu0 0
        %771 = vmatprep.subr.bf16.mxu0 0
        %772 = vmatpush1.bf16.msra.mxu0 0
        %773 = vmatprep.subr.bf16.mxu0 0
        %774 = vmatpush1.bf16.msra.mxu0 0
        %775 = vmatprep.mubr.bf16.mxu0 0
        %776 = vmatmul.mubr.bf16.gmra.mrb[0].mxu0 %v678
        %v777 = vpop.f32.mrb[0].mxu0
        %v778 = vadd.f32 %v729, %v777
        %v779 = vpop.f32.mrb[0].mxu0
        %v780 = vpop.f32.mrb[0].mxu0
        %v781 = vpop.f32.mrb[0].mxu0
        %782 = vdwg.mxu0
        %v783 = vld [vmem:[#allocation14] sm:$0xf]
        %v784 = vld [vmem:[#allocation14 + $0x4] sm:$0xf]
        %v785 = vld [vmem:[#allocation14 + $0x8] sm:$0xf]
        %v786 = vld [vmem:[#allocation14 + $0xc] sm:$0xf]
        %v787 = vld [vmem:[#allocation16] sm:$0x1]
        %v789 = vlaneseq
        %v790 = vshrl.u32 %v789, 7
        %v791 = vsub.s32 0, %v790
        %v792 = vrot.slane %v787, %v791
        %v798 = vunpack.c.l.b16 %v783
        %v799 = vunpack.c.l.b16 %v784
        %v800 = vunpack.c.l.b16 %v785
        %v801 = vunpack.c.l.b16 %v786
        %v802 = vpack.c.b16 %v799, %v798
        %v803 = vpack.c.b16 %v801, %v800
        %806 = vmatprep.subr.bf16.mxu0 0
        %807 = vmatpush1.bf16.msra.mxu0 %v802
        %808 = vmatprep.subr.bf16.mxu0 0
        %809 = vmatpush1.bf16.msra.mxu0 %v803
        %810 = vmatprep.subr.bf16.mxu0 0
        %811 = vmatpush1.bf16.msra.mxu0 0
        %812 = vmatprep.subr.bf16.mxu0 0
        %813 = vmatpush1.bf16.msra.mxu0 0
        %814 = vmatprep.subr.bf16.mxu0 0
        %815 = vmatpush1.bf16.msra.mxu0 0
        %816 = vmatprep.subr.bf16.mxu0 0
        %817 = vmatpush1.bf16.msra.mxu0 0
        %818 = vmatprep.subr.bf16.mxu0 0
        %819 = vmatpush1.bf16.msra.mxu0 0
        %820 = vmatprep.subr.bf16.mxu0 0
        %821 = vmatpush1.bf16.msra.mxu0 0
        %822 = vmatprep.subr.bf16.mxu0 0
        %823 = vmatpush1.bf16.msra.mxu0 0
        %824 = vmatprep.subr.bf16.mxu0 0
        %825 = vmatpush1.bf16.msra.mxu0 0
        %826 = vmatprep.subr.bf16.mxu0 0
        %827 = vmatpush1.bf16.msra.mxu0 0
        %828 = vmatprep.subr.bf16.mxu0 0
        %829 = vmatpush1.bf16.msra.mxu0 0
        %830 = vmatprep.subr.bf16.mxu0 0
        %831 = vmatpush1.bf16.msra.mxu0 0
        %832 = vmatprep.subr.bf16.mxu0 0
        %833 = vmatpush1.bf16.msra.mxu0 0
        %834 = vmatprep.subr.bf16.mxu0 0
        %835 = vmatpush1.bf16.msra.mxu0 0
        %836 = vmatprep.subr.bf16.mxu0 0
        %837 = vmatpush1.bf16.msra.mxu0 0
        %838 = vmatprep.mubr.bf16.mxu0 0
        %839 = vmatmul.mubr.bf16.gmra.mrb[0].mxu0 %v678
        %v840 = vpop.f32.mrb[0].mxu0
        %v841 = vadd.f32 %v792, %v840
        %v842 = vpop.f32.mrb[0].mxu0
        %v843 = vpop.f32.mrb[0].mxu0
        %v844 = vpop.f32.mrb[0].mxu0
        %845 = vdwg.mxu0
        %v846 = vpack.c.bf16 %v715, %v715
        %vm847 = vcmask 60416
        %848 = vst.msk [vmem:[%s573] sm:$0xf] %vm847, %v846
        %v849 = vpack.c.bf16 %v778, %v778
        %850 = vst.msk [vmem:[%s580] sm:$0xf] %vm847, %v849
        %v851 = vpack.c.bf16 %v841, %v841
        %852 = vst.msk [vmem:[%s587] sm:$0xf] %vm847, %v851
        %v854 = vunpack.c.l.b16 %v846
        %v855 = vpack.c.b16 %v854, %v854
        %856 = vrot.lane.b32.xlu0 %v855, 120
        %v857 = vpop.permute.xlu0 %856
        %s859 = scalar_lea.vmem %s573, 4 [#allocation18]
        %860 = vst.msk [vmem:[%s859] sm:$0xf] %vm847, %v857
        %v862 = vunpack.c.l.b16 %v849
        %v863 = vpack.c.b16 %v862, %v862
        %864 = vrot.lane.b32.xlu0 %v863, 120
        %v865 = vpop.permute.xlu0 %864
        %s867 = scalar_lea.vmem %s580, 4 [#allocation20]
        %868 = vst.msk [vmem:[%s867] sm:$0xf] %vm847, %v865
        %v870 = vunpack.c.l.b16 %v851
        %v871 = vpack.c.b16 %v870, %v870
        %872 = vrot.lane.b32.xlu0 %v871, 120
        %v873 = vpop.permute.xlu0 %872
        %s875 = scalar_lea.vmem %s587, 4 [#allocation21]
        %876 = vst.msk [vmem:[%s875] sm:$0xf] %vm847, %v873
        %877 = vrot.lane.b32.xlu0 %v855, 112
        %v878 = vpop.permute.xlu0 %877
        %s880 = scalar_lea.vmem %s573, 8 [#allocation18]
        %881 = vst.msk [vmem:[%s880] sm:$0xf] %vm847, %v878
        %882 = vrot.lane.b32.xlu0 %v863, 112
        %v883 = vpop.permute.xlu0 %882
        %s885 = scalar_lea.vmem %s580, 8 [#allocation20]
        %886 = vst.msk [vmem:[%s885] sm:$0xf] %vm847, %v883
        %887 = vrot.lane.b32.xlu0 %v871, 112
        %v888 = vpop.permute.xlu0 %887
        %s890 = scalar_lea.vmem %s587, 8 [#allocation21]
        %891 = vst.msk [vmem:[%s890] sm:$0xf] %vm847, %v888
        %892 = vrot.lane.b32.xlu0 %v855, 104
        %v893 = vpop.permute.xlu0 %892
        %s895 = scalar_lea.vmem %s573, 12 [#allocation18]
        %896 = vst.msk [vmem:[%s895] sm:$0xf] %vm847, %v893
        %897 = vrot.lane.b32.xlu0 %v863, 104
        %v898 = vpop.permute.xlu0 %897
        %s900 = scalar_lea.vmem %s580, 12 [#allocation20]
        %901 = vst.msk [vmem:[%s900] sm:$0xf] %vm847, %v898
        %902 = vrot.lane.b32.xlu0 %v871, 104
        %v903 = vpop.permute.xlu0 %902
        %s905 = scalar_lea.vmem %s587, 12 [#allocation21]
        %906 = vst.msk [vmem:[%s905] sm:$0xf] %vm847, %v903
        %s907 = sand.u32 %s258, 1
        %s908 = scalar_lea.sflag [#allocation4], %s907
        %s909 = sand.u32 %s258, 1
        %s910 = smul.addr %s909, 4
        %s911 = scalar_lea.vmem [#allocation17], %s910
        %s912 = sand.u32 %s40, 1
        %s913 = scalar_lea.sflag [#allocation19], %s912
        %s914 = sand.u32 %s286, 1
        %s915 = smul.addr %s914, 16
        %s916 = scalar_lea.vmem [#allocation18], %s915
        %s917 = sand.u32 %s40, 1
        %s918 = scalar_lea.sflag [#allocation19], %s917
        %s919 = sand.u32 %s314, 1
        %s920 = smul.addr %s919, 16
        %s921 = scalar_lea.vmem [#allocation20], %s920
        %s922 = sand.u32 %s342, 1
        %s923 = scalar_lea.sflag [#allocation22], %s922
        %s924 = sand.u32 %s342, 1
        %s925 = smul.addr %s924, 16
        %s926 = scalar_lea.vmem [#allocation21], %s925
        // Predicated region
        $region93: #{encoder_llata_forward.3} parent=55 // pred_check
          %p927 = pneg %p268
        $region94: #{encoder_llata_forward.3} parent=55 // pred_check_branch
          %929 = sbr.rel (%p927) target = $region96
        $region95: #{encoder_llata_forward.3} parent=55 // pred_region
          %s931 = ssub.s32 64, 64
          %932 = vsyncadd %s908, %s931
          %s933 = sadd.s32 %s45, %s44
          %s934 = smul.addr %s933, 64
          %s935 = scalar_lea.hbm %s9, %s934
          %s937 = sshll.u32 %s911, 4
          %s938 = int_to_ptr.vmem [resolvable:$true] %s937
          %940 = dma.vmem_to_hbm [thread:$0]  %s938, 64, %s935, %s908
        $region96: #{encoder_llata_forward.3} parent=55 // pred_fallthru
          _
        // Predicated region
        $region97: #{encoder_llata_forward.3} parent=55 // pred_check
          %p941 = pneg %p296
        $region98: #{encoder_llata_forward.3} parent=55 // pred_check_branch
          %943 = sbr.rel (%p941) target = $region100
        $region99: #{encoder_llata_forward.3} parent=55 // pred_region
          %s945 = ssub.s32 256, 256
          %946 = vsyncadd %s913, %s945
          %s947 = smul.addr %s44, 4
          %s948 = sadd.s32 %s45, %s947
          %s949 = smul.addr %s948, 64
          %s950 = scalar_lea.hbm %s10, %s949
          %s951 = sshll.u32 %s916, 4
          %s952 = int_to_ptr.vmem [resolvable:$true] %s951
          %957 = dma.vmem_to_hbm [thread:$0]  %s952, 256, %s950, %s913, 64, 64, 4
        $region100: #{encoder_llata_forward.3} parent=55 // pred_fallthru
          _
        // Predicated region
        $region101: #{encoder_llata_forward.3} parent=55 // pred_check
          %p958 = pneg %p324
        $region102: #{encoder_llata_forward.3} parent=55 // pred_check_branch
          %960 = sbr.rel (%p958) target = $region104
        $region103: #{encoder_llata_forward.3} parent=55 // pred_region
          %s962 = ssub.s32 256, 256
          %963 = vsyncadd %s918, %s962
          %s964 = smul.addr %s44, 4
          %s965 = sadd.s32 %s45, %s964
          %s966 = smul.addr %s965, 64
          %s967 = scalar_lea.hbm %s11, %s966
          %s968 = sshll.u32 %s921, 4
          %s969 = int_to_ptr.vmem [resolvable:$true] %s968
          %974 = dma.vmem_to_hbm [thread:$0]  %s969, 256, %s967, %s918, 64, 64, 4
        $region104: #{encoder_llata_forward.3} parent=55 // pred_fallthru
          _
        // Predicated region
        $region105: #{encoder_llata_forward.3} parent=55 // pred_check
          %p975 = pneg %p352
        $region106: #{encoder_llata_forward.3} parent=55 // pred_check_branch
          %977 = sbr.rel (%p975) target = $region108
        $region107: #{encoder_llata_forward.3} parent=55 // pred_region
          %s979 = ssub.s32 256, 256
          %980 = vsyncadd %s923, %s979
          %s981 = smul.addr %s44, 4
          %s982 = sadd.s32 %s45, %s981
          %s983 = smul.addr %s982, 64
          %s984 = scalar_lea.hbm %s12, %s983
          %s985 = sshll.u32 %s926, 4
          %s986 = int_to_ptr.vmem [resolvable:$true] %s985
          %991 = dma.vmem_to_hbm [thread:$0]  %s986, 256, %s984, %s923, 64, 64, 4
        $region108: #{encoder_llata_forward.3} parent=55 // pred_fallthru
          _
      $region56: #{encoder_llata_forward.3} parent=5 // pred_fallthru
        _
      %p992 = scmp.le.s32.totalorder 2, %s35
      // Predicated region
      $region109: #{encoder_llata_forward.3} parent=5 // pred_check
        %p993 = pneg %p992
      $region110: #{encoder_llata_forward.3} parent=5 // pred_check_branch
        %995 = sbr.rel (%p993) target = $region112
      $region111: #{encoder_llata_forward.3} parent=5 // pred_region
        %s996 = ssub.s32 %s35, 2
        // Predicated region
        $region113: #{encoder_llata_forward.3} parent=111 // pred_check
          %p997 = pneg %p274
        $region114: #{encoder_llata_forward.3} parent=111 // pred_check_branch
          %999 = sbr.rel (%p997) target = $region116
        $region115: #{encoder_llata_forward.3} parent=111 // pred_region
          %s1000 = sand.u32 %s259, 1
          %s1001 = scalar_lea.sflag [#allocation4], %s1000
          %s1002 = sand.u32 %s259, 1
          %s1003 = smul.addr %s1002, 4
          %s1004 = scalar_lea.vmem [#allocation17], %s1003
          %1005 = dma.done %s1001, 64
        $region116: #{encoder_llata_forward.3} parent=111 // pred_fallthru
          _
        // Predicated region
        $region117: #{encoder_llata_forward.3} parent=111 // pred_check
          %p1006 = pneg %p302
        $region118: #{encoder_llata_forward.3} parent=111 // pred_check_branch
          %1008 = sbr.rel (%p1006) target = $region120
        $region119: #{encoder_llata_forward.3} parent=111 // pred_region
          %s1009 = sand.u32 %s41, 1
          %s1010 = scalar_lea.sflag [#allocation19], %s1009
          %s1011 = sand.u32 %s287, 1
          %s1012 = smul.addr %s1011, 16
          %s1013 = scalar_lea.vmem [#allocation18], %s1012
          %1014 = dma.done %s1010, 256
        $region120: #{encoder_llata_forward.3} parent=111 // pred_fallthru
          _
        // Predicated region
        $region121: #{encoder_llata_forward.3} parent=111 // pred_check
          %p1015 = pneg %p330
        $region122: #{encoder_llata_forward.3} parent=111 // pred_check_branch
          %1017 = sbr.rel (%p1015) target = $region124
        $region123: #{encoder_llata_forward.3} parent=111 // pred_region
          %s1018 = sand.u32 %s41, 1
          %s1019 = scalar_lea.sflag [#allocation19], %s1018
          %s1020 = sand.u32 %s315, 1
          %s1021 = smul.addr %s1020, 16
          %s1022 = scalar_lea.vmem [#allocation20], %s1021
          %1023 = dma.done %s1019, 256
        $region124: #{encoder_llata_forward.3} parent=111 // pred_fallthru
          _
        // Predicated region
        $region125: #{encoder_llata_forward.3} parent=111 // pred_check
          %p1024 = pneg %p358
        $region126: #{encoder_llata_forward.3} parent=111 // pred_check_branch
          %1026 = sbr.rel (%p1024) target = $region128
        $region127: #{encoder_llata_forward.3} parent=111 // pred_region
          %s1027 = sand.u32 %s343, 1
          %s1028 = scalar_lea.sflag [#allocation22], %s1027
          %s1029 = sand.u32 %s343, 1
          %s1030 = smul.addr %s1029, 16
          %s1031 = scalar_lea.vmem [#allocation21], %s1030
          %1032 = dma.done %s1028, 256
        $region128: #{encoder_llata_forward.3} parent=111 // pred_fallthru
          _
      $region112: #{encoder_llata_forward.3} parent=5 // pred_fallthru
        _
    $region6: #{encoder_llata_forward.3} parent=1 // loop_footer
      %s39 = sadd.s32 1, %s35
    $region7: #{encoder_llata_forward.3} parent=1 // loop_footer_branch
      %34 = sbr.rel target = $region3
    $region8: #{encoder_llata_forward.3} parent=1 // loop_exit
      _
    %1033 = vsyncpa [#allocation3], 1
    %s1034 = scalar_lea.sflag [#allocation3], 1
    %1035 = vsyncpa %s1034, 1
    %1036 = vsyncpa [#allocation6], 1
    %1037 = vsyncpa [#allocation9], 1
    %1038 = vsyncpa [#allocation12], 1
    %1039 = vsyncpa [#allocation15], 1
    %1040 = vsyncpa [#allocation4], 1
    %s1041 = scalar_lea.sflag [#allocation4], 1
    %1042 = vsyncpa %s1041, 1
    %1043 = vsyncpa [#allocation19], 1
    %s1044 = scalar_lea.sflag [#allocation19], 1
    %1045 = vsyncpa %s1044, 1
    %1046 = vsyncpa [#allocation22], 1
    %s1047 = scalar_lea.sflag [#allocation22], 1
    %1048 = vsyncpa %s1047, 1

// kernel: encoder_llata_forward.4
$region0: #{encoder_llata_forward.4}
  #allocation0 [shape = 'u32[]', space=smem, size = 0x4, offset = 0x4, fixed_abs, tag = 'smem constant byte address 0x4 - core index']
  #allocation1 [shape = 'u32[144,128]{1,0:T(1,128)}', space=vmem, size = 0x12000, scoped, tag = 'internal scratch']
  #allocation2 [shape = 'f32[8,32]{1,0:T(8,128)}', space=vmem, size = 0x1000, scoped, tag = 'scratch operand']
  %s0 = inlined_call_operand.hbm [shape: bf16[2,4,8,8], index: 0, kind: input, shape index: {}]
  %s1 = inlined_call_operand.hbm [shape: bf16[2,4,8,8], index: 1, kind: input, shape index: {}]
  %s2 = inlined_call_operand.hbm [shape: bf16[2,4,8,8], index: 2, kind: input, shape index: {}]
  %s3 = inlined_call_operand.hbm [shape: bf16[2,8,32], index: 3, kind: input, shape index: {}]
  %s4 = inlined_call_operand.hbm [shape: bf16[32,32], index: 4, kind: input, shape index: {}]
  %s5 = inlined_call_operand.hbm [shape: f32[1,32], index: 5, kind: input, shape index: {}]
  %s6 = inlined_call_operand.hbm [shape: f32[1,32], index: 6, kind: input, shape index: {}]
  %s7 = inlined_call_operand.hbm [shape: f32[1,32], index: 7, kind: input, shape index: {}]
  %s8 = inlined_call_operand.hbm [shape: bf16[2,8,32], index: 8, kind: output, shape index: {}]
  %s9 = sld [smem:[#allocation0]]
  $region97: #{encoder_llata_forward.4} parent=0
    _
  %s11 = ssub.s32 1, %s9
  %s12 = scalar_select 0, %s11, %s9
  $region1: #{encoder_llata_forward.4} parent=0
    #allocation3 [shape = 'u8[16384]{0}', space=vmem, size = 0x4000, scoped, tag = 'input window, operand 0']
    #allocation4 [shape = 's32[2]{0}', space=sflag, size = 0x8, scoped, tag = 'scoped memory for encoder_llata_forward.4']
    #allocation5 [shape = 's32[2]{0}', space=sflag, size = 0x8, scoped, tag = 'scoped memory for encoder_llata_forward.4']
    #allocation6 [shape = 'u8[16384]{0}', space=vmem, size = 0x4000, scoped, tag = 'input window, operand 1']
    #allocation7 [shape = 's32[2]{0}', space=sflag, size = 0x8, scoped, tag = 'scoped memory for encoder_llata_forward.4']
    #allocation8 [shape = 'u8[16384]{0}', space=vmem, size = 0x4000, scoped, tag = 'input window, operand 2']
    #allocation9 [shape = 'u8[4096]{0}', space=vmem, size = 0x1000, scoped, tag = 'input window, operand 3']
    #allocation10 [shape = 's32[2]{0}', space=sflag, size = 0x8, scoped, tag = 'scoped memory for encoder_llata_forward.4']
    #allocation11 [shape = 'u8[8192]{0}', space=vmem, size = 0x2000, scoped, tag = 'input window, operand 4, single buffered']
    #allocation12 [shape = 'u8[512]{0}', space=vmem, size = 0x400, scoped, tag = 'input window, operand 5, single buffered']
    #allocation13 [shape = 's32[1]{0}', space=sflag, size = 0x4, scoped, tag = 'scoped memory for encoder_llata_forward.4']
    #allocation14 [shape = 'u8[512]{0}', space=vmem, size = 0x400, scoped, tag = 'input window, operand 6, single buffered']
    #allocation15 [shape = 'u8[512]{0}', space=vmem, size = 0x400, scoped, tag = 'input window, operand 7, single buffered']
    #allocation16 [shape = 's32[1]{0}', space=sflag, size = 0x4, scoped, tag = 'scoped memory for encoder_llata_forward.4']
    #allocation17 [shape = 'u8[4096]{0}', space=vmem, size = 0x1000, scoped, tag = 'output window, operand 0']
    %13 = vsyncpa [#allocation4], 0
    %s14 = scalar_lea.sflag [#allocation4], 1
    %15 = vsyncpa %s14, 0
    %16 = vsyncpa [#allocation7], 0
    %s17 = scalar_lea.sflag [#allocation7], 1
    %18 = vsyncpa %s17, 0
    %19 = vsyncpa [#allocation10], 0
    %s20 = scalar_lea.sflag [#allocation10], 1
    %21 = vsyncpa %s20, 0
    %22 = vsyncpa [#allocation13], 0
    %23 = vsyncpa [#allocation16], 0
    %24 = vsyncpa [#allocation5], 0
    %s25 = scalar_lea.sflag [#allocation5], 1
    %26 = vsyncpa %s25, 0
    loop: start=0, step=1, limit=4
    $region2: #{encoder_llata_forward.4} parent=1 // loop_pre_header
      _
    $region3: #{encoder_llata_forward.4} parent=1 // loop_header
      %s28 = sphi 0, %s32
      %p29 = scmp.ge.s32.totalorder %s28, 4
      %s35 = sphi 0, %s47
      %s36 = sphi 0, %s43
      %s37 = sphi 0, %s35
      %s38 = sphi 0, %s36
      %s39 = sphi 0, %s37
      %s40 = sphi 0, %s38
      %s52 = sphi 0, %s54
      %s55 = sphi 0, %s52
      %s56 = sphi 0, %s55
      %s72 = sphi 0, %s56
      %s78 = sphi 0, %s80
      %s81 = sphi 0, %s78
      %s82 = sphi 0, %s81
      %s98 = sphi 0, %s82
      %s104 = sphi 0, %s106
      %s107 = sphi 0, %s104
      %s108 = sphi 0, %s107
      %s124 = sphi 0, %s108
      %s132 = sphi 0, %s134
      %s135 = sphi 0, %s132
      %s136 = sphi 0, %s135
      %s152 = sphi 0, %s136
      %s156 = sphi 0, %s156
      %s158 = sphi 0, %s156
      %s159 = sphi 0, %s158
      %s173 = sphi 0, %s159
      %s177 = sphi 0, %s177
      %s179 = sphi 0, %s177
      %s180 = sphi 0, %s179
      %s194 = sphi 0, %s180
      %s198 = sphi 0, %s198
      %s200 = sphi 0, %s198
      %s201 = sphi 0, %s200
      %s215 = sphi 0, %s201
      %s219 = sphi 0, %s219
      %s221 = sphi 0, %s219
      %s222 = sphi 0, %s221
      %s236 = sphi 0, %s222
      %s244 = sphi 0, %s246
      %s247 = sphi 0, %s244
      %s248 = sphi 0, %s247
      %s264 = sphi 0, %s248
    $region4: #{encoder_llata_forward.4} parent=1 // loop_header_branch
      %31 = sbr.rel (%p29) target = $region8
    $region5: #{encoder_llata_forward.4} parent=1 // loop_body
      %s33 = ssub.s32 %s28, 1
      %s34 = ssub.s32 %s28, 2
      %s41 = sadd.s32 1, %s36
      %p42 = scmp.ge.s32.totalorder %s41, 1
      %s43 = scalar_select %p42, 0, %s41
      %s44 = sadd.s32 1, %s35
      %s45 = scalar_select %p42, %s44, %s35
      %p46 = scmp.ge.s32.totalorder %s45, 2
      %s47 = scalar_select %p46, 0, %s45
      %s48 = ssub.s32 %s35, %s47
      %s49 = ssub.s32 %s36, %s43
      %s50 = sor.u32 %s48, %s49
      %p51 = scmp.eq.s32.totalorder %s50, 0
      %s53 = sadd.s32 %s52, 1
      %s54 = scalar_select %p51, %s52, %s53
      %p57 = pneg %p51
      %p58 = scmp.eq.s32.totalorder %s28, 1
      %p59 = por %p57, %p58
      %p60 = scmp.ne.s32.totalorder %s52, %s55
      %p61 = scmp.eq.s32.totalorder %s28, 0
      %p62 = por %p60, %p61
      %p63 = scmp.ne.s32.totalorder %s52, %s55
      %p64 = scmp.eq.s32.totalorder %s33, 1
      %p65 = por %p63, %p64
      %p66 = scmp.ne.s32.totalorder %s55, %s56
      %p67 = scmp.eq.s32.totalorder %s33, 0
      %p68 = por %p66, %p67
      %p69 = scmp.ne.s32.totalorder %s55, %s56
      %p70 = scmp.eq.s32.totalorder %s34, 1
      %p71 = por %p69, %p70
      %p73 = scmp.ne.s32.totalorder %s56, %s72
      %p74 = scmp.eq.s32.totalorder %s34, 0
      %p75 = por %p73, %p74
      %s76 = ssub.s32 %s35, %s47
      %p77 = scmp.eq.s32.totalorder %s76, 0
      %s79 = sadd.s32 %s78, 1
      %s80 = scalar_select %p77, %s78, %s79
      %p83 = pneg %p77
      %p84 = scmp.eq.s32.totalorder %s28, 1
      %p85 = por %p83, %p84
      %p86 = scmp.ne.s32.totalorder %s78, %s81
      %p87 = scmp.eq.s32.totalorder %s28, 0
      %p88 = por %p86, %p87
      %p89 = scmp.ne.s32.totalorder %s78, %s81
      %p90 = scmp.eq.s32.totalorder %s33, 1
      %p91 = por %p89, %p90
      %p92 = scmp.ne.s32.totalorder %s81, %s82
      %p93 = scmp.eq.s32.totalorder %s33, 0
      %p94 = por %p92, %p93
      %p95 = scmp.ne.s32.totalorder %s81, %s82
      %p96 = scmp.eq.s32.totalorder %s34, 1
      %p97 = por %p95, %p96
      %p99 = scmp.ne.s32.totalorder %s82, %s98
      %p100 = scmp.eq.s32.totalorder %s34, 0
      %p101 = por %p99, %p100
      %s102 = ssub.s32 %s35, %s47
      %p103 = scmp.eq.s32.totalorder %s102, 0
      %s105 = sadd.s32 %s104, 1
      %s106 = scalar_select %p103, %s104, %s105
      %p109 = pneg %p103
      %p110 = scmp.eq.s32.totalorder %s28, 1
      %p111 = por %p109, %p110
      %p112 = scmp.ne.s32.totalorder %s104, %s107
      %p113 = scmp.eq.s32.totalorder %s28, 0
      %p114 = por %p112, %p113
      %p115 = scmp.ne.s32.totalorder %s104, %s107
      %p116 = scmp.eq.s32.totalorder %s33, 1
      %p117 = por %p115, %p116
      %p118 = scmp.ne.s32.totalorder %s107, %s108
      %p119 = scmp.eq.s32.totalorder %s33, 0
      %p120 = por %p118, %p119
      %p121 = scmp.ne.s32.totalorder %s107, %s108
      %p122 = scmp.eq.s32.totalorder %s34, 1
      %p123 = por %p121, %p122
      %p125 = scmp.ne.s32.totalorder %s108, %s124
      %p126 = scmp.eq.s32.totalorder %s34, 0
      %p127 = por %p125, %p126
      %s128 = ssub.s32 %s35, %s47
      %s129 = ssub.s32 %s36, %s43
      %s130 = sor.u32 %s128, %s129
      %p131 = scmp.eq.s32.totalorder %s130, 0
      %s133 = sadd.s32 %s132, 1
      %s134 = scalar_select %p131, %s132, %s133
      %p137 = pneg %p131
      %p138 = scmp.eq.s32.totalorder %s28, 1
      %p139 = por %p137, %p138
      %p140 = scmp.ne.s32.totalorder %s132, %s135
      %p141 = scmp.eq.s32.totalorder %s28, 0
      %p142 = por %p140, %p141
      %p143 = scmp.ne.s32.totalorder %s132, %s135
      %p144 = scmp.eq.s32.totalorder %s33, 1
      %p145 = por %p143, %p144
      %p146 = scmp.ne.s32.totalorder %s135, %s136
      %p147 = scmp.eq.s32.totalorder %s33, 0
      %p148 = por %p146, %p147
      %p149 = scmp.ne.s32.totalorder %s135, %s136
      %p150 = scmp.eq.s32.totalorder %s34, 1
      %p151 = por %p149, %p150
      %p153 = scmp.ne.s32.totalorder %s136, %s152
      %p154 = scmp.eq.s32.totalorder %s34, 0
      %p155 = por %p153, %p154
      %s157 = sadd.s32 %s156, 1
      %p160 = scmp.eq.s32.totalorder %s28, 1
      %p161 = scmp.ne.s32.totalorder %s156, %s158
      %p162 = scmp.eq.s32.totalorder %s28, 0
      %p163 = por %p161, %p162
      %p164 = scmp.ne.s32.totalorder %s156, %s158
      %p165 = scmp.eq.s32.totalorder %s33, 1
      %p166 = por %p164, %p165
      %p167 = scmp.ne.s32.totalorder %s158, %s159
      %p168 = scmp.eq.s32.totalorder %s33, 0
      %p169 = por %p167, %p168
      %p170 = scmp.ne.s32.totalorder %s158, %s159
      %p171 = scmp.eq.s32.totalorder %s34, 1
      %p172 = por %p170, %p171
      %p174 = scmp.ne.s32.totalorder %s159, %s173
      %p175 = scmp.eq.s32.totalorder %s34, 0
      %p176 = por %p174, %p175
      %s178 = sadd.s32 %s177, 1
      %p181 = scmp.eq.s32.totalorder %s28, 1
      %p182 = scmp.ne.s32.totalorder %s177, %s179
      %p183 = scmp.eq.s32.totalorder %s28, 0
      %p184 = por %p182, %p183
      %p185 = scmp.ne.s32.totalorder %s177, %s179
      %p186 = scmp.eq.s32.totalorder %s33, 1
      %p187 = por %p185, %p186
      %p188 = scmp.ne.s32.totalorder %s179, %s180
      %p189 = scmp.eq.s32.totalorder %s33, 0
      %p190 = por %p188, %p189
      %p191 = scmp.ne.s32.totalorder %s179, %s180
      %p192 = scmp.eq.s32.totalorder %s34, 1
      %p193 = por %p191, %p192
      %p195 = scmp.ne.s32.totalorder %s180, %s194
      %p196 = scmp.eq.s32.totalorder %s34, 0
      %p197 = por %p195, %p196
      %s199 = sadd.s32 %s198, 1
      %p202 = scmp.eq.s32.totalorder %s28, 1
      %p203 = scmp.ne.s32.totalorder %s198, %s200
      %p204 = scmp.eq.s32.totalorder %s28, 0
      %p205 = por %p203, %p204
      %p206 = scmp.ne.s32.totalorder %s198, %s200
      %p207 = scmp.eq.s32.totalorder %s33, 1
      %p208 = por %p206, %p207
      %p209 = scmp.ne.s32.totalorder %s200, %s201
      %p210 = scmp.eq.s32.totalorder %s33, 0
      %p211 = por %p209, %p210
      %p212 = scmp.ne.s32.totalorder %s200, %s201
      %p213 = scmp.eq.s32.totalorder %s34, 1
      %p214 = por %p212, %p213
      %p216 = scmp.ne.s32.totalorder %s201, %s215
      %p217 = scmp.eq.s32.totalorder %s34, 0
      %p218 = por %p216, %p217
      %s220 = sadd.s32 %s219, 1
      %p223 = scmp.eq.s32.totalorder %s28, 1
      %p224 = scmp.ne.s32.totalorder %s219, %s221
      %p225 = scmp.eq.s32.totalorder %s28, 0
      %p226 = por %p224, %p225
      %p227 = scmp.ne.s32.totalorder %s219, %s221
      %p228 = scmp.eq.s32.totalorder %s33, 1
      %p229 = por %p227, %p228
      %p230 = scmp.ne.s32.totalorder %s221, %s222
      %p231 = scmp.eq.s32.totalorder %s33, 0
      %p232 = por %p230, %p231
      %p233 = scmp.ne.s32.totalorder %s221, %s222
      %p234 = scmp.eq.s32.totalorder %s34, 1
      %p235 = por %p233, %p234
      %p237 = scmp.ne.s32.totalorder %s222, %s236
      %p238 = scmp.eq.s32.totalorder %s34, 0
      %p239 = por %p237, %p238
      %s240 = ssub.s32 %s35, %s47
      %s241 = ssub.s32 %s36, %s43
      %s242 = sor.u32 %s240, %s241
      %p243 = scmp.eq.s32.totalorder %s242, 0
      %s245 = sadd.s32 %s244, 1
      %s246 = scalar_select %p243, %s244, %s245
      %p249 = pneg %p243
      %p250 = scmp.eq.s32.totalorder %s28, 1
      %p251 = por %p249, %p250
      %p252 = scmp.ne.s32.totalorder %s244, %s247
      %p253 = scmp.eq.s32.totalorder %s28, 0
      %p254 = por %p252, %p253
      %p255 = scmp.ne.s32.totalorder %s244, %s247
      %p256 = scmp.eq.s32.totalorder %s33, 1
      %p257 = por %p255, %p256
      %p258 = scmp.ne.s32.totalorder %s247, %s248
      %p259 = scmp.eq.s32.totalorder %s33, 0
      %p260 = por %p258, %p259
      %p261 = scmp.ne.s32.totalorder %s247, %s248
      %p262 = scmp.eq.s32.totalorder %s34, 1
      %p263 = por %p261, %p262
      %p265 = scmp.ne.s32.totalorder %s248, %s264
      %p266 = scmp.eq.s32.totalorder %s34, 0
      %p267 = por %p265, %p266
      %p268 = scmp.le.s32.totalorder 1, %s28
      %p269 = scmp.lt.s32.totalorder %s28, 3
      %p270 = pnand %p268, %p269
      %p271 = pneg %p270
      // Predicated region
      $region9: #{encoder_llata_forward.4} parent=5 // pred_check
        _
      $region10: #{encoder_llata_forward.4} parent=5 // pred_check_branch
        %273 = sbr.rel (%p270) target = $region12
      $region11: #{encoder_llata_forward.4} parent=5 // pred_region
        %s274 = ssub.s32 %s28, 1
        // Predicated region
        $region13: #{encoder_llata_forward.4} parent=11 // pred_check
          %p275 = pneg %p169
        $region14: #{encoder_llata_forward.4} parent=11 // pred_check_branch
          %277 = sbr.rel (%p275) target = $region16
        $region15: #{encoder_llata_forward.4} parent=11 // pred_region
          %s279 = ssub.s32 256, 256
          %280 = vsyncadd [#allocation10], %s279
          %s281 = sshll.u32 [#allocation11], 4
          %s282 = int_to_ptr.vmem [resolvable:$true] %s281
          %287 = dma.hbm_to_vmem [thread:$0]  %s4, 256, %s282, [#allocation10], 64, 64, 4
        $region16: #{encoder_llata_forward.4} parent=11 // pred_fallthru
          _
        // Predicated region
        $region17: #{encoder_llata_forward.4} parent=11 // pred_check
          %p288 = pneg %p190
        $region18: #{encoder_llata_forward.4} parent=11 // pred_check_branch
          %290 = sbr.rel (%p288) target = $region20
        $region19: #{encoder_llata_forward.4} parent=11 // pred_region
          %s292 = ssub.s32 16, 16
          %293 = vsyncadd [#allocation13], %s292
          %s295 = sshll.u32 [#allocation12], 4
          %s296 = int_to_ptr.vmem [resolvable:$true] %s295
          %298 = dma.hbm_to_vmem [thread:$0]  %s5, 16, %s296, [#allocation13]
        $region20: #{encoder_llata_forward.4} parent=11 // pred_fallthru
          _
        // Predicated region
        $region21: #{encoder_llata_forward.4} parent=11 // pred_check
          %p299 = pneg %p211
        $region22: #{encoder_llata_forward.4} parent=11 // pred_check_branch
          %301 = sbr.rel (%p299) target = $region24
        $region23: #{encoder_llata_forward.4} parent=11 // pred_region
          %s303 = ssub.s32 16, 16
          %304 = vsyncadd [#allocation13], %s303
          %s306 = sshll.u32 [#allocation14], 4
          %s307 = int_to_ptr.vmem [resolvable:$true] %s306
          %309 = dma.hbm_to_vmem [thread:$0]  %s6, 16, %s307, [#allocation13]
        $region24: #{encoder_llata_forward.4} parent=11 // pred_fallthru
          _
        // Predicated region
        $region25: #{encoder_llata_forward.4} parent=11 // pred_check
          %p310 = pneg %p232
        $region26: #{encoder_llata_forward.4} parent=11 // pred_check_branch
          %312 = sbr.rel (%p310) target = $region28
        $region27: #{encoder_llata_forward.4} parent=11 // pred_region
          %s314 = ssub.s32 16, 16
          %315 = vsyncadd [#allocation16], %s314
          %s317 = sshll.u32 [#allocation15], 4
          %s318 = int_to_ptr.vmem [resolvable:$true] %s317
          %320 = dma.hbm_to_vmem [thread:$0]  %s7, 16, %s318, [#allocation16]
        $region28: #{encoder_llata_forward.4} parent=11 // pred_fallthru
          _
      $region12: #{encoder_llata_forward.4} parent=5 // pred_fallthru
        _
      %p321 = scmp.lt.s32.totalorder %s28, 2
      // Predicated region
      $region29: #{encoder_llata_forward.4} parent=5 // pred_check
        %p322 = pneg %p321
      $region30: #{encoder_llata_forward.4} parent=5 // pred_check_branch
        %324 = sbr.rel (%p322) target = $region32
      $region31: #{encoder_llata_forward.4} parent=5 // pred_region
        // Predicated region
        $region33: #{encoder_llata_forward.4} parent=31 // pred_check
          %p325 = pneg %p62
        $region34: #{encoder_llata_forward.4} parent=31 // pred_check_branch
          %327 = sbr.rel (%p325) target = $region36
        $region35: #{encoder_llata_forward.4} parent=31 // pred_region
          %s328 = sand.u32 %s52, 1
          %s329 = scalar_lea.sflag [#allocation4], %s328
          %s330 = sand.u32 %s52, 1
          %s331 = smul.addr %s330, 16
          %s332 = scalar_lea.vmem [#allocation3], %s331
          %s334 = ssub.s32 256, 256
          %335 = vsyncadd %s329, %s334
          %s336 = smul.addr %s35, 4
          %s337 = sadd.s32 %s36, %s336
          %s338 = smul.addr %s337, 64
          %s339 = scalar_lea.hbm %s0, %s338
          %s340 = sshll.u32 %s332, 4
          %s341 = int_to_ptr.vmem [resolvable:$true] %s340
          %346 = dma.hbm_to_vmem [thread:$0]  %s339, 256, %s341, %s329, 64, 64, 4
        $region36: #{encoder_llata_forward.4} parent=31 // pred_fallthru
          _
        // Predicated region
        $region37: #{encoder_llata_forward.4} parent=31 // pred_check
          %p347 = pneg %p88
        $region38: #{encoder_llata_forward.4} parent=31 // pred_check_branch
          %349 = sbr.rel (%p347) target = $region40
        $region39: #{encoder_llata_forward.4} parent=31 // pred_region
          %s350 = sand.u32 %s28, 1
          %s351 = scalar_lea.sflag [#allocation7], %s350
          %s352 = sand.u32 %s78, 1
          %s353 = smul.addr %s352, 16
          %s354 = scalar_lea.vmem [#allocation6], %s353
          %s356 = ssub.s32 256, 256
          %357 = vsyncadd %s351, %s356
          %s358 = smul.addr %s35, 4
          %s359 = smul.addr %s358, 64
          %s360 = scalar_lea.hbm %s1, %s359
          %s361 = sshll.u32 %s354, 4
          %s362 = int_to_ptr.vmem [resolvable:$true] %s361
          %367 = dma.hbm_to_vmem [thread:$0]  %s360, 256, %s362, %s351, 64, 64, 4
        $region40: #{encoder_llata_forward.4} parent=31 // pred_fallthru
          _
        // Predicated region
        $region41: #{encoder_llata_forward.4} parent=31 // pred_check
          %p368 = pneg %p114
        $region42: #{encoder_llata_forward.4} parent=31 // pred_check_branch
          %370 = sbr.rel (%p368) target = $region44
        $region43: #{encoder_llata_forward.4} parent=31 // pred_region
          %s371 = sand.u32 %s28, 1
          %s372 = scalar_lea.sflag [#allocation7], %s371
          %s373 = sand.u32 %s104, 1
          %s374 = smul.addr %s373, 16
          %s375 = scalar_lea.vmem [#allocation8], %s374
          %s377 = ssub.s32 256, 256
          %378 = vsyncadd %s372, %s377
          %s379 = smul.addr %s35, 4
          %s380 = smul.addr %s379, 64
          %s381 = scalar_lea.hbm %s2, %s380
          %s382 = sshll.u32 %s375, 4
          %s383 = int_to_ptr.vmem [resolvable:$true] %s382
          %388 = dma.hbm_to_vmem [thread:$0]  %s381, 256, %s383, %s372, 64, 64, 4
        $region44: #{encoder_llata_forward.4} parent=31 // pred_fallthru
          _
        // Predicated region
        $region45: #{encoder_llata_forward.4} parent=31 // pred_check
          %p389 = pneg %p142
        $region46: #{encoder_llata_forward.4} parent=31 // pred_check_branch
          %391 = sbr.rel (%p389) target = $region48
        $region47: #{encoder_llata_forward.4} parent=31 // pred_region
          %s392 = sand.u32 %s28, 1
          %s393 = scalar_lea.sflag [#allocation10], %s392
          %s394 = sand.u32 %s132, 1
          %s395 = smul.addr %s394, 4
          %s396 = scalar_lea.vmem [#allocation9], %s395
          %s398 = ssub.s32 64, 64
          %399 = vsyncadd %s393, %s398
          %s400 = sadd.s32 %s36, %s35
          %s401 = smul.addr %s400, 64
          %s402 = scalar_lea.hbm %s3, %s401
          %s404 = sshll.u32 %s396, 4
          %s405 = int_to_ptr.vmem [resolvable:$true] %s404
          %407 = dma.hbm_to_vmem [thread:$0]  %s402, 64, %s405, %s393
        $region48: #{encoder_llata_forward.4} parent=31 // pred_fallthru
          _
      $region32: #{encoder_llata_forward.4} parent=5 // pred_fallthru
        _
      %p408 = scmp.le.s32.totalorder 1, %s28
      %p409 = scmp.lt.s32.totalorder %s28, 3
      %p410 = pnand %p408, %p409
      %p411 = pneg %p410
      // Predicated region
      $region49: #{encoder_llata_forward.4} parent=5 // pred_check
        _
      $region50: #{encoder_llata_forward.4} parent=5 // pred_check_branch
        %413 = sbr.rel (%p410) target = $region52
      $region51: #{encoder_llata_forward.4} parent=5 // pred_region
        %s414 = ssub.s32 %s28, 1
        %s415 = sand.u32 %s55, 1
        %s416 = scalar_lea.sflag [#allocation4], %s415
        %s417 = sand.u32 %s55, 1
        %s418 = smul.addr %s417, 16
        %s419 = scalar_lea.vmem [#allocation3], %s418
        // Predicated region
        $region53: #{encoder_llata_forward.4} parent=51 // pred_check
          %p420 = pneg %p68
        $region54: #{encoder_llata_forward.4} parent=51 // pred_check_branch
          %422 = sbr.rel (%p420) target = $region56
        $region55: #{encoder_llata_forward.4} parent=51 // pred_region
          %423 = dma.done %s416, 256
        $region56: #{encoder_llata_forward.4} parent=51 // pred_fallthru
          _
        %s424 = sand.u32 %s33, 1
        %s425 = scalar_lea.sflag [#allocation7], %s424
        %s426 = sand.u32 %s81, 1
        %s427 = smul.addr %s426, 16
        %s428 = scalar_lea.vmem [#allocation6], %s427
        // Predicated region
        $region57: #{encoder_llata_forward.4} parent=51 // pred_check
          %p429 = pneg %p94
        $region58: #{encoder_llata_forward.4} parent=51 // pred_check_branch
          %431 = sbr.rel (%p429) target = $region60
        $region59: #{encoder_llata_forward.4} parent=51 // pred_region
          %432 = dma.done %s425, 256
        $region60: #{encoder_llata_forward.4} parent=51 // pred_fallthru
          _
        %s433 = sand.u32 %s33, 1
        %s434 = scalar_lea.sflag [#allocation7], %s433
        %s435 = sand.u32 %s107, 1
        %s436 = smul.addr %s435, 16
        %s437 = scalar_lea.vmem [#allocation8], %s436
        // Predicated region
        $region61: #{encoder_llata_forward.4} parent=51 // pred_check
          %p438 = pneg %p120
        $region62: #{encoder_llata_forward.4} parent=51 // pred_check_branch
          %440 = sbr.rel (%p438) target = $region64
        $region63: #{encoder_llata_forward.4} parent=51 // pred_region
          %441 = dma.done %s434, 256
        $region64: #{encoder_llata_forward.4} parent=51 // pred_fallthru
          _
        %s442 = sand.u32 %s33, 1
        %s443 = scalar_lea.sflag [#allocation10], %s442
        %s444 = sand.u32 %s135, 1
        %s445 = smul.addr %s444, 4
        %s446 = scalar_lea.vmem [#allocation9], %s445
        // Predicated region
        $region65: #{encoder_llata_forward.4} parent=51 // pred_check
          %p447 = pneg %p148
        $region66: #{encoder_llata_forward.4} parent=51 // pred_check_branch
          %449 = sbr.rel (%p447) target = $region68
        $region67: #{encoder_llata_forward.4} parent=51 // pred_region
          %450 = dma.done %s443, 64
        $region68: #{encoder_llata_forward.4} parent=51 // pred_fallthru
          _
        // Predicated region
        $region69: #{encoder_llata_forward.4} parent=51 // pred_check
          %p451 = pneg %p169
        $region70: #{encoder_llata_forward.4} parent=51 // pred_check_branch
          %453 = sbr.rel (%p451) target = $region72
        $region71: #{encoder_llata_forward.4} parent=51 // pred_region
          %454 = dma.done [#allocation10], 256
        $region72: #{encoder_llata_forward.4} parent=51 // pred_fallthru
          _
        // Predicated region
        $region73: #{encoder_llata_forward.4} parent=51 // pred_check
          %p455 = pneg %p190
        $region74: #{encoder_llata_forward.4} parent=51 // pred_check_branch
          %457 = sbr.rel (%p455) target = $region76
        $region75: #{encoder_llata_forward.4} parent=51 // pred_region
          %458 = dma.done [#allocation13], 16
        $region76: #{encoder_llata_forward.4} parent=51 // pred_fallthru
          _
        // Predicated region
        $region77: #{encoder_llata_forward.4} parent=51 // pred_check
          %p459 = pneg %p211
        $region78: #{encoder_llata_forward.4} parent=51 // pred_check_branch
          %461 = sbr.rel (%p459) target = $region80
        $region79: #{encoder_llata_forward.4} parent=51 // pred_region
          %462 = dma.done [#allocation13], 16
        $region80: #{encoder_llata_forward.4} parent=51 // pred_fallthru
          _
        // Predicated region
        $region81: #{encoder_llata_forward.4} parent=51 // pred_check
          %p463 = pneg %p232
        $region82: #{encoder_llata_forward.4} parent=51 // pred_check_branch
          %465 = sbr.rel (%p463) target = $region84
        $region83: #{encoder_llata_forward.4} parent=51 // pred_region
          %466 = dma.done [#allocation16], 16
        $region84: #{encoder_llata_forward.4} parent=51 // pred_fallthru
          _
        %s467 = sand.u32 %s55, 1
        %s468 = scalar_lea.sflag [#allocation4], %s467
        %s469 = sand.u32 %s55, 1
        %s470 = smul.addr %s469, 16
        %s471 = scalar_lea.vmem [#allocation3], %s470
        %p472 = pneg %p68
        %p473 = pneg %p65
        %s474 = sand.u32 %s33, 1
        %s475 = scalar_lea.sflag [#allocation7], %s474
        %s476 = sand.u32 %s81, 1
        %s477 = smul.addr %s476, 16
        %s478 = scalar_lea.vmem [#allocation6], %s477
        %p479 = pneg %p94
        %p480 = pneg %p91
        %s481 = sand.u32 %s33, 1
        %s482 = scalar_lea.sflag [#allocation7], %s481
        %s483 = sand.u32 %s107, 1
        %s484 = smul.addr %s483, 16
        %s485 = scalar_lea.vmem [#allocation8], %s484
        %p486 = pneg %p120
        %p487 = pneg %p117
        %s488 = sand.u32 %s33, 1
        %s489 = scalar_lea.sflag [#allocation10], %s488
        %s490 = sand.u32 %s135, 1
        %s491 = smul.addr %s490, 4
        %s492 = scalar_lea.vmem [#allocation9], %s491
        %p493 = pneg %p148
        %p494 = pneg %p145
        %p495 = pneg %p169
        %p496 = pneg %p166
        %p497 = pneg %p190
        %p498 = pneg %p187
        %p499 = pneg %p211
        %p500 = pneg %p208
        %p501 = pneg %p232
        %p502 = pneg %p229
        %p503 = pneg %p260
        %p504 = pneg %p257
        %s505 = sand.u32 %s247, 1
        %s506 = scalar_lea.sflag [#allocation5], %s505
        %s507 = sand.u32 %s247, 1
        %s508 = smul.addr %s507, 4
        %s509 = scalar_lea.vmem [#allocation17], %s508
        %v511 = vld [vmem:[%s419] sm:$0xf]
        %v512 = vld [vmem:[%s419 + $0x4] sm:$0xf]
        %v513 = vld [vmem:[%s419 + $0x8] sm:$0xf]
        %v514 = vld [vmem:[%s419 + $0xc] sm:$0xf]
        %v515 = vld [vmem:[%s428] sm:$0xf]
        %v516 = vld [vmem:[%s428 + $0x4] sm:$0xf]
        %v517 = vld [vmem:[%s428 + $0x8] sm:$0xf]
        %v518 = vld [vmem:[%s428 + $0xc] sm:$0xf]
        %v519 = vld [vmem:[%s437] sm:$0xf]
        %v520 = vld [vmem:[%s437 + $0x4] sm:$0xf]
        %v521 = vld [vmem:[%s437 + $0x8] sm:$0xf]
        %v522 = vld [vmem:[%s437 + $0xc] sm:$0xf]
        %vm523 = vcmask 64512
        %v525 = vsel %vm523, %v511, 0
        %v528 = vsel %vm523, %v515, 0
        %530 = vmatprep.subr.bf16.mxu0 0
        %531 = vmatpush1.bf16.xpose.msra.mxu0 %v528
        %532 = vmatprep.subr.bf16.mxu0 0
        %533 = vmatpush1.bf16.xpose.msra.mxu0 0
        %534 = vmatprep.subr.bf16.mxu0 0
        %535 = vmatpush1.bf16.xpose.msra.mxu0 0
        %536 = vmatprep.subr.bf16.mxu0 0
        %537 = vmatpush1.bf16.xpose.msra.mxu0 0
        %538 = vmatprep.subr.bf16.mxu0 0
        %539 = vmatpush1.bf16.xpose.msra.mxu0 0
        %540 = vmatprep.subr.bf16.mxu0 0
        %541 = vmatpush1.bf16.xpose.msra.mxu0 0
        %542 = vmatprep.subr.bf16.mxu0 0
        %543 = vmatpush1.bf16.xpose.msra.mxu0 0
        %544 = vmatprep.subr.bf16.mxu0 0
        %545 = vmatpush1.bf16.xpose.msra.mxu0 0
        %546 = vmatprep.subr.bf16.mxu0 0
        %547 = vmatpush1.bf16.xpose.msra.mxu0 0
        %548 = vmatprep.subr.bf16.mxu0 0
        %549 = vmatpush1.bf16.xpose.msra.mxu0 0
        %550 = vmatprep.subr.bf16.mxu0 0
        %551 = vmatpush1.bf16.xpose.msra.mxu0 0
        %552 = vmatprep.subr.bf16.mxu0 0
        %553 = vmatpush1.bf16.xpose.msra.mxu0 0
        %554 = vmatprep.subr.bf16.mxu0 0
        %555 = vmatpush1.bf16.xpose.msra.mxu0 0
        %556 = vmatprep.subr.bf16.mxu0 0
        %557 = vmatpush1.bf16.xpose.msra.mxu0 0
        %558 = vmatprep.subr.bf16.mxu0 0
        %559 = vmatpush1.bf16.xpose.msra.mxu0 0
        %560 = vmatprep.subr.bf16.mxu0 0
        %561 = vmatpush1.bf16.xpose.msra.mxu0 0
        %562 = vmatprep.mubr.bf16.mxu0 0
        %563 = vmatmul.mubr.bf16.gmra.mrb[0].mxu0 %v525
        %v564 = vpop.f32.mrb[0].mxu0
        %v565 = vadd.f32 0.0, %v564
        %v566 = vpop.f32.mrb[0].mxu0
        %v567 = vpop.f32.mrb[0].mxu0
        %v568 = vpop.f32.mrb[0].mxu0
        %569 = vdwg.mxu0
        %v571 = vsel %vm523, %v512, 0
        %v574 = vsel %vm523, %v516, 0
        %576 = vmatprep.subr.bf16.mxu0 0
        %577 = vmatpush1.bf16.xpose.msra.mxu0 %v574
        %578 = vmatprep.subr.bf16.mxu0 0
        %579 = vmatpush1.bf16.xpose.msra.mxu0 0
        %580 = vmatprep.subr.bf16.mxu0 0
        %581 = vmatpush1.bf16.xpose.msra.mxu0 0
        %582 = vmatprep.subr.bf16.mxu0 0
        %583 = vmatpush1.bf16.xpose.msra.mxu0 0
        %584 = vmatprep.subr.bf16.mxu0 0
        %585 = vmatpush1.bf16.xpose.msra.mxu0 0
        %586 = vmatprep.subr.bf16.mxu0 0
        %587 = vmatpush1.bf16.xpose.msra.mxu0 0
        %588 = vmatprep.subr.bf16.mxu0 0
        %589 = vmatpush1.bf16.xpose.msra.mxu0 0
        %590 = vmatprep.subr.bf16.mxu0 0
        %591 = vmatpush1.bf16.xpose.msra.mxu0 0
        %592 = vmatprep.subr.bf16.mxu0 0
        %593 = vmatpush1.bf16.xpose.msra.mxu0 0
        %594 = vmatprep.subr.bf16.mxu0 0
        %595 = vmatpush1.bf16.xpose.msra.mxu0 0
        %596 = vmatprep.subr.bf16.mxu0 0
        %597 = vmatpush1.bf16.xpose.msra.mxu0 0
        %598 = vmatprep.subr.bf16.mxu0 0
        %599 = vmatpush1.bf16.xpose.msra.mxu0 0
        %600 = vmatprep.subr.bf16.mxu0 0
        %601 = vmatpush1.bf16.xpose.msra.mxu0 0
        %602 = vmatprep.subr.bf16.mxu0 0
        %603 = vmatpush1.bf16.xpose.msra.mxu0 0
        %604 = vmatprep.subr.bf16.mxu0 0
        %605 = vmatpush1.bf16.xpose.msra.mxu0 0
        %606 = vmatprep.subr.bf16.mxu0 0
        %607 = vmatpush1.bf16.xpose.msra.mxu0 0
        %608 = vmatprep.mubr.bf16.mxu0 0
        %609 = vmatmul.mubr.bf16.gmra.mrb[0].mxu0 %v571
        %v610 = vpop.f32.mrb[0].mxu0
        %v611 = vadd.f32 0.0, %v610
        %v612 = vpop.f32.mrb[0].mxu0
        %v613 = vpop.f32.mrb[0].mxu0
        %v614 = vpop.f32.mrb[0].mxu0
        %615 = vdwg.mxu0
        %v617 = vsel %vm523, %v513, 0
        %v620 = vsel %vm523, %v517, 0
        %622 = vmatprep.subr.bf16.mxu0 0
        %623 = vmatpush1.bf16.xpose.msra.mxu0 %v620
        %624 = vmatprep.subr.bf16.mxu0 0
        %625 = vmatpush1.bf16.xpose.msra.mxu0 0
        %626 = vmatprep.subr.bf16.mxu0 0
        %627 = vmatpush1.bf16.xpose.msra.mxu0 0
        %628 = vmatprep.subr.bf16.mxu0 0
        %629 = vmatpush1.bf16.xpose.msra.mxu0 0
        %630 = vmatprep.subr.bf16.mxu0 0
        %631 = vmatpush1.bf16.xpose.msra.mxu0 0
        %632 = vmatprep.subr.bf16.mxu0 0
        %633 = vmatpush1.bf16.xpose.msra.mxu0 0
        %634 = vmatprep.subr.bf16.mxu0 0
        %635 = vmatpush1.bf16.xpose.msra.mxu0 0
        %636 = vmatprep.subr.bf16.mxu0 0
        %637 = vmatpush1.bf16.xpose.msra.mxu0 0
        %638 = vmatprep.subr.bf16.mxu0 0
        %639 = vmatpush1.bf16.xpose.msra.mxu0 0
        %640 = vmatprep.subr.bf16.mxu0 0
        %641 = vmatpush1.bf16.xpose.msra.mxu0 0
        %642 = vmatprep.subr.bf16.mxu0 0
        %643 = vmatpush1.bf16.xpose.msra.mxu0 0
        %644 = vmatprep.subr.bf16.mxu0 0
        %645 = vmatpush1.bf16.xpose.msra.mxu0 0
        %646 = vmatprep.subr.bf16.mxu0 0
        %647 = vmatpush1.bf16.xpose.msra.mxu0 0
        %648 = vmatprep.subr.bf16.mxu0 0
        %649 = vmatpush1.bf16.xpose.msra.mxu0 0
        %650 = vmatprep.subr.bf16.mxu0 0
        %651 = vmatpush1.bf16.xpose.msra.mxu0 0
        %652 = vmatprep.subr.bf16.mxu0 0
        %653 = vmatpush1.bf16.xpose.msra.mxu0 0
        %654 = vmatprep.mubr.bf16.mxu0 0
        %655 = vmatmul.mubr.bf16.gmra.mrb[0].mxu0 %v617
        %v656 = vpop.f32.mrb[0].mxu0
        %v657 = vadd.f32 0.0, %v656
        %v658 = vpop.f32.mrb[0].mxu0
        %v659 = vpop.f32.mrb[0].mxu0
        %v660 = vpop.f32.mrb[0].mxu0
        %661 = vdwg.mxu0
        %v663 = vsel %vm523, %v514, 0
        %v666 = vsel %vm523, %v518, 0
        %668 = vmatprep.subr.bf16.mxu0 0
        %669 = vmatpush1.bf16.xpose.msra.mxu0 %v666
        %670 = vmatprep.subr.bf16.mxu0 0
        %671 = vmatpush1.bf16.xpose.msra.mxu0 0
        %672 = vmatprep.subr.bf16.mxu0 0
        %673 = vmatpush1.bf16.xpose.msra.mxu0 0
        %674 = vmatprep.subr.bf16.mxu0 0
        %675 = vmatpush1.bf16.xpose.msra.mxu0 0
        %676 = vmatprep.subr.bf16.mxu0 0
        %677 = vmatpush1.bf16.xpose.msra.mxu0 0
        %678 = vmatprep.subr.bf16.mxu0 0
        %679 = vmatpush1.bf16.xpose.msra.mxu0 0
        %680 = vmatprep.subr.bf16.mxu0 0
        %681 = vmatpush1.bf16.xpose.msra.mxu0 0
        %682 = vmatprep.subr.bf16.mxu0 0
        %683 = vmatpush1.bf16.xpose.msra.mxu0 0
        %684 = vmatprep.subr.bf16.mxu0 0
        %685 = vmatpush1.bf16.xpose.msra.mxu0 0
        %686 = vmatprep.subr.bf16.mxu0 0
        %687 = vmatpush1.bf16.xpose.msra.mxu0 0
        %688 = vmatprep.subr.bf16.mxu0 0
        %689 = vmatpush1.bf16.xpose.msra.mxu0 0
        %690 = vmatprep.subr.bf16.mxu0 0
        %691 = vmatpush1.bf16.xpose.msra.mxu0 0
        %692 = vmatprep.subr.bf16.mxu0 0
        %693 = vmatpush1.bf16.xpose.msra.mxu0 0
        %694 = vmatprep.subr.bf16.mxu0 0
        %695 = vmatpush1.bf16.xpose.msra.mxu0 0
        %696 = vmatprep.subr.bf16.mxu0 0
        %697 = vmatpush1.bf16.xpose.msra.mxu0 0
        %698 = vmatprep.subr.bf16.mxu0 0
        %699 = vmatpush1.bf16.xpose.msra.mxu0 0
        %700 = vmatprep.mubr.bf16.mxu0 0
        %701 = vmatmul.mubr.bf16.gmra.mrb[0].mxu0 %v663
        %v702 = vpop.f32.mrb[0].mxu0
        %v703 = vadd.f32 0.0, %v702
        %v704 = vpop.f32.mrb[0].mxu0
        %v705 = vpop.f32.mrb[0].mxu0
        %v706 = vpop.f32.mrb[0].mxu0
        %707 = vdwg.mxu0
        %v708 = vsel %vm523, %v565, -inf
        %709 = vmax.xlane.f32.xlu0 %v708
        %v710 = vpop.xlane.xlu0 %709
        %v711 = vsel %vm523, %v611, -inf
        %712 = vmax.xlane.f32.xlu0 %v711
        %v713 = vpop.xlane.xlu0 %712
        %v714 = vsel %vm523, %v657, -inf
        %715 = vmax.xlane.f32.xlu0 %v714
        %v716 = vpop.xlane.xlu0 %715
        %v717 = vsel %vm523, %v703, -inf
        %718 = vmax.xlane.f32.xlu0 %v717
        %v719 = vpop.xlane.xlu0 %718
        %v720 = vsub.f32 %v565, %v710
        %v721 = vsub.f32 %v611, %v713
        %v722 = vsub.f32 %v657, %v716
        %v723 = vsub.f32 %v703, %v719
        %v724 = vmul.f32 %v720, 1.442695
        %v725 = vpow.pop %v724
        %v726 = vmul.f32 %v721, 1.442695
        %v727 = vpow.pop %v726
        %v728 = vmul.f32 %v722, 1.442695
        %v729 = vpow.pop %v728
        %v730 = vmul.f32 %v723, 1.442695
        %v731 = vpow.pop %v730
        %v732 = vsel %vm523, %v725, 0.0
        %733 = vadd.xlane.f32.xlu0 %v732
        %v734 = vpop.xlane.xlu0 %733
        %v735 = vsel %vm523, %v727, 0.0
        %736 = vadd.xlane.f32.xlu0 %v735
        %v737 = vpop.xlane.xlu0 %736
        %v738 = vsel %vm523, %v729, 0.0
        %739 = vadd.xlane.f32.xlu0 %v738
        %v740 = vpop.xlane.xlu0 %739
        %v741 = vsel %vm523, %v731, 0.0
        %742 = vadd.xlane.f32.xlu0 %v741
        %v743 = vpop.xlane.xlu0 %742
        %v744 = vrcp.pop %v734
        %v745 = vrcp.pop %v737
        %v746 = vrcp.pop %v740
        %v747 = vrcp.pop %v743
        %v748 = vmul.f32 %v725, %v744
        %v749 = vmul.f32 %v727, %v745
        %v750 = vmul.f32 %v729, %v746
        %v751 = vmul.f32 %v731, %v747
        %v752 = vpack.c.bf16 %v748, %v748
        %v753 = vpack.c.bf16 %v749, %v749
        %v754 = vpack.c.bf16 %v750, %v750
        %v755 = vpack.c.bf16 %v751, %v751
        %v757 = vsel %vm523, %v752, 0
        %vm759 = vcmask 1043456
        %v761 = vsel %vm759, %v519, 0
        %763 = vmatprep.subr.bf16.mxu0 0
        %764 = vmatpush1.bf16.msra.mxu0 %v761
        %765 = vmatprep.subr.bf16.mxu0 0
        %766 = vmatpush1.bf16.msra.mxu0 0
        %767 = vmatprep.subr.bf16.mxu0 0
        %768 = vmatpush1.bf16.msra.mxu0 0
        %769 = vmatprep.subr.bf16.mxu0 0
        %770 = vmatpush1.bf16.msra.mxu0 0
        %771 = vmatprep.subr.bf16.mxu0 0
        %772 = vmatpush1.bf16.msra.mxu0 0
        %773 = vmatprep.subr.bf16.mxu0 0
        %774 = vmatpush1.bf16.msra.mxu0 0
        %775 = vmatprep.subr.bf16.mxu0 0
        %776 = vmatpush1.bf16.msra.mxu0 0
        %777 = vmatprep.subr.bf16.mxu0 0
        %778 = vmatpush1.bf16.msra.mxu0 0
        %779 = vmatprep.subr.bf16.mxu0 0
        %780 = vmatpush1.bf16.msra.mxu0 0
        %781 = vmatprep.subr.bf16.mxu0 0
        %782 = vmatpush1.bf16.msra.mxu0 0
        %783 = vmatprep.subr.bf16.mxu0 0
        %784 = vmatpush1.bf16.msra.mxu0 0
        %785 = vmatprep.subr.bf16.mxu0 0
        %786 = vmatpush1.bf16.msra.mxu0 0
        %787 = vmatprep.subr.bf16.mxu0 0
        %788 = vmatpush1.bf16.msra.mxu0 0
        %789 = vmatprep.subr.bf16.mxu0 0
        %790 = vmatpush1.bf16.msra.mxu0 0
        %791 = vmatprep.subr.bf16.mxu0 0
        %792 = vmatpush1.bf16.msra.mxu0 0
        %793 = vmatprep.subr.bf16.mxu0 0
        %794 = vmatpush1.bf16.msra.mxu0 0
        %795 = vmatprep.mubr.bf16.mxu0 0
        %796 = vmatmul.mubr.bf16.gmra.mrb[0].mxu0 %v757
        %v797 = vpop.f32.mrb[0].mxu0
        %v798 = vadd.f32 0.0, %v797
        %v799 = vpop.f32.mrb[0].mxu0
        %v800 = vpop.f32.mrb[0].mxu0
        %v801 = vpop.f32.mrb[0].mxu0
        %802 = vdwg.mxu0
        %v804 = vsel %vm523, %v753, 0
        %v807 = vsel %vm759, %v520, 0
        %809 = vmatprep.subr.bf16.mxu0 0
        %810 = vmatpush1.bf16.msra.mxu0 %v807
        %811 = vmatprep.subr.bf16.mxu0 0
        %812 = vmatpush1.bf16.msra.mxu0 0
        %813 = vmatprep.subr.bf16.mxu0 0
        %814 = vmatpush1.bf16.msra.mxu0 0
        %815 = vmatprep.subr.bf16.mxu0 0
        %816 = vmatpush1.bf16.msra.mxu0 0
        %817 = vmatprep.subr.bf16.mxu0 0
        %818 = vmatpush1.bf16.msra.mxu0 0
        %819 = vmatprep.subr.bf16.mxu0 0
        %820 = vmatpush1.bf16.msra.mxu0 0
        %821 = vmatprep.subr.bf16.mxu0 0
        %822 = vmatpush1.bf16.msra.mxu0 0
        %823 = vmatprep.subr.bf16.mxu0 0
        %824 = vmatpush1.bf16.msra.mxu0 0
        %825 = vmatprep.subr.bf16.mxu0 0
        %826 = vmatpush1.bf16.msra.mxu0 0
        %827 = vmatprep.subr.bf16.mxu0 0
        %828 = vmatpush1.bf16.msra.mxu0 0
        %829 = vmatprep.subr.bf16.mxu0 0
        %830 = vmatpush1.bf16.msra.mxu0 0
        %831 = vmatprep.subr.bf16.mxu0 0
        %832 = vmatpush1.bf16.msra.mxu0 0
        %833 = vmatprep.subr.bf16.mxu0 0
        %834 = vmatpush1.bf16.msra.mxu0 0
        %835 = vmatprep.subr.bf16.mxu0 0
        %836 = vmatpush1.bf16.msra.mxu0 0
        %837 = vmatprep.subr.bf16.mxu0 0
        %838 = vmatpush1.bf16.msra.mxu0 0
        %839 = vmatprep.subr.bf16.mxu0 0
        %840 = vmatpush1.bf16.msra.mxu0 0
        %841 = vmatprep.mubr.bf16.mxu0 0
        %842 = vmatmul.mubr.bf16.gmra.mrb[0].mxu0 %v804
        %v843 = vpop.f32.mrb[0].mxu0
        %v844 = vadd.f32 0.0, %v843
        %v845 = vpop.f32.mrb[0].mxu0
        %v846 = vpop.f32.mrb[0].mxu0
        %v847 = vpop.f32.mrb[0].mxu0
        %848 = vdwg.mxu0
        %v850 = vsel %vm523, %v754, 0
        %v853 = vsel %vm759, %v521, 0
        %855 = vmatprep.subr.bf16.mxu0 0
        %856 = vmatpush1.bf16.msra.mxu0 %v853
        %857 = vmatprep.subr.bf16.mxu0 0
        %858 = vmatpush1.bf16.msra.mxu0 0
        %859 = vmatprep.subr.bf16.mxu0 0
        %860 = vmatpush1.bf16.msra.mxu0 0
        %861 = vmatprep.subr.bf16.mxu0 0
        %862 = vmatpush1.bf16.msra.mxu0 0
        %863 = vmatprep.subr.bf16.mxu0 0
        %864 = vmatpush1.bf16.msra.mxu0 0
        %865 = vmatprep.subr.bf16.mxu0 0
        %866 = vmatpush1.bf16.msra.mxu0 0
        %867 = vmatprep.subr.bf16.mxu0 0
        %868 = vmatpush1.bf16.msra.mxu0 0
        %869 = vmatprep.subr.bf16.mxu0 0
        %870 = vmatpush1.bf16.msra.mxu0 0
        %871 = vmatprep.subr.bf16.mxu0 0
        %872 = vmatpush1.bf16.msra.mxu0 0
        %873 = vmatprep.subr.bf16.mxu0 0
        %874 = vmatpush1.bf16.msra.mxu0 0
        %875 = vmatprep.subr.bf16.mxu0 0
        %876 = vmatpush1.bf16.msra.mxu0 0
        %877 = vmatprep.subr.bf16.mxu0 0
        %878 = vmatpush1.bf16.msra.mxu0 0
        %879 = vmatprep.subr.bf16.mxu0 0
        %880 = vmatpush1.bf16.msra.mxu0 0
        %881 = vmatprep.subr.bf16.mxu0 0
        %882 = vmatpush1.bf16.msra.mxu0 0
        %883 = vmatprep.subr.bf16.mxu0 0
        %884 = vmatpush1.bf16.msra.mxu0 0
        %885 = vmatprep.subr.bf16.mxu0 0
        %886 = vmatpush1.bf16.msra.mxu0 0
        %887 = vmatprep.mubr.bf16.mxu0 0
        %888 = vmatmul.mubr.bf16.gmra.mrb[0].mxu0 %v850
        %v889 = vpop.f32.mrb[0].mxu0
        %v890 = vadd.f32 0.0, %v889
        %v891 = vpop.f32.mrb[0].mxu0
        %v892 = vpop.f32.mrb[0].mxu0
        %v893 = vpop.f32.mrb[0].mxu0
        %894 = vdwg.mxu0
        %v896 = vsel %vm523, %v755, 0
        %v899 = vsel %vm759, %v522, 0
        %901 = vmatprep.subr.bf16.mxu0 0
        %902 = vmatpush1.bf16.msra.mxu0 %v899
        %903 = vmatprep.subr.bf16.mxu0 0
        %904 = vmatpush1.bf16.msra.mxu0 0
        %905 = vmatprep.subr.bf16.mxu0 0
        %906 = vmatpush1.bf16.msra.mxu0 0
        %907 = vmatprep.subr.bf16.mxu0 0
        %908 = vmatpush1.bf16.msra.mxu0 0
        %909 = vmatprep.subr.bf16.mxu0 0
        %910 = vmatpush1.bf16.msra.mxu0 0
        %911 = vmatprep.subr.bf16.mxu0 0
        %912 = vmatpush1.bf16.msra.mxu0 0
        %913 = vmatprep.subr.bf16.mxu0 0
        %914 = vmatpush1.bf16.msra.mxu0 0
        %915 = vmatprep.subr.bf16.mxu0 0
        %916 = vmatpush1.bf16.msra.mxu0 0
        %917 = vmatprep.subr.bf16.mxu0 0
        %918 = vmatpush1.bf16.msra.mxu0 0
        %919 = vmatprep.subr.bf16.mxu0 0
        %920 = vmatpush1.bf16.msra.mxu0 0
        %921 = vmatprep.subr.bf16.mxu0 0
        %922 = vmatpush1.bf16.msra.mxu0 0
        %923 = vmatprep.subr.bf16.mxu0 0
        %924 = vmatpush1.bf16.msra.mxu0 0
        %925 = vmatprep.subr.bf16.mxu0 0
        %926 = vmatpush1.bf16.msra.mxu0 0
        %927 = vmatprep.subr.bf16.mxu0 0
        %928 = vmatpush1.bf16.msra.mxu0 0
        %929 = vmatprep.subr.bf16.mxu0 0
        %930 = vmatpush1.bf16.msra.mxu0 0
        %931 = vmatprep.subr.bf16.mxu0 0
        %932 = vmatpush1.bf16.msra.mxu0 0
        %933 = vmatprep.mubr.bf16.mxu0 0
        %934 = vmatmul.mubr.bf16.gmra.mrb[0].mxu0 %v896
        %v935 = vpop.f32.mrb[0].mxu0
        %v936 = vadd.f32 0.0, %v935
        %v937 = vpop.f32.mrb[0].mxu0
        %v938 = vpop.f32.mrb[0].mxu0
        %v939 = vpop.f32.mrb[0].mxu0
        %940 = vdwg.mxu0
        %941 = vst.msk [vmem:[#allocation2] sm:$0xff] %vm523, %v798
        %943 = vrot.lane.b32.xlu0 %v844, 8
        %v944 = vpop.permute.xlu0 %943
        %vm946 = vcmask 130112
        %947 = vst.msk [vmem:[#allocation2] sm:$0xff] %vm946, %v944
        %949 = vrot.lane.b32.xlu0 %v890, 16
        %v950 = vpop.permute.xlu0 %949
        %vm952 = vcmask 195712
        %953 = vst.msk [vmem:[#allocation2] sm:$0xff] %vm952, %v950
        %955 = vrot.lane.b32.xlu0 %v936, 24
        %v956 = vpop.permute.xlu0 %955
        %vm958 = vcmask 261312
        %959 = vst.msk [vmem:[#allocation2] sm:$0xff] %vm958, %v956
        %v960 = vld [vmem:[#allocation2] sm:$0xff]
        %v961 = vpack.c.bf16 %v960, %v960
        %v962 = vld [vmem:[#allocation11] sm:$0xf]
        %v963 = vld [vmem:[#allocation11 + $0x4] sm:$0xf]
        %v964 = vld [vmem:[#allocation11 + $0x8] sm:$0xf]
        %v965 = vld [vmem:[#allocation11 + $0xc] sm:$0xf]
        %v966 = vld [vmem:[#allocation12] sm:$0x1]
        %v968 = vlaneseq
        %v969 = vshrl.u32 %v968, 7
        %v970 = vsub.s32 0, %v969
        %v971 = vrot.slane %v966, %v970
        %v977 = vunpack.c.l.b16 %v962
        %v978 = vunpack.c.l.b16 %v963
        %v979 = vunpack.c.l.b16 %v964
        %v980 = vunpack.c.l.b16 %v965
        %v981 = vpack.c.b16 %v978, %v977
        %v982 = vpack.c.b16 %v980, %v979
        %vm985 = vcmask 261120
        %v987 = vsel %vm985, %v961, 0
        %989 = vmatprep.subr.bf16.mxu0 0
        %990 = vmatpush1.bf16.msra.mxu0 %v981
        %991 = vmatprep.subr.bf16.mxu0 0
        %992 = vmatpush1.bf16.msra.mxu0 %v982
        %993 = vmatprep.subr.bf16.mxu0 0
        %994 = vmatpush1.bf16.msra.mxu0 0
        %995 = vmatprep.subr.bf16.mxu0 0
        %996 = vmatpush1.bf16.msra.mxu0 0
        %997 = vmatprep.subr.bf16.mxu0 0
        %998 = vmatpush1.bf16.msra.mxu0 0
        %999 = vmatprep.subr.bf16.mxu0 0
        %1000 = vmatpush1.bf16.msra.mxu0 0
        %1001 = vmatprep.subr.bf16.mxu0 0
        %1002 = vmatpush1.bf16.msra.mxu0 0
        %1003 = vmatprep.subr.bf16.mxu0 0
        %1004 = vmatpush1.bf16.msra.mxu0 0
        %1005 = vmatprep.subr.bf16.mxu0 0
        %1006 = vmatpush1.bf16.msra.mxu0 0
        %1007 = vmatprep.subr.bf16.mxu0 0
        %1008 = vmatpush1.bf16.msra.mxu0 0
        %1009 = vmatprep.subr.bf16.mxu0 0
        %1010 = vmatpush1.bf16.msra.mxu0 0
        %1011 = vmatprep.subr.bf16.mxu0 0
        %1012 = vmatpush1.bf16.msra.mxu0 0
        %1013 = vmatprep.subr.bf16.mxu0 0
        %1014 = vmatpush1.bf16.msra.mxu0 0
        %1015 = vmatprep.subr.bf16.mxu0 0
        %1016 = vmatpush1.bf16.msra.mxu0 0
        %1017 = vmatprep.subr.bf16.mxu0 0
        %1018 = vmatpush1.bf16.msra.mxu0 0
        %1019 = vmatprep.subr.bf16.mxu0 0
        %1020 = vmatpush1.bf16.msra.mxu0 0
        %1021 = vmatprep.mubr.bf16.mxu0 0
        %1022 = vmatmul.mubr.bf16.gmra.mrb[0].mxu0 %v987
        %v1023 = vpop.f32.mrb[0].mxu0
        %v1024 = vadd.f32 %v971, %v1023
        %v1025 = vpop.f32.mrb[0].mxu0
        %v1026 = vpop.f32.mrb[0].mxu0
        %v1027 = vpop.f32.mrb[0].mxu0
        %1028 = vdwg.mxu0
        %v1029 = vld [vmem:[%s446] sm:$0xf]
        %v1030 = vunpack.c.l.bf16 %v1029
        %v1031 = vadd.f32 %v1030, %v1024
        %v1032 = vsel %vm985, %v1031, 0.0
        %1033 = vadd.xlane.f32.xlu0 %v1032
        %v1034 = vpop.xlane.xlu0 %1033
        %v1035 = vrcp.pop 32.0
        %v1036 = vmul.f32 %v1034, %v1035
        %v1037 = vsub.f32 %v1031, %v1036
        %v1038 = vmul.f32 %v1037, %v1037
        %v1039 = vsel %vm985, %v1038, 0.0
        %1040 = vadd.xlane.f32.xlu0 %v1039
        %v1041 = vpop.xlane.xlu0 %1040
        %v1042 = vmul.f32 %v1041, %v1035
        %v1043 = vadd.f32 %v1042, 1e-05
        %v1044 = vrsqrt.pop %v1043
        %v1045 = vmul.f32 %v1037, %v1044
        %v1046 = vld [vmem:[#allocation14] sm:$0x1]
        %v1048 = vlaneseq
        %v1049 = vshrl.u32 %v1048, 7
        %v1050 = vsub.s32 0, %v1049
        %v1051 = vrot.slane %v1046, %v1050
        %v1053 = vmul.f32 %v1045, %v1051
        %v1054 = vld [vmem:[#allocation15] sm:$0x1]
        %v1056 = vlaneseq
        %v1057 = vshrl.u32 %v1056, 7
        %v1058 = vsub.s32 0, %v1057
        %v1059 = vrot.slane %v1054, %v1058
        %v1061 = vadd.f32 %v1053, %v1059
        %v1062 = vpack.c.bf16 %v1061, %v1061
        %vm1063 = vcmask 257024
        %1064 = vst.msk [vmem:[%s509] sm:$0xf] %vm1063, %v1062
        %s1065 = sand.u32 %s247, 1
        %s1066 = scalar_lea.sflag [#allocation5], %s1065
        %s1067 = sand.u32 %s247, 1
        %s1068 = smul.addr %s1067, 4
        %s1069 = scalar_lea.vmem [#allocation17], %s1068
        // Predicated region
        $region85: #{encoder_llata_forward.4} parent=51 // pred_check
          %p1070 = pneg %p257
        $region86: #{encoder_llata_forward.4} parent=51 // pred_check_branch
          %1072 = sbr.rel (%p1070) target = $region88
        $region87: #{encoder_llata_forward.4} parent=51 // pred_region
          %s1074 = ssub.s32 64, 64
          %1075 = vsyncadd %s1066, %s1074
          %s1076 = sadd.s32 %s38, %s37
          %s1077 = smul.addr %s1076, 64
          %s1078 = scalar_lea.hbm %s8, %s1077
          %s1080 = sshll.u32 %s1069, 4
          %s1081 = int_to_ptr.vmem [resolvable:$true] %s1080
          %1083 = dma.vmem_to_hbm [thread:$0]  %s1081, 64, %s1078, %s1066
        $region88: #{encoder_llata_forward.4} parent=51 // pred_fallthru
          _
      $region52: #{encoder_llata_forward.4} parent=5 // pred_fallthru
        _
      %p1084 = scmp.le.s32.totalorder 2, %s28
      // Predicated region
      $region89: #{encoder_llata_forward.4} parent=5 // pred_check
        %p1085 = pneg %p1084
      $region90: #{encoder_llata_forward.4} parent=5 // pred_check_branch
        %1087 = sbr.rel (%p1085) target = $region92
      $region91: #{encoder_llata_forward.4} parent=5 // pred_region
        %s1088 = ssub.s32 %s28, 2
        // Predicated region
        $region93: #{encoder_llata_forward.4} parent=91 // pred_check
          %p1089 = pneg %p263
        $region94: #{encoder_llata_forward.4} parent=91 // pred_check_branch
          %1091 = sbr.rel (%p1089) target = $region96
        $region95: #{encoder_llata_forward.4} parent=91 // pred_region
          %s1092 = sand.u32 %s248, 1
          %s1093 = scalar_lea.sflag [#allocation5], %s1092
          %s1094 = sand.u32 %s248, 1
          %s1095 = smul.addr %s1094, 4
          %s1096 = scalar_lea.vmem [#allocation17], %s1095
          %1097 = dma.done %s1093, 64
        $region96: #{encoder_llata_forward.4} parent=91 // pred_fallthru
          _
      $region92: #{encoder_llata_forward.4} parent=5 // pred_fallthru
        _
    $region6: #{encoder_llata_forward.4} parent=1 // loop_footer
      %s32 = sadd.s32 1, %s28
    $region7: #{encoder_llata_forward.4} parent=1 // loop_footer_branch
      %27 = sbr.rel target = $region3
    $region8: #{encoder_llata_forward.4} parent=1 // loop_exit
      _
    %1098 = vsyncpa [#allocation4], 1
    %s1099 = scalar_lea.sflag [#allocation4], 1
    %1100 = vsyncpa %s1099, 1
    %1101 = vsyncpa [#allocation7], 1
    %s1102 = scalar_lea.sflag [#allocation7], 1
    %1103 = vsyncpa %s1102, 1
    %1104 = vsyncpa [#allocation10], 1
    %s1105 = scalar_lea.sflag [#allocation10], 1
    %1106 = vsyncpa %s1105, 1
    %1107 = vsyncpa [#allocation13], 1
    %1108 = vsyncpa [#allocation16], 1
    %1109 = vsyncpa [#allocation5], 1
    %s1110 = scalar_lea.sflag [#allocation5], 1
    %1111 = vsyncpa %s1110, 1

// kernel: encoder_llata_forward.5
$region0: #{encoder_llata_forward.5}
  #allocation0 [shape = 'u32[]', space=smem, size = 0x4, offset = 0x4, fixed_abs, tag = 'smem constant byte address 0x4 - core index']
  #allocation1 [shape = 'u32[144,128]{1,0:T(1,128)}', space=vmem, size = 0x12000, scoped, tag = 'internal scratch']
  #allocation2 [shape = 'f32[16,32]{1,0:T(8,128)}', space=vmem, size = 0x2000, scoped, tag = 'scratch operand']
  %s0 = inlined_call_operand.hbm [shape: bf16[16,32], index: 0, kind: input, shape index: {}]
  %s1 = inlined_call_operand.hbm [shape: bf16[32,2048], index: 1, kind: input, shape index: {}]
  %s2 = inlined_call_operand.hbm [shape: f32[1,2048], index: 2, kind: input, shape index: {}]
  %s3 = inlined_call_operand.hbm [shape: bf16[2048,32], index: 3, kind: input, shape index: {}]
  %s4 = inlined_call_operand.hbm [shape: f32[1,32], index: 4, kind: input, shape index: {}]
  %s5 = inlined_call_operand.hbm [shape: f32[1,32], index: 5, kind: input, shape index: {}]
  %s6 = inlined_call_operand.hbm [shape: f32[1,32], index: 6, kind: input, shape index: {}]
  %s7 = inlined_call_operand.hbm [shape: f32[16,32], index: 7, kind: output, shape index: {}]
  %s8 = sld [smem:[#allocation0]]
  $region97: #{encoder_llata_forward.5} parent=0
    _
  %s10 = ssub.s32 1, %s8
  %s11 = scalar_select 0, %s10, %s8
  $region1: #{encoder_llata_forward.5} parent=0
    #allocation3 [shape = 'u8[4096]{0}', space=vmem, size = 0x1000, scoped, tag = 'input window, operand 0, single buffered']
    #allocation4 [shape = 's32[2]{0}', space=sflag, size = 0x8, scoped, tag = 'scoped memory for encoder_llata_forward.5']
    #allocation5 [shape = 's32[2]{0}', space=sflag, size = 0x8, scoped, tag = 'scoped memory for encoder_llata_forward.5']
    #allocation6 [shape = 'u8[131072]{0}', space=vmem, size = 0x20000, scoped, tag = 'input window, operand 1']
    #allocation7 [shape = 's32[2]{0}', space=sflag, size = 0x8, scoped, tag = 'scoped memory for encoder_llata_forward.5']
    #allocation8 [shape = 'u8[8192]{0}', space=vmem, size = 0x2000, scoped, tag = 'input window, operand 2']
    #allocation9 [shape = 'u8[524288]{0}', space=vmem, size = 0x80000, scoped, tag = 'input window, operand 3']
    #allocation10 [shape = 's32[2]{0}', space=sflag, size = 0x8, scoped, tag = 'scoped memory for encoder_llata_forward.5']
    #allocation11 [shape = 'u8[512]{0}', space=vmem, size = 0x400, scoped, tag = 'input window, operand 4, single buffered']
    #allocation12 [shape = 'u8[512]{0}', space=vmem, size = 0x400, scoped, tag = 'input window, operand 5, single buffered']
    #allocation13 [shape = 's32[1]{0}', space=sflag, size = 0x4, scoped, tag = 'scoped memory for encoder_llata_forward.5']
    #allocation14 [shape = 'u8[512]{0}', space=vmem, size = 0x400, scoped, tag = 'input window, operand 6, single buffered']
    #allocation15 [shape = 'u8[8192]{0}', space=vmem, size = 0x2000, scoped, tag = 'output window, operand 0, single buffered']
    %12 = vsyncpa [#allocation4], 0
    %13 = vsyncpa [#allocation7], 0
    %s14 = scalar_lea.sflag [#allocation7], 1
    %15 = vsyncpa %s14, 0
    %16 = vsyncpa [#allocation10], 0
    %s17 = scalar_lea.sflag [#allocation10], 1
    %18 = vsyncpa %s17, 0
    %19 = vsyncpa [#allocation13], 0
    %20 = vsyncpa [#allocation5], 0
    loop: start=0, step=1, limit=4
    $region2: #{encoder_llata_forward.5} parent=1 // loop_pre_header
      _
    $region3: #{encoder_llata_forward.5} parent=1 // loop_header
      %s22 = sphi 0, %s26
      %p23 = scmp.ge.s32.totalorder %s22, 4
      %s29 = sphi 0, %s41
      %s30 = sphi 0, %s37
      %s31 = sphi 0, %s29
      %s32 = sphi 0, %s30
      %s33 = sphi 0, %s31
      %s34 = sphi 0, %s32
      %s44 = sphi 0, %s46
      %s47 = sphi 0, %s44
      %s48 = sphi 0, %s47
      %s64 = sphi 0, %s48
      %s70 = sphi 0, %s72
      %s73 = sphi 0, %s70
      %s74 = sphi 0, %s73
      %s90 = sphi 0, %s74
      %s96 = sphi 0, %s98
      %s99 = sphi 0, %s96
      %s100 = sphi 0, %s99
      %s116 = sphi 0, %s100
      %s122 = sphi 0, %s124
      %s125 = sphi 0, %s122
      %s126 = sphi 0, %s125
      %s142 = sphi 0, %s126
      %s146 = sphi 0, %s146
      %s148 = sphi 0, %s146
      %s149 = sphi 0, %s148
      %s163 = sphi 0, %s149
      %s167 = sphi 0, %s167
      %s169 = sphi 0, %s167
      %s170 = sphi 0, %s169
      %s184 = sphi 0, %s170
      %s188 = sphi 0, %s188
      %s190 = sphi 0, %s188
      %s191 = sphi 0, %s190
      %s205 = sphi 0, %s191
      %s211 = sphi 0, %s213
      %s214 = sphi 0, %s211
      %s215 = sphi 0, %s214
      %s231 = sphi 0, %s215
    $region4: #{encoder_llata_forward.5} parent=1 // loop_header_branch
      %25 = sbr.rel (%p23) target = $region8
    $region5: #{encoder_llata_forward.5} parent=1 // loop_body
      %s27 = ssub.s32 %s22, 1
      %s28 = ssub.s32 %s22, 2
      %s35 = sadd.s32 1, %s30
      %p36 = scmp.ge.s32.totalorder %s35, 2
      %s37 = scalar_select %p36, 0, %s35
      %s38 = sadd.s32 1, %s29
      %s39 = scalar_select %p36, %s38, %s29
      %p40 = scmp.ge.s32.totalorder %s39, 1
      %s41 = scalar_select %p40, 0, %s39
      %s42 = ssub.s32 %s29, %s41
      %p43 = scmp.eq.s32.totalorder %s42, 0
      %s45 = sadd.s32 %s44, 1
      %s46 = scalar_select %p43, %s44, %s45
      %p49 = pneg %p43
      %p50 = scmp.eq.s32.totalorder %s22, 1
      %p51 = por %p49, %p50
      %p52 = scmp.ne.s32.totalorder %s44, %s47
      %p53 = scmp.eq.s32.totalorder %s22, 0
      %p54 = por %p52, %p53
      %p55 = scmp.ne.s32.totalorder %s44, %s47
      %p56 = scmp.eq.s32.totalorder %s27, 1
      %p57 = por %p55, %p56
      %p58 = scmp.ne.s32.totalorder %s47, %s48
      %p59 = scmp.eq.s32.totalorder %s27, 0
      %p60 = por %p58, %p59
      %p61 = scmp.ne.s32.totalorder %s47, %s48
      %p62 = scmp.eq.s32.totalorder %s28, 1
      %p63 = por %p61, %p62
      %p65 = scmp.ne.s32.totalorder %s48, %s64
      %p66 = scmp.eq.s32.totalorder %s28, 0
      %p67 = por %p65, %p66
      %s68 = ssub.s32 %s30, %s37
      %p69 = scmp.eq.s32.totalorder %s68, 0
      %s71 = sadd.s32 %s70, 1
      %s72 = scalar_select %p69, %s70, %s71
      %p75 = pneg %p69
      %p76 = scmp.eq.s32.totalorder %s22, 1
      %p77 = por %p75, %p76
      %p78 = scmp.ne.s32.totalorder %s70, %s73
      %p79 = scmp.eq.s32.totalorder %s22, 0
      %p80 = por %p78, %p79
      %p81 = scmp.ne.s32.totalorder %s70, %s73
      %p82 = scmp.eq.s32.totalorder %s27, 1
      %p83 = por %p81, %p82
      %p84 = scmp.ne.s32.totalorder %s73, %s74
      %p85 = scmp.eq.s32.totalorder %s27, 0
      %p86 = por %p84, %p85
      %p87 = scmp.ne.s32.totalorder %s73, %s74
      %p88 = scmp.eq.s32.totalorder %s28, 1
      %p89 = por %p87, %p88
      %p91 = scmp.ne.s32.totalorder %s74, %s90
      %p92 = scmp.eq.s32.totalorder %s28, 0
      %p93 = por %p91, %p92
      %s94 = ssub.s32 %s30, %s37
      %p95 = scmp.eq.s32.totalorder %s94, 0
      %s97 = sadd.s32 %s96, 1
      %s98 = scalar_select %p95, %s96, %s97
      %p101 = pneg %p95
      %p102 = scmp.eq.s32.totalorder %s22, 1
      %p103 = por %p101, %p102
      %p104 = scmp.ne.s32.totalorder %s96, %s99
      %p105 = scmp.eq.s32.totalorder %s22, 0
      %p106 = por %p104, %p105
      %p107 = scmp.ne.s32.totalorder %s96, %s99
      %p108 = scmp.eq.s32.totalorder %s27, 1
      %p109 = por %p107, %p108
      %p110 = scmp.ne.s32.totalorder %s99, %s100
      %p111 = scmp.eq.s32.totalorder %s27, 0
      %p112 = por %p110, %p111
      %p113 = scmp.ne.s32.totalorder %s99, %s100
      %p114 = scmp.eq.s32.totalorder %s28, 1
      %p115 = por %p113, %p114
      %p117 = scmp.ne.s32.totalorder %s100, %s116
      %p118 = scmp.eq.s32.totalorder %s28, 0
      %p119 = por %p117, %p118
      %s120 = ssub.s32 %s30, %s37
      %p121 = scmp.eq.s32.totalorder %s120, 0
      %s123 = sadd.s32 %s122, 1
      %s124 = scalar_select %p121, %s122, %s123
      %p127 = pneg %p121
      %p128 = scmp.eq.s32.totalorder %s22, 1
      %p129 = por %p127, %p128
      %p130 = scmp.ne.s32.totalorder %s122, %s125
      %p131 = scmp.eq.s32.totalorder %s22, 0
      %p132 = por %p130, %p131
      %p133 = scmp.ne.s32.totalorder %s122, %s125
      %p134 = scmp.eq.s32.totalorder %s27, 1
      %p135 = por %p133, %p134
      %p136 = scmp.ne.s32.totalorder %s125, %s126
      %p137 = scmp.eq.s32.totalorder %s27, 0
      %p138 = por %p136, %p137
      %p139 = scmp.ne.s32.totalorder %s125, %s126
      %p140 = scmp.eq.s32.totalorder %s28, 1
      %p141 = por %p139, %p140
      %p143 = scmp.ne.s32.totalorder %s126, %s142
      %p144 = scmp.eq.s32.totalorder %s28, 0
      %p145 = por %p143, %p144
      %s147 = sadd.s32 %s146, 1
      %p150 = scmp.eq.s32.totalorder %s22, 1
      %p151 = scmp.ne.s32.totalorder %s146, %s148
      %p152 = scmp.eq.s32.totalorder %s22, 0
      %p153 = por %p151, %p152
      %p154 = scmp.ne.s32.totalorder %s146, %s148
      %p155 = scmp.eq.s32.totalorder %s27, 1
      %p156 = por %p154, %p155
      %p157 = scmp.ne.s32.totalorder %s148, %s149
      %p158 = scmp.eq.s32.totalorder %s27, 0
      %p159 = por %p157, %p158
      %p160 = scmp.ne.s32.totalorder %s148, %s149
      %p161 = scmp.eq.s32.totalorder %s28, 1
      %p162 = por %p160, %p161
      %p164 = scmp.ne.s32.totalorder %s149, %s163
      %p165 = scmp.eq.s32.totalorder %s28, 0
      %p166 = por %p164, %p165
      %s168 = sadd.s32 %s167, 1
      %p171 = scmp.eq.s32.totalorder %s22, 1
      %p172 = scmp.ne.s32.totalorder %s167, %s169
      %p173 = scmp.eq.s32.totalorder %s22, 0
      %p174 = por %p172, %p173
      %p175 = scmp.ne.s32.totalorder %s167, %s169
      %p176 = scmp.eq.s32.totalorder %s27, 1
      %p177 = por %p175, %p176
      %p178 = scmp.ne.s32.totalorder %s169, %s170
      %p179 = scmp.eq.s32.totalorder %s27, 0
      %p180 = por %p178, %p179
      %p181 = scmp.ne.s32.totalorder %s169, %s170
      %p182 = scmp.eq.s32.totalorder %s28, 1
      %p183 = por %p181, %p182
      %p185 = scmp.ne.s32.totalorder %s170, %s184
      %p186 = scmp.eq.s32.totalorder %s28, 0
      %p187 = por %p185, %p186
      %s189 = sadd.s32 %s188, 1
      %p192 = scmp.eq.s32.totalorder %s22, 1
      %p193 = scmp.ne.s32.totalorder %s188, %s190
      %p194 = scmp.eq.s32.totalorder %s22, 0
      %p195 = por %p193, %p194
      %p196 = scmp.ne.s32.totalorder %s188, %s190
      %p197 = scmp.eq.s32.totalorder %s27, 1
      %p198 = por %p196, %p197
      %p199 = scmp.ne.s32.totalorder %s190, %s191
      %p200 = scmp.eq.s32.totalorder %s27, 0
      %p201 = por %p199, %p200
      %p202 = scmp.ne.s32.totalorder %s190, %s191
      %p203 = scmp.eq.s32.totalorder %s28, 1
      %p204 = por %p202, %p203
      %p206 = scmp.ne.s32.totalorder %s191, %s205
      %p207 = scmp.eq.s32.totalorder %s28, 0
      %p208 = por %p206, %p207
      %s209 = ssub.s32 %s29, %s41
      %p210 = scmp.eq.s32.totalorder %s209, 0
      %s212 = sadd.s32 %s211, 1
      %s213 = scalar_select %p210, %s211, %s212
      %p216 = pneg %p210
      %p217 = scmp.eq.s32.totalorder %s22, 1
      %p218 = por %p216, %p217
      %p219 = scmp.ne.s32.totalorder %s211, %s214
      %p220 = scmp.eq.s32.totalorder %s22, 0
      %p221 = por %p219, %p220
      %p222 = scmp.ne.s32.totalorder %s211, %s214
      %p223 = scmp.eq.s32.totalorder %s27, 1
      %p224 = por %p222, %p223
      %p225 = scmp.ne.s32.totalorder %s214, %s215
      %p226 = scmp.eq.s32.totalorder %s27, 0
      %p227 = por %p225, %p226
      %p228 = scmp.ne.s32.totalorder %s214, %s215
      %p229 = scmp.eq.s32.totalorder %s28, 1
      %p230 = por %p228, %p229
      %p232 = scmp.ne.s32.totalorder %s215, %s231
      %p233 = scmp.eq.s32.totalorder %s28, 0
      %p234 = por %p232, %p233
      %p235 = scmp.le.s32.totalorder 1, %s22
      %p236 = scmp.lt.s32.totalorder %s22, 3
      %p237 = pnand %p235, %p236
      %p238 = pneg %p237
      // Predicated region
      $region9: #{encoder_llata_forward.5} parent=5 // pred_check
        _
      $region10: #{encoder_llata_forward.5} parent=5 // pred_check_branch
        %240 = sbr.rel (%p237) target = $region12
      $region11: #{encoder_llata_forward.5} parent=5 // pred_region
        %s241 = ssub.s32 %s22, 1
        // Predicated region
        $region13: #{encoder_llata_forward.5} parent=11 // pred_check
          %p242 = pneg %p60
        $region14: #{encoder_llata_forward.5} parent=11 // pred_check_branch
          %244 = sbr.rel (%p242) target = $region16
        $region15: #{encoder_llata_forward.5} parent=11 // pred_region
          %s245 = smul.u32 2, %s31
          %s247 = ssub.s32 128, 128
          %248 = vsyncadd [#allocation4], %s247
          %s249 = smul.addr %s245, 64
          %s250 = scalar_lea.hbm %s0, %s249
          %s251 = sshll.u32 [#allocation3], 4
          %s252 = int_to_ptr.vmem [resolvable:$true] %s251
          %257 = dma.hbm_to_vmem [thread:$0]  %s250, 128, %s252, [#allocation4], 64, 64, 4
        $region16: #{encoder_llata_forward.5} parent=11 // pred_fallthru
          _
        // Predicated region
        $region17: #{encoder_llata_forward.5} parent=11 // pred_check
          %p258 = pneg %p159
        $region18: #{encoder_llata_forward.5} parent=11 // pred_check_branch
          %260 = sbr.rel (%p258) target = $region20
        $region19: #{encoder_llata_forward.5} parent=11 // pred_region
          %s262 = ssub.s32 16, 16
          %263 = vsyncadd [#allocation10], %s262
          %s265 = sshll.u32 [#allocation11], 4
          %s266 = int_to_ptr.vmem [resolvable:$true] %s265
          %268 = dma.hbm_to_vmem [thread:$0]  %s4, 16, %s266, [#allocation10]
        $region20: #{encoder_llata_forward.5} parent=11 // pred_fallthru
          _
        // Predicated region
        $region21: #{encoder_llata_forward.5} parent=11 // pred_check
          %p269 = pneg %p180
        $region22: #{encoder_llata_forward.5} parent=11 // pred_check_branch
          %271 = sbr.rel (%p269) target = $region24
        $region23: #{encoder_llata_forward.5} parent=11 // pred_region
          %s273 = ssub.s32 16, 16
          %274 = vsyncadd [#allocation13], %s273
          %s276 = sshll.u32 [#allocation12], 4
          %s277 = int_to_ptr.vmem [resolvable:$true] %s276
          %279 = dma.hbm_to_vmem [thread:$0]  %s5, 16, %s277, [#allocation13]
        $region24: #{encoder_llata_forward.5} parent=11 // pred_fallthru
          _
        // Predicated region
        $region25: #{encoder_llata_forward.5} parent=11 // pred_check
          %p280 = pneg %p201
        $region26: #{encoder_llata_forward.5} parent=11 // pred_check_branch
          %282 = sbr.rel (%p280) target = $region28
        $region27: #{encoder_llata_forward.5} parent=11 // pred_region
          %s284 = ssub.s32 16, 16
          %285 = vsyncadd [#allocation13], %s284
          %s287 = sshll.u32 [#allocation14], 4
          %s288 = int_to_ptr.vmem [resolvable:$true] %s287
          %290 = dma.hbm_to_vmem [thread:$0]  %s6, 16, %s288, [#allocation13]
        $region28: #{encoder_llata_forward.5} parent=11 // pred_fallthru
          _
      $region12: #{encoder_llata_forward.5} parent=5 // pred_fallthru
        _
      %p291 = scmp.lt.s32.totalorder %s22, 2
      // Predicated region
      $region29: #{encoder_llata_forward.5} parent=5 // pred_check
        %p292 = pneg %p291
      $region30: #{encoder_llata_forward.5} parent=5 // pred_check_branch
        %294 = sbr.rel (%p292) target = $region32
      $region31: #{encoder_llata_forward.5} parent=5 // pred_region
        // Predicated region
        $region33: #{encoder_llata_forward.5} parent=31 // pred_check
          %p295 = pneg %p80
        $region34: #{encoder_llata_forward.5} parent=31 // pred_check_branch
          %297 = sbr.rel (%p295) target = $region36
        $region35: #{encoder_llata_forward.5} parent=31 // pred_region
          %s298 = sand.u32 %s22, 1
          %s299 = scalar_lea.sflag [#allocation7], %s298
          %s300 = sand.u32 %s70, 1
          %s301 = smul.addr %s300, 128
          %s302 = scalar_lea.vmem [#allocation6], %s301
          %s303 = smul.u32 8, %s30
          %s305 = ssub.s32 2048, 2048
          %306 = vsyncadd %s299, %s305
          %s307 = smul.addr %s303, 64
          %s308 = scalar_lea.hbm %s1, %s307
          %s309 = sshll.u32 %s302, 4
          %s310 = int_to_ptr.vmem [resolvable:$true] %s309
          %315 = dma.hbm_to_vmem [thread:$0]  %s308, 2048, %s310, %s299, 1024, 512, 32
        $region36: #{encoder_llata_forward.5} parent=31 // pred_fallthru
          _
        // Predicated region
        $region37: #{encoder_llata_forward.5} parent=31 // pred_check
          %p316 = pneg %p106
        $region38: #{encoder_llata_forward.5} parent=31 // pred_check_branch
          %318 = sbr.rel (%p316) target = $region40
        $region39: #{encoder_llata_forward.5} parent=31 // pred_region
          %s319 = sand.u32 %s22, 1
          %s320 = scalar_lea.sflag [#allocation7], %s319
          %s321 = sand.u32 %s96, 1
          %s322 = smul.addr %s321, 8
          %s323 = scalar_lea.vmem [#allocation8], %s322
          %s324 = smul.u32 8, %s30
          %s326 = ssub.s32 128, 128
          %327 = vsyncadd %s320, %s326
          %s328 = smul.addr %s324, 16
          %s329 = scalar_lea.hbm %s2, %s328
          %s331 = sshll.u32 %s323, 4
          %s332 = int_to_ptr.vmem [resolvable:$true] %s331
          %334 = dma.hbm_to_vmem [thread:$0]  %s329, 128, %s332, %s320
        $region40: #{encoder_llata_forward.5} parent=31 // pred_fallthru
          _
        // Predicated region
        $region41: #{encoder_llata_forward.5} parent=31 // pred_check
          %p335 = pneg %p132
        $region42: #{encoder_llata_forward.5} parent=31 // pred_check_branch
          %337 = sbr.rel (%p335) target = $region44
        $region43: #{encoder_llata_forward.5} parent=31 // pred_region
          %s338 = sand.u32 %s22, 1
          %s339 = scalar_lea.sflag [#allocation10], %s338
          %s340 = sand.u32 %s122, 1
          %s341 = smul.addr %s340, 512
          %s342 = scalar_lea.vmem [#allocation9], %s341
          %s343 = smul.u32 128, %s30
          %s345 = ssub.s32 8192, 8192
          %346 = vsyncadd %s339, %s345
          %s347 = smul.addr %s343, 64
          %s348 = scalar_lea.hbm %s3, %s347
          %s349 = sshll.u32 %s342, 4
          %s350 = int_to_ptr.vmem [resolvable:$true] %s349
          %355 = dma.hbm_to_vmem [thread:$0]  %s348, 8192, %s350, %s339, 64, 64, 4
        $region44: #{encoder_llata_forward.5} parent=31 // pred_fallthru
          _
      $region32: #{encoder_llata_forward.5} parent=5 // pred_fallthru
        _
      %p356 = scmp.le.s32.totalorder 1, %s22
      %p357 = scmp.lt.s32.totalorder %s22, 3
      %p358 = pnand %p356, %p357
      %p359 = pneg %p358
      // Predicated region
      $region45: #{encoder_llata_forward.5} parent=5 // pred_check
        _
      $region46: #{encoder_llata_forward.5} parent=5 // pred_check_branch
        %361 = sbr.rel (%p358) target = $region48
      $region47: #{encoder_llata_forward.5} parent=5 // pred_region
        %s362 = ssub.s32 %s22, 1
        // Predicated region
        $region49: #{encoder_llata_forward.5} parent=47 // pred_check
          %p363 = pneg %p60
        $region50: #{encoder_llata_forward.5} parent=47 // pred_check_branch
          %365 = sbr.rel (%p363) target = $region52
        $region51: #{encoder_llata_forward.5} parent=47 // pred_region
          %366 = dma.done [#allocation4], 128
        $region52: #{encoder_llata_forward.5} parent=47 // pred_fallthru
          _
        %s367 = sand.u32 %s27, 1
        %s368 = scalar_lea.sflag [#allocation7], %s367
        %s369 = sand.u32 %s73, 1
        %s370 = smul.addr %s369, 128
        %s371 = scalar_lea.vmem [#allocation6], %s370
        // Predicated region
        $region53: #{encoder_llata_forward.5} parent=47 // pred_check
          %p372 = pneg %p86
        $region54: #{encoder_llata_forward.5} parent=47 // pred_check_branch
          %374 = sbr.rel (%p372) target = $region56
        $region55: #{encoder_llata_forward.5} parent=47 // pred_region
          %375 = dma.done %s368, 2048
        $region56: #{encoder_llata_forward.5} parent=47 // pred_fallthru
          _
        %s376 = sand.u32 %s27, 1
        %s377 = scalar_lea.sflag [#allocation7], %s376
        %s378 = sand.u32 %s99, 1
        %s379 = smul.addr %s378, 8
        %s380 = scalar_lea.vmem [#allocation8], %s379
        // Predicated region
        $region57: #{encoder_llata_forward.5} parent=47 // pred_check
          %p381 = pneg %p112
        $region58: #{encoder_llata_forward.5} parent=47 // pred_check_branch
          %383 = sbr.rel (%p381) target = $region60
        $region59: #{encoder_llata_forward.5} parent=47 // pred_region
          %384 = dma.done %s377, 128
        $region60: #{encoder_llata_forward.5} parent=47 // pred_fallthru
          _
        %s385 = sand.u32 %s27, 1
        %s386 = scalar_lea.sflag [#allocation10], %s385
        %s387 = sand.u32 %s125, 1
        %s388 = smul.addr %s387, 512
        %s389 = scalar_lea.vmem [#allocation9], %s388
        // Predicated region
        $region61: #{encoder_llata_forward.5} parent=47 // pred_check
          %p390 = pneg %p138
        $region62: #{encoder_llata_forward.5} parent=47 // pred_check_branch
          %392 = sbr.rel (%p390) target = $region64
        $region63: #{encoder_llata_forward.5} parent=47 // pred_region
          %393 = dma.done %s386, 8192
        $region64: #{encoder_llata_forward.5} parent=47 // pred_fallthru
          _
        // Predicated region
        $region65: #{encoder_llata_forward.5} parent=47 // pred_check
          %p394 = pneg %p159
        $region66: #{encoder_llata_forward.5} parent=47 // pred_check_branch
          %396 = sbr.rel (%p394) target = $region68
        $region67: #{encoder_llata_forward.5} parent=47 // pred_region
          %397 = dma.done [#allocation10], 16
        $region68: #{encoder_llata_forward.5} parent=47 // pred_fallthru
          _
        // Predicated region
        $region69: #{encoder_llata_forward.5} parent=47 // pred_check
          %p398 = pneg %p180
        $region70: #{encoder_llata_forward.5} parent=47 // pred_check_branch
          %400 = sbr.rel (%p398) target = $region72
        $region71: #{encoder_llata_forward.5} parent=47 // pred_region
          %401 = dma.done [#allocation13], 16
        $region72: #{encoder_llata_forward.5} parent=47 // pred_fallthru
          _
        // Predicated region
        $region73: #{encoder_llata_forward.5} parent=47 // pred_check
          %p402 = pneg %p201
        $region74: #{encoder_llata_forward.5} parent=47 // pred_check_branch
          %404 = sbr.rel (%p402) target = $region76
        $region75: #{encoder_llata_forward.5} parent=47 // pred_region
          %405 = dma.done [#allocation13], 16
        $region76: #{encoder_llata_forward.5} parent=47 // pred_fallthru
          _
        %p406 = pneg %p60
        %p407 = pneg %p57
        %s408 = sand.u32 %s27, 1
        %s409 = scalar_lea.sflag [#allocation7], %s408
        %s410 = sand.u32 %s73, 1
        %s411 = smul.addr %s410, 128
        %s412 = scalar_lea.vmem [#allocation6], %s411
        %p413 = pneg %p86
        %p414 = pneg %p83
        %s415 = sand.u32 %s27, 1
        %s416 = scalar_lea.sflag [#allocation7], %s415
        %s417 = sand.u32 %s99, 1
        %s418 = smul.addr %s417, 8
        %s419 = scalar_lea.vmem [#allocation8], %s418
        %p420 = pneg %p112
        %p421 = pneg %p109
        %s422 = sand.u32 %s27, 1
        %s423 = scalar_lea.sflag [#allocation10], %s422
        %s424 = sand.u32 %s125, 1
        %s425 = smul.addr %s424, 512
        %s426 = scalar_lea.vmem [#allocation9], %s425
        %p427 = pneg %p138
        %p428 = pneg %p135
        %p429 = pneg %p159
        %p430 = pneg %p156
        %p431 = pneg %p180
        %p432 = pneg %p177
        %p433 = pneg %p201
        %p434 = pneg %p198
        %p435 = pneg %p227
        %p436 = pneg %p224
        %s437 = smul.u32 2, %s31
        %s438 = smul.u32 8, %s32
        %s439 = smul.u32 8, %s32
        %s440 = smul.u32 128, %s32
        %s441 = smul.u32 2, %s31
        %p443 = scmp.eq.s32.totalorder %s32, 0
        // Predicated region
        $region77: #{encoder_llata_forward.5} parent=47 // pred_check
          %p444 = pneg %p443
        $region78: #{encoder_llata_forward.5} parent=47 // pred_check_branch
          %446 = sbr.rel (%p444) target = $region80
        $region79: #{encoder_llata_forward.5} parent=47 // pred_region
          %vm447 = vcmask 261120
          %448 = vst.msk [vmem:[#allocation2] sm:$0xff] %vm447, 0.0
          %449 = vst.msk [vmem:[#allocation2 + $0x8] sm:$0xff] %vm447, 0.0
        $region80: #{encoder_llata_forward.5} parent=47 // pred_fallthru
          _
        %v450 = vld [vmem:[#allocation3] sm:$0xf]
        %v451 = vld [vmem:[#allocation3 + $0x4] sm:$0xf]
        %v452 = vld [vmem:[%s371] sm:$0xff]
        %v453 = vld [vmem:[%s371 + $0x8] sm:$0xff]
        %v454 = vld [vmem:[%s371 + $0x10] sm:$0xff]
        %v455 = vld [vmem:[%s371 + $0x18] sm:$0xff]
        %v456 = vld [vmem:[%s371 + $0x20] sm:$0xff]
        %v457 = vld [vmem:[%s371 + $0x28] sm:$0xff]
        %v458 = vld [vmem:[%s371 + $0x30] sm:$0xff]
        %v459 = vld [vmem:[%s371 + $0x38] sm:$0xff]
        %v460 = vld [vmem:[%s371 + $0x40] sm:$0xff]
        %v461 = vld [vmem:[%s371 + $0x48] sm:$0xff]
        %v462 = vld [vmem:[%s371 + $0x50] sm:$0xff]
        %v463 = vld [vmem:[%s371 + $0x58] sm:$0xff]
        %v464 = vld [vmem:[%s371 + $0x60] sm:$0xff]
        %v465 = vld [vmem:[%s371 + $0x68] sm:$0xff]
        %v466 = vld [vmem:[%s371 + $0x70] sm:$0xff]
        %v467 = vld [vmem:[%s371 + $0x78] sm:$0xff]
        %v468 = vld [vmem:[%s380] sm:$0xff]
        %v470 = vlaneseq
        %v471 = vshrl.u32 %v470, 7
        %v472 = vsub.s32 0, %v471
        %v473 = vrot.slane %v468, %v472
        %v474 = vlaneseq
        %v475 = vshrl.u32 %v474, 7
        %v476 = vsub.s32 1, %v475
        %v477 = vrot.slane %v468, %v476
        %v478 = vlaneseq
        %v479 = vshrl.u32 %v478, 7
        %v480 = vsub.s32 2, %v479
        %v481 = vrot.slane %v468, %v480
        %v482 = vlaneseq
        %v483 = vshrl.u32 %v482, 7
        %v484 = vsub.s32 3, %v483
        %v485 = vrot.slane %v468, %v484
        %v486 = vlaneseq
        %v487 = vshrl.u32 %v486, 7
        %v488 = vsub.s32 4, %v487
        %v489 = vrot.slane %v468, %v488
        %v490 = vlaneseq
        %v491 = vshrl.u32 %v490, 7
        %v492 = vsub.s32 5, %v491
        %v493 = vrot.slane %v468, %v492
        %v494 = vlaneseq
        %v495 = vshrl.u32 %v494, 7
        %v496 = vsub.s32 6, %v495
        %v497 = vrot.slane %v468, %v496
        %v498 = vlaneseq
        %v499 = vshrl.u32 %v498, 7
        %v500 = vsub.s32 7, %v499
        %v501 = vrot.slane %v468, %v500
        %v512 = vunpack.c.l.b16 %v450
        %v513 = vunpack.c.l.b16 %v451
        %v514 = vpack.c.b16 %v513, %v512
        %v531 = vunpack.c.l.b16 %v452
        %v532 = vunpack.c.h.b16 %v452
        %v533 = vunpack.c.l.b16 %v453
        %v534 = vunpack.c.h.b16 %v453
        %v535 = vunpack.c.l.b16 %v454
        %v536 = vunpack.c.h.b16 %v454
        %v537 = vunpack.c.l.b16 %v455
        %v538 = vunpack.c.h.b16 %v455
        %v539 = vunpack.c.l.b16 %v456
        %v540 = vunpack.c.h.b16 %v456
        %v541 = vunpack.c.l.b16 %v457
        %v542 = vunpack.c.h.b16 %v457
        %v543 = vunpack.c.l.b16 %v458
        %v544 = vunpack.c.h.b16 %v458
        %v545 = vunpack.c.l.b16 %v459
        %v546 = vunpack.c.h.b16 %v459
        %v547 = vunpack.c.l.b16 %v460
        %v548 = vunpack.c.h.b16 %v460
        %v549 = vunpack.c.l.b16 %v461
        %v550 = vunpack.c.h.b16 %v461
        %v551 = vunpack.c.l.b16 %v462
        %v552 = vunpack.c.h.b16 %v462
        %v553 = vunpack.c.l.b16 %v463
        %v554 = vunpack.c.h.b16 %v463
        %v555 = vunpack.c.l.b16 %v464
        %v556 = vunpack.c.h.b16 %v464
        %v557 = vunpack.c.l.b16 %v465
        %v558 = vunpack.c.h.b16 %v465
        %v559 = vunpack.c.l.b16 %v466
        %v560 = vunpack.c.h.b16 %v466
        %v561 = vunpack.c.l.b16 %v467
        %v562 = vunpack.c.h.b16 %v467
        %v563 = vpack.c.b16 %v539, %v531
        %v564 = vpack.c.b16 %v540, %v532
        %v565 = vpack.c.b16 %v541, %v533
        %v566 = vpack.c.b16 %v542, %v534
        %v567 = vpack.c.b16 %v543, %v535
        %v568 = vpack.c.b16 %v544, %v536
        %v569 = vpack.c.b16 %v545, %v537
        %v570 = vpack.c.b16 %v546, %v538
        %v571 = vpack.c.b16 %v555, %v547
        %v572 = vpack.c.b16 %v556, %v548
        %v573 = vpack.c.b16 %v557, %v549
        %v574 = vpack.c.b16 %v558, %v550
        %v575 = vpack.c.b16 %v559, %v551
        %v576 = vpack.c.b16 %v560, %v552
        %v577 = vpack.c.b16 %v561, %v553
        %v578 = vpack.c.b16 %v562, %v554
        %vm595 = vcmask 261120
        %v597 = vsel %vm595, %v514, 0
        %599 = vmatprep.subr.bf16.mxu0 %v564
        %600 = vmatpush1.bf16.msra.mxu0 %v563
        %601 = vmatprep.subr.bf16.mxu0 %v572
        %602 = vmatpush1.bf16.msra.mxu0 %v571
        %603 = vmatprep.subr.bf16.mxu0 0
        %604 = vmatpush1.bf16.msra.mxu0 0
        %605 = vmatprep.subr.bf16.mxu0 0
        %606 = vmatpush1.bf16.msra.mxu0 0
        %607 = vmatprep.subr.bf16.mxu0 0
        %608 = vmatpush1.bf16.msra.mxu0 0
        %609 = vmatprep.subr.bf16.mxu0 0
        %610 = vmatpush1.bf16.msra.mxu0 0
        %611 = vmatprep.subr.bf16.mxu0 0
        %612 = vmatpush1.bf16.msra.mxu0 0
        %613 = vmatprep.subr.bf16.mxu0 0
        %614 = vmatpush1.bf16.msra.mxu0 0
        %615 = vmatprep.subr.bf16.mxu0 0
        %616 = vmatpush1.bf16.msra.mxu0 0
        %617 = vmatprep.subr.bf16.mxu0 0
        %618 = vmatpush1.bf16.msra.mxu0 0
        %619 = vmatprep.subr.bf16.mxu0 0
        %620 = vmatpush1.bf16.msra.mxu0 0
        %621 = vmatprep.subr.bf16.mxu0 0
        %622 = vmatpush1.bf16.msra.mxu0 0
        %623 = vmatprep.subr.bf16.mxu0 0
        %624 = vmatpush1.bf16.msra.mxu0 0
        %625 = vmatprep.subr.bf16.mxu0 0
        %626 = vmatpush1.bf16.msra.mxu0 0
        %627 = vmatprep.subr.bf16.mxu0 0
        %628 = vmatpush1.bf16.msra.mxu0 0
        %629 = vmatprep.subr.bf16.mxu0 0
        %630 = vmatpush1.bf16.msra.mxu0 0
        %631 = vmatprep.mubr.bf16.mxu0 0
        %632 = vmatmul.mubr.bf16.gmra.mrb[0].mxu0 %v597
        %v633 = vpop.f32.mrb[0].mxu0
        %v634 = vadd.f32 %v473, %v633
        %v635 = vpop.f32.mrb[0].mxu0
        %v636 = vadd.f32 %v477, %v635
        %v637 = vpop.f32.mrb[0].mxu0
        %v638 = vadd.f32 %v473, %v637
        %v639 = vpop.f32.mrb[0].mxu0
        %v640 = vadd.f32 %v477, %v639
        %641 = vdwg.mxu0
        %642 = vmatprep.subr.bf16.mxu0 %v566
        %643 = vmatpush1.bf16.msra.mxu0 %v565
        %644 = vmatprep.subr.bf16.mxu0 %v574
        %645 = vmatpush1.bf16.msra.mxu0 %v573
        %646 = vmatprep.subr.bf16.mxu0 0
        %647 = vmatpush1.bf16.msra.mxu0 0
        %648 = vmatprep.subr.bf16.mxu0 0
        %649 = vmatpush1.bf16.msra.mxu0 0
        %650 = vmatprep.subr.bf16.mxu0 0
        %651 = vmatpush1.bf16.msra.mxu0 0
        %652 = vmatprep.subr.bf16.mxu0 0
        %653 = vmatpush1.bf16.msra.mxu0 0
        %654 = vmatprep.subr.bf16.mxu0 0
        %655 = vmatpush1.bf16.msra.mxu0 0
        %656 = vmatprep.subr.bf16.mxu0 0
        %657 = vmatpush1.bf16.msra.mxu0 0
        %658 = vmatprep.subr.bf16.mxu0 0
        %659 = vmatpush1.bf16.msra.mxu0 0
        %660 = vmatprep.subr.bf16.mxu0 0
        %661 = vmatpush1.bf16.msra.mxu0 0
        %662 = vmatprep.subr.bf16.mxu0 0
        %663 = vmatpush1.bf16.msra.mxu0 0
        %664 = vmatprep.subr.bf16.mxu0 0
        %665 = vmatpush1.bf16.msra.mxu0 0
        %666 = vmatprep.subr.bf16.mxu0 0
        %667 = vmatpush1.bf16.msra.mxu0 0
        %668 = vmatprep.subr.bf16.mxu0 0
        %669 = vmatpush1.bf16.msra.mxu0 0
        %670 = vmatprep.subr.bf16.mxu0 0
        %671 = vmatpush1.bf16.msra.mxu0 0
        %672 = vmatprep.subr.bf16.mxu0 0
        %673 = vmatpush1.bf16.msra.mxu0 0
        %674 = vmatprep.mubr.bf16.mxu0 0
        %675 = vmatmul.mubr.bf16.gmra.mrb[0].mxu0 %v597
        %v676 = vpop.f32.mrb[0].mxu0
        %v677 = vadd.f32 %v481, %v676
        %v678 = vpop.f32.mrb[0].mxu0
        %v679 = vadd.f32 %v485, %v678
        %v680 = vpop.f32.mrb[0].mxu0
        %v681 = vadd.f32 %v481, %v680
        %v682 = vpop.f32.mrb[0].mxu0
        %v683 = vadd.f32 %v485, %v682
        %684 = vdwg.mxu0
        %685 = vmatprep.subr.bf16.mxu0 %v568
        %686 = vmatpush1.bf16.msra.mxu0 %v567
        %687 = vmatprep.subr.bf16.mxu0 %v576
        %688 = vmatpush1.bf16.msra.mxu0 %v575
        %689 = vmatprep.subr.bf16.mxu0 0
        %690 = vmatpush1.bf16.msra.mxu0 0
        %691 = vmatprep.subr.bf16.mxu0 0
        %692 = vmatpush1.bf16.msra.mxu0 0
        %693 = vmatprep.subr.bf16.mxu0 0
        %694 = vmatpush1.bf16.msra.mxu0 0
        %695 = vmatprep.subr.bf16.mxu0 0
        %696 = vmatpush1.bf16.msra.mxu0 0
        %697 = vmatprep.subr.bf16.mxu0 0
        %698 = vmatpush1.bf16.msra.mxu0 0
        %699 = vmatprep.subr.bf16.mxu0 0
        %700 = vmatpush1.bf16.msra.mxu0 0
        %701 = vmatprep.subr.bf16.mxu0 0
        %702 = vmatpush1.bf16.msra.mxu0 0
        %703 = vmatprep.subr.bf16.mxu0 0
        %704 = vmatpush1.bf16.msra.mxu0 0
        %705 = vmatprep.subr.bf16.mxu0 0
        %706 = vmatpush1.bf16.msra.mxu0 0
        %707 = vmatprep.subr.bf16.mxu0 0
        %708 = vmatpush1.bf16.msra.mxu0 0
        %709 = vmatprep.subr.bf16.mxu0 0
        %710 = vmatpush1.bf16.msra.mxu0 0
        %711 = vmatprep.subr.bf16.mxu0 0
        %712 = vmatpush1.bf16.msra.mxu0 0
        %713 = vmatprep.subr.bf16.mxu0 0
        %714 = vmatpush1.bf16.msra.mxu0 0
        %715 = vmatprep.subr.bf16.mxu0 0
        %716 = vmatpush1.bf16.msra.mxu0 0
        %717 = vmatprep.mubr.bf16.mxu0 0
        %718 = vmatmul.mubr.bf16.gmra.mrb[0].mxu0 %v597
        %v719 = vpop.f32.mrb[0].mxu0
        %v720 = vadd.f32 %v489, %v719
        %v721 = vpop.f32.mrb[0].mxu0
        %v722 = vadd.f32 %v493, %v721
        %v723 = vpop.f32.mrb[0].mxu0
        %v724 = vadd.f32 %v489, %v723
        %v725 = vpop.f32.mrb[0].mxu0
        %v726 = vadd.f32 %v493, %v725
        %727 = vdwg.mxu0
        %728 = vmatprep.subr.bf16.mxu0 %v570
        %729 = vmatpush1.bf16.msra.mxu0 %v569
        %730 = vmatprep.subr.bf16.mxu0 %v578
        %731 = vmatpush1.bf16.msra.mxu0 %v577
        %732 = vmatprep.subr.bf16.mxu0 0
        %733 = vmatpush1.bf16.msra.mxu0 0
        %734 = vmatprep.subr.bf16.mxu0 0
        %735 = vmatpush1.bf16.msra.mxu0 0
        %736 = vmatprep.subr.bf16.mxu0 0
        %737 = vmatpush1.bf16.msra.mxu0 0
        %738 = vmatprep.subr.bf16.mxu0 0
        %739 = vmatpush1.bf16.msra.mxu0 0
        %740 = vmatprep.subr.bf16.mxu0 0
        %741 = vmatpush1.bf16.msra.mxu0 0
        %742 = vmatprep.subr.bf16.mxu0 0
        %743 = vmatpush1.bf16.msra.mxu0 0
        %744 = vmatprep.subr.bf16.mxu0 0
        %745 = vmatpush1.bf16.msra.mxu0 0
        %746 = vmatprep.subr.bf16.mxu0 0
        %747 = vmatpush1.bf16.msra.mxu0 0
        %748 = vmatprep.subr.bf16.mxu0 0
        %749 = vmatpush1.bf16.msra.mxu0 0
        %750 = vmatprep.subr.bf16.mxu0 0
        %751 = vmatpush1.bf16.msra.mxu0 0
        %752 = vmatprep.subr.bf16.mxu0 0
        %753 = vmatpush1.bf16.msra.mxu0 0
        %754 = vmatprep.subr.bf16.mxu0 0
        %755 = vmatpush1.bf16.msra.mxu0 0
        %756 = vmatprep.subr.bf16.mxu0 0
        %757 = vmatpush1.bf16.msra.mxu0 0
        %758 = vmatprep.subr.bf16.mxu0 0
        %759 = vmatpush1.bf16.msra.mxu0 0
        %760 = vmatprep.mubr.bf16.mxu0 0
        %761 = vmatmul.mubr.bf16.gmra.mrb[0].mxu0 %v597
        %v762 = vpop.f32.mrb[0].mxu0
        %v763 = vadd.f32 %v497, %v762
        %v764 = vpop.f32.mrb[0].mxu0
        %v765 = vadd.f32 %v501, %v764
        %v766 = vpop.f32.mrb[0].mxu0
        %v767 = vadd.f32 %v497, %v766
        %v768 = vpop.f32.mrb[0].mxu0
        %v769 = vadd.f32 %v501, %v768
        %770 = vdwg.mxu0
        %v771 = vmax.f32 %v634, 0.0
        %v772 = vmax.f32 %v636, 0.0
        %v773 = vmax.f32 %v677, 0.0
        %v774 = vmax.f32 %v679, 0.0
        %v775 = vmax.f32 %v720, 0.0
        %v776 = vmax.f32 %v722, 0.0
        %v777 = vmax.f32 %v763, 0.0
        %v778 = vmax.f32 %v765, 0.0
        %v779 = vmax.f32 %v638, 0.0
        %v780 = vmax.f32 %v640, 0.0
        %v781 = vmax.f32 %v681, 0.0
        %v782 = vmax.f32 %v683, 0.0
        %v783 = vmax.f32 %v724, 0.0
        %v784 = vmax.f32 %v726, 0.0
        %v785 = vmax.f32 %v767, 0.0
        %v786 = vmax.f32 %v769, 0.0
        %v787 = vpack.c.bf16 %v779, %v771
        %v788 = vpack.c.bf16 %v780, %v772
        %v789 = vpack.c.bf16 %v781, %v773
        %v790 = vpack.c.bf16 %v782, %v774
        %v791 = vpack.c.bf16 %v783, %v775
        %v792 = vpack.c.bf16 %v784, %v776
        %v793 = vpack.c.bf16 %v785, %v777
        %v794 = vpack.c.bf16 %v786, %v778
        %v795 = vld [vmem:[#allocation2] sm:$0xff]
        %v796 = vld [vmem:[#allocation2 + $0x8] sm:$0xff]
        %v797 = vld [vmem:[%s389] sm:$0xf]
        %v798 = vld [vmem:[%s389 + $0x4] sm:$0xf]
        %v799 = vld [vmem:[%s389 + $0x8] sm:$0xf]
        %v800 = vld [vmem:[%s389 + $0xc] sm:$0xf]
        %v801 = vld [vmem:[%s389 + $0x10] sm:$0xf]
        %v802 = vld [vmem:[%s389 + $0x14] sm:$0xf]
        %v803 = vld [vmem:[%s389 + $0x18] sm:$0xf]
        %v804 = vld [vmem:[%s389 + $0x1c] sm:$0xf]
        %v805 = vld [vmem:[%s389 + $0x20] sm:$0xf]
        %v806 = vld [vmem:[%s389 + $0x24] sm:$0xf]
        %v807 = vld [vmem:[%s389 + $0x28] sm:$0xf]
        %v808 = vld [vmem:[%s389 + $0x2c] sm:$0xf]
        %v809 = vld [vmem:[%s389 + $0x30] sm:$0xf]
        %v810 = vld [vmem:[%s389 + $0x34] sm:$0xf]
        %v811 = vld [vmem:[%s389 + $0x38] sm:$0xf]
        %v812 = vld [vmem:[%s389 + $0x3c] sm:$0xf]
        %v813 = vld [vmem:[%s389 + $0x40] sm:$0xf]
        %v814 = vld [vmem:[%s389 + $0x44] sm:$0xf]
        %v815 = vld [vmem:[%s389 + $0x48] sm:$0xf]
        %v816 = vld [vmem:[%s389 + $0x4c] sm:$0xf]
        %v817 = vld [vmem:[%s389 + $0x50] sm:$0xf]
        %v818 = vld [vmem:[%s389 + $0x54] sm:$0xf]
        %v819 = vld [vmem:[%s389 + $0x58] sm:$0xf]
        %v820 = vld [vmem:[%s389 + $0x5c] sm:$0xf]
        %v821 = vld [vmem:[%s389 + $0x60] sm:$0xf]
        %v822 = vld [vmem:[%s389 + $0x64] sm:$0xf]
        %v823 = vld [vmem:[%s389 + $0x68] sm:$0xf]
        %v824 = vld [vmem:[%s389 + $0x6c] sm:$0xf]
        %v825 = vld [vmem:[%s389 + $0x70] sm:$0xf]
        %v826 = vld [vmem:[%s389 + $0x74] sm:$0xf]
        %v827 = vld [vmem:[%s389 + $0x78] sm:$0xf]
        %v828 = vld [vmem:[%s389 + $0x7c] sm:$0xf]
        %v829 = vld [vmem:[%s389 + $0x80] sm:$0xf]
        %v830 = vld [vmem:[%s389 + $0x84] sm:$0xf]
        %v831 = vld [vmem:[%s389 + $0x88] sm:$0xf]
        %v832 = vld [vmem:[%s389 + $0x8c] sm:$0xf]
        %v833 = vld [vmem:[%s389 + $0x90] sm:$0xf]
        %v834 = vld [vmem:[%s389 + $0x94] sm:$0xf]
        %v835 = vld [vmem:[%s389 + $0x98] sm:$0xf]
        %v836 = vld [vmem:[%s389 + $0x9c] sm:$0xf]
        %v837 = vld [vmem:[%s389 + $0xa0] sm:$0xf]
        %v838 = vld [vmem:[%s389 + $0xa4] sm:$0xf]
        %v839 = vld [vmem:[%s389 + $0xa8] sm:$0xf]
        %v840 = vld [vmem:[%s389 + $0xac] sm:$0xf]
        %v841 = vld [vmem:[%s389 + $0xb0] sm:$0xf]
        %v842 = vld [vmem:[%s389 + $0xb4] sm:$0xf]
        %v843 = vld [vmem:[%s389 + $0xb8] sm:$0xf]
        %v844 = vld [vmem:[%s389 + $0xbc] sm:$0xf]
        %v845 = vld [vmem:[%s389 + $0xc0] sm:$0xf]
        %v846 = vld [vmem:[%s389 + $0xc4] sm:$0xf]
        %v847 = vld [vmem:[%s389 + $0xc8] sm:$0xf]
        %v848 = vld [vmem:[%s389 + $0xcc] sm:$0xf]
        %v849 = vld [vmem:[%s389 + $0xd0] sm:$0xf]
        %v850 = vld [vmem:[%s389 + $0xd4] sm:$0xf]
        %v851 = vld [vmem:[%s389 + $0xd8] sm:$0xf]
        %v852 = vld [vmem:[%s389 + $0xdc] sm:$0xf]
        %v853 = vld [vmem:[%s389 + $0xe0] sm:$0xf]
        %v854 = vld [vmem:[%s389 + $0xe4] sm:$0xf]
        %v855 = vld [vmem:[%s389 + $0xe8] sm:$0xf]
        %v856 = vld [vmem:[%s389 + $0xec] sm:$0xf]
        %v857 = vld [vmem:[%s389 + $0xf0] sm:$0xf]
        %v858 = vld [vmem:[%s389 + $0xf4] sm:$0xf]
        %v859 = vld [vmem:[%s389 + $0xf8] sm:$0xf]
        %v860 = vld [vmem:[%s389 + $0xfc] sm:$0xf]
        %v861 = vld [vmem:[%s389 + $0x100] sm:$0xf]
        %v862 = vld [vmem:[%s389 + $0x104] sm:$0xf]
        %v863 = vld [vmem:[%s389 + $0x108] sm:$0xf]
        %v864 = vld [vmem:[%s389 + $0x10c] sm:$0xf]
        %v865 = vld [vmem:[%s389 + $0x110] sm:$0xf]
        %v866 = vld [vmem:[%s389 + $0x114] sm:$0xf]
        %v867 = vld [vmem:[%s389 + $0x118] sm:$0xf]
        %v868 = vld [vmem:[%s389 + $0x11c] sm:$0xf]
        %v869 = vld [vmem:[%s389 + $0x120] sm:$0xf]
        %v870 = vld [vmem:[%s389 + $0x124] sm:$0xf]
        %v871 = vld [vmem:[%s389 + $0x128] sm:$0xf]
        %v872 = vld [vmem:[%s389 + $0x12c] sm:$0xf]
        %v873 = vld [vmem:[%s389 + $0x130] sm:$0xf]
        %v874 = vld [vmem:[%s389 + $0x134] sm:$0xf]
        %v875 = vld [vmem:[%s389 + $0x138] sm:$0xf]
        %v876 = vld [vmem:[%s389 + $0x13c] sm:$0xf]
        %v877 = vld [vmem:[%s389 + $0x140] sm:$0xf]
        %v878 = vld [vmem:[%s389 + $0x144] sm:$0xf]
        %v879 = vld [vmem:[%s389 + $0x148] sm:$0xf]
        %v880 = vld [vmem:[%s389 + $0x14c] sm:$0xf]
        %v881 = vld [vmem:[%s389 + $0x150] sm:$0xf]
        %v882 = vld [vmem:[%s389 + $0x154] sm:$0xf]
        %v883 = vld [vmem:[%s389 + $0x158] sm:$0xf]
        %v884 = vld [vmem:[%s389 + $0x15c] sm:$0xf]
        %v885 = vld [vmem:[%s389 + $0x160] sm:$0xf]
        %v886 = vld [vmem:[%s389 + $0x164] sm:$0xf]
        %v887 = vld [vmem:[%s389 + $0x168] sm:$0xf]
        %v888 = vld [vmem:[%s389 + $0x16c] sm:$0xf]
        %v889 = vld [vmem:[%s389 + $0x170] sm:$0xf]
        %v890 = vld [vmem:[%s389 + $0x174] sm:$0xf]
        %v891 = vld [vmem:[%s389 + $0x178] sm:$0xf]
        %v892 = vld [vmem:[%s389 + $0x17c] sm:$0xf]
        %v893 = vld [vmem:[%s389 + $0x180] sm:$0xf]
        %v894 = vld [vmem:[%s389 + $0x184] sm:$0xf]
        %v895 = vld [vmem:[%s389 + $0x188] sm:$0xf]
        %v896 = vld [vmem:[%s389 + $0x18c] sm:$0xf]
        %v897 = vld [vmem:[%s389 + $0x190] sm:$0xf]
        %v898 = vld [vmem:[%s389 + $0x194] sm:$0xf]
        %v899 = vld [vmem:[%s389 + $0x198] sm:$0xf]
        %v900 = vld [vmem:[%s389 + $0x19c] sm:$0xf]
        %v901 = vld [vmem:[%s389 + $0x1a0] sm:$0xf]
        %v902 = vld [vmem:[%s389 + $0x1a4] sm:$0xf]
        %v903 = vld [vmem:[%s389 + $0x1a8] sm:$0xf]
        %v904 = vld [vmem:[%s389 + $0x1ac] sm:$0xf]
        %v905 = vld [vmem:[%s389 + $0x1b0] sm:$0xf]
        %v906 = vld [vmem:[%s389 + $0x1b4] sm:$0xf]
        %v907 = vld [vmem:[%s389 + $0x1b8] sm:$0xf]
        %v908 = vld [vmem:[%s389 + $0x1bc] sm:$0xf]
        %v909 = vld [vmem:[%s389 + $0x1c0] sm:$0xf]
        %v910 = vld [vmem:[%s389 + $0x1c4] sm:$0xf]
        %v911 = vld [vmem:[%s389 + $0x1c8] sm:$0xf]
        %v912 = vld [vmem:[%s389 + $0x1cc] sm:$0xf]
        %v913 = vld [vmem:[%s389 + $0x1d0] sm:$0xf]
        %v914 = vld [vmem:[%s389 + $0x1d4] sm:$0xf]
        %v915 = vld [vmem:[%s389 + $0x1d8] sm:$0xf]
        %v916 = vld [vmem:[%s389 + $0x1dc] sm:$0xf]
        %v917 = vld [vmem:[%s389 + $0x1e0] sm:$0xf]
        %v918 = vld [vmem:[%s389 + $0x1e4] sm:$0xf]
        %v919 = vld [vmem:[%s389 + $0x1e8] sm:$0xf]
        %v920 = vld [vmem:[%s389 + $0x1ec] sm:$0xf]
        %v921 = vld [vmem:[%s389 + $0x1f0] sm:$0xf]
        %v922 = vld [vmem:[%s389 + $0x1f4] sm:$0xf]
        %v923 = vld [vmem:[%s389 + $0x1f8] sm:$0xf]
        %v924 = vld [vmem:[%s389 + $0x1fc] sm:$0xf]
        %v1053 = vunpack.c.l.b16 %v797
        %v1054 = vunpack.c.l.b16 %v798
        %v1055 = vunpack.c.l.b16 %v799
        %v1056 = vunpack.c.l.b16 %v800
        %v1057 = vunpack.c.l.b16 %v801
        %v1058 = vunpack.c.l.b16 %v802
        %v1059 = vunpack.c.l.b16 %v803
        %v1060 = vunpack.c.l.b16 %v804
        %v1061 = vunpack.c.l.b16 %v805
        %v1062 = vunpack.c.l.b16 %v806
        %v1063 = vunpack.c.l.b16 %v807
        %v1064 = vunpack.c.l.b16 %v808
        %v1065 = vunpack.c.l.b16 %v809
        %v1066 = vunpack.c.l.b16 %v810
        %v1067 = vunpack.c.l.b16 %v811
        %v1068 = vunpack.c.l.b16 %v812
        %v1069 = vunpack.c.l.b16 %v813
        %v1070 = vunpack.c.l.b16 %v814
        %v1071 = vunpack.c.l.b16 %v815
        %v1072 = vunpack.c.l.b16 %v816
        %v1073 = vunpack.c.l.b16 %v817
        %v1074 = vunpack.c.l.b16 %v818
        %v1075 = vunpack.c.l.b16 %v819
        %v1076 = vunpack.c.l.b16 %v820
        %v1077 = vunpack.c.l.b16 %v821
        %v1078 = vunpack.c.l.b16 %v822
        %v1079 = vunpack.c.l.b16 %v823
        %v1080 = vunpack.c.l.b16 %v824
        %v1081 = vunpack.c.l.b16 %v825
        %v1082 = vunpack.c.l.b16 %v826
        %v1083 = vunpack.c.l.b16 %v827
        %v1084 = vunpack.c.l.b16 %v828
        %v1085 = vunpack.c.l.b16 %v829
        %v1086 = vunpack.c.l.b16 %v830
        %v1087 = vunpack.c.l.b16 %v831
        %v1088 = vunpack.c.l.b16 %v832
        %v1089 = vunpack.c.l.b16 %v833
        %v1090 = vunpack.c.l.b16 %v834
        %v1091 = vunpack.c.l.b16 %v835
        %v1092 = vunpack.c.l.b16 %v836
        %v1093 = vunpack.c.l.b16 %v837
        %v1094 = vunpack.c.l.b16 %v838
        %v1095 = vunpack.c.l.b16 %v839
        %v1096 = vunpack.c.l.b16 %v840
        %v1097 = vunpack.c.l.b16 %v841
        %v1098 = vunpack.c.l.b16 %v842
        %v1099 = vunpack.c.l.b16 %v843
        %v1100 = vunpack.c.l.b16 %v844
        %v1101 = vunpack.c.l.b16 %v845
        %v1102 = vunpack.c.l.b16 %v846
        %v1103 = vunpack.c.l.b16 %v847
        %v1104 = vunpack.c.l.b16 %v848
        %v1105 = vunpack.c.l.b16 %v849
        %v1106 = vunpack.c.l.b16 %v850
        %v1107 = vunpack.c.l.b16 %v851
        %v1108 = vunpack.c.l.b16 %v852
        %v1109 = vunpack.c.l.b16 %v853
        %v1110 = vunpack.c.l.b16 %v854
        %v1111 = vunpack.c.l.b16 %v855
        %v1112 = vunpack.c.l.b16 %v856
        %v1113 = vunpack.c.l.b16 %v857
        %v1114 = vunpack.c.l.b16 %v858
        %v1115 = vunpack.c.l.b16 %v859
        %v1116 = vunpack.c.l.b16 %v860
        %v1117 = vunpack.c.l.b16 %v861
        %v1118 = vunpack.c.l.b16 %v862
        %v1119 = vunpack.c.l.b16 %v863
        %v1120 = vunpack.c.l.b16 %v864
        %v1121 = vunpack.c.l.b16 %v865
        %v1122 = vunpack.c.l.b16 %v866
        %v1123 = vunpack.c.l.b16 %v867
        %v1124 = vunpack.c.l.b16 %v868
        %v1125 = vunpack.c.l.b16 %v869
        %v1126 = vunpack.c.l.b16 %v870
        %v1127 = vunpack.c.l.b16 %v871
        %v1128 = vunpack.c.l.b16 %v872
        %v1129 = vunpack.c.l.b16 %v873
        %v1130 = vunpack.c.l.b16 %v874
        %v1131 = vunpack.c.l.b16 %v875
        %v1132 = vunpack.c.l.b16 %v876
        %v1133 = vunpack.c.l.b16 %v877
        %v1134 = vunpack.c.l.b16 %v878
        %v1135 = vunpack.c.l.b16 %v879
        %v1136 = vunpack.c.l.b16 %v880
        %v1137 = vunpack.c.l.b16 %v881
        %v1138 = vunpack.c.l.b16 %v882
        %v1139 = vunpack.c.l.b16 %v883
        %v1140 = vunpack.c.l.b16 %v884
        %v1141 = vunpack.c.l.b16 %v885
        %v1142 = vunpack.c.l.b16 %v886
        %v1143 = vunpack.c.l.b16 %v887
        %v1144 = vunpack.c.l.b16 %v888
        %v1145 = vunpack.c.l.b16 %v889
        %v1146 = vunpack.c.l.b16 %v890
        %v1147 = vunpack.c.l.b16 %v891
        %v1148 = vunpack.c.l.b16 %v892
        %v1149 = vunpack.c.l.b16 %v893
        %v1150 = vunpack.c.l.b16 %v894
        %v1151 = vunpack.c.l.b16 %v895
        %v1152 = vunpack.c.l.b16 %v896
        %v1153 = vunpack.c.l.b16 %v897
        %v1154 = vunpack.c.l.b16 %v898
        %v1155 = vunpack.c.l.b16 %v899
        %v1156 = vunpack.c.l.b16 %v900
        %v1157 = vunpack.c.l.b16 %v901
        %v1158 = vunpack.c.l.b16 %v902
        %v1159 = vunpack.c.l.b16 %v903
        %v1160 = vunpack.c.l.b16 %v904
        %v1161 = vunpack.c.l.b16 %v905
        %v1162 = vunpack.c.l.b16 %v906
        %v1163 = vunpack.c.l.b16 %v907
        %v1164 = vunpack.c.l.b16 %v908
        %v1165 = vunpack.c.l.b16 %v909
        %v1166 = vunpack.c.l.b16 %v910
        %v1167 = vunpack.c.l.b16 %v911
        %v1168 = vunpack.c.l.b16 %v912
        %v1169 = vunpack.c.l.b16 %v913
        %v1170 = vunpack.c.l.b16 %v914
        %v1171 = vunpack.c.l.b16 %v915
        %v1172 = vunpack.c.l.b16 %v916
        %v1173 = vunpack.c.l.b16 %v917
        %v1174 = vunpack.c.l.b16 %v918
        %v1175 = vunpack.c.l.b16 %v919
        %v1176 = vunpack.c.l.b16 %v920
        %v1177 = vunpack.c.l.b16 %v921
        %v1178 = vunpack.c.l.b16 %v922
        %v1179 = vunpack.c.l.b16 %v923
        %v1180 = vunpack.c.l.b16 %v924
        %v1181 = vpack.c.b16 %v1054, %v1053
        %v1182 = vpack.c.b16 %v1056, %v1055
        %v1183 = vpack.c.b16 %v1058, %v1057
        %v1184 = vpack.c.b16 %v1060, %v1059
        %v1185 = vpack.c.b16 %v1062, %v1061
        %v1186 = vpack.c.b16 %v1064, %v1063
        %v1187 = vpack.c.b16 %v1066, %v1065
        %v1188 = vpack.c.b16 %v1068, %v1067
        %v1189 = vpack.c.b16 %v1070, %v1069
        %v1190 = vpack.c.b16 %v1072, %v1071
        %v1191 = vpack.c.b16 %v1074, %v1073
        %v1192 = vpack.c.b16 %v1076, %v1075
        %v1193 = vpack.c.b16 %v1078, %v1077
        %v1194 = vpack.c.b16 %v1080, %v1079
        %v1195 = vpack.c.b16 %v1082, %v1081
        %v1196 = vpack.c.b16 %v1084, %v1083
        %v1197 = vpack.c.b16 %v1086, %v1085
        %v1198 = vpack.c.b16 %v1088, %v1087
        %v1199 = vpack.c.b16 %v1090, %v1089
        %v1200 = vpack.c.b16 %v1092, %v1091
        %v1201 = vpack.c.b16 %v1094, %v1093
        %v1202 = vpack.c.b16 %v1096, %v1095
        %v1203 = vpack.c.b16 %v1098, %v1097
        %v1204 = vpack.c.b16 %v1100, %v1099
        %v1205 = vpack.c.b16 %v1102, %v1101
        %v1206 = vpack.c.b16 %v1104, %v1103
        %v1207 = vpack.c.b16 %v1106, %v1105
        %v1208 = vpack.c.b16 %v1108, %v1107
        %v1209 = vpack.c.b16 %v1110, %v1109
        %v1210 = vpack.c.b16 %v1112, %v1111
        %v1211 = vpack.c.b16 %v1114, %v1113
        %v1212 = vpack.c.b16 %v1116, %v1115
        %v1213 = vpack.c.b16 %v1118, %v1117
        %v1214 = vpack.c.b16 %v1120, %v1119
        %v1215 = vpack.c.b16 %v1122, %v1121
        %v1216 = vpack.c.b16 %v1124, %v1123
        %v1217 = vpack.c.b16 %v1126, %v1125
        %v1218 = vpack.c.b16 %v1128, %v1127
        %v1219 = vpack.c.b16 %v1130, %v1129
        %v1220 = vpack.c.b16 %v1132, %v1131
        %v1221 = vpack.c.b16 %v1134, %v1133
        %v1222 = vpack.c.b16 %v1136, %v1135
        %v1223 = vpack.c.b16 %v1138, %v1137
        %v1224 = vpack.c.b16 %v1140, %v1139
        %v1225 = vpack.c.b16 %v1142, %v1141
        %v1226 = vpack.c.b16 %v1144, %v1143
        %v1227 = vpack.c.b16 %v1146, %v1145
        %v1228 = vpack.c.b16 %v1148, %v1147
        %v1229 = vpack.c.b16 %v1150, %v1149
        %v1230 = vpack.c.b16 %v1152, %v1151
        %v1231 = vpack.c.b16 %v1154, %v1153
        %v1232 = vpack.c.b16 %v1156, %v1155
        %v1233 = vpack.c.b16 %v1158, %v1157
        %v1234 = vpack.c.b16 %v1160, %v1159
        %v1235 = vpack.c.b16 %v1162, %v1161
        %v1236 = vpack.c.b16 %v1164, %v1163
        %v1237 = vpack.c.b16 %v1166, %v1165
        %v1238 = vpack.c.b16 %v1168, %v1167
        %v1239 = vpack.c.b16 %v1170, %v1169
        %v1240 = vpack.c.b16 %v1172, %v1171
        %v1241 = vpack.c.b16 %v1174, %v1173
        %v1242 = vpack.c.b16 %v1176, %v1175
        %v1243 = vpack.c.b16 %v1178, %v1177
        %v1244 = vpack.c.b16 %v1180, %v1179
        %1309 = vmatprep.subr.bf16.mxu0 0
        %1310 = vmatpush1.bf16.msra.mxu0 %v1181
        %1311 = vmatprep.subr.bf16.mxu0 0
        %1312 = vmatpush1.bf16.msra.mxu0 %v1182
        %1313 = vmatprep.subr.bf16.mxu0 0
        %1314 = vmatpush1.bf16.msra.mxu0 %v1183
        %1315 = vmatprep.subr.bf16.mxu0 0
        %1316 = vmatpush1.bf16.msra.mxu0 %v1184
        %1317 = vmatprep.subr.bf16.mxu0 0
        %1318 = vmatpush1.bf16.msra.mxu0 %v1185
        %1319 = vmatprep.subr.bf16.mxu0 0
        %1320 = vmatpush1.bf16.msra.mxu0 %v1186
        %1321 = vmatprep.subr.bf16.mxu0 0
        %1322 = vmatpush1.bf16.msra.mxu0 %v1187
        %1323 = vmatprep.subr.bf16.mxu0 0
        %1324 = vmatpush1.bf16.msra.mxu0 %v1188
        %1325 = vmatprep.subr.bf16.mxu0 0
        %1326 = vmatpush1.bf16.msra.mxu0 %v1189
        %1327 = vmatprep.subr.bf16.mxu0 0
        %1328 = vmatpush1.bf16.msra.mxu0 %v1190
        %1329 = vmatprep.subr.bf16.mxu0 0
        %1330 = vmatpush1.bf16.msra.mxu0 %v1191
        %1331 = vmatprep.subr.bf16.mxu0 0
        %1332 = vmatpush1.bf16.msra.mxu0 %v1192
        %1333 = vmatprep.subr.bf16.mxu0 0
        %1334 = vmatpush1.bf16.msra.mxu0 %v1193
        %1335 = vmatprep.subr.bf16.mxu0 0
        %1336 = vmatpush1.bf16.msra.mxu0 %v1194
        %1337 = vmatprep.subr.bf16.mxu0 0
        %1338 = vmatpush1.bf16.msra.mxu0 %v1195
        %1339 = vmatprep.subr.bf16.mxu0 0
        %1340 = vmatpush1.bf16.msra.mxu0 %v1196
        %1341 = vmatprep.mubr.bf16.mxu0 %v788
        %1342 = vmatmul.mubr.bf16.gmra.mrb[0].mxu0 %v787
        %v1343 = vpop.f32.mrb[0].mxu0
        %v1344 = vadd.f32 0.0, %v1343
        %v1345 = vpop.f32.mrb[0].mxu0
        %v1346 = vpop.f32.mrb[0].mxu0
        %v1347 = vadd.f32 0.0, %v1346
        %v1348 = vpop.f32.mrb[0].mxu0
        %1349 = vdwg.mxu0
        %1350 = vmatprep.subr.bf16.mxu0 0
        %1351 = vmatpush1.bf16.msra.mxu0 %v1197
        %1352 = vmatprep.subr.bf16.mxu0 0
        %1353 = vmatpush1.bf16.msra.mxu0 %v1198
        %1354 = vmatprep.subr.bf16.mxu0 0
        %1355 = vmatpush1.bf16.msra.mxu0 %v1199
        %1356 = vmatprep.subr.bf16.mxu0 0
        %1357 = vmatpush1.bf16.msra.mxu0 %v1200
        %1358 = vmatprep.subr.bf16.mxu0 0
        %1359 = vmatpush1.bf16.msra.mxu0 %v1201
        %1360 = vmatprep.subr.bf16.mxu0 0
        %1361 = vmatpush1.bf16.msra.mxu0 %v1202
        %1362 = vmatprep.subr.bf16.mxu0 0
        %1363 = vmatpush1.bf16.msra.mxu0 %v1203
        %1364 = vmatprep.subr.bf16.mxu0 0
        %1365 = vmatpush1.bf16.msra.mxu0 %v1204
        %1366 = vmatprep.subr.bf16.mxu0 0
        %1367 = vmatpush1.bf16.msra.mxu0 %v1205
        %1368 = vmatprep.subr.bf16.mxu0 0
        %1369 = vmatpush1.bf16.msra.mxu0 %v1206
        %1370 = vmatprep.subr.bf16.mxu0 0
        %1371 = vmatpush1.bf16.msra.mxu0 %v1207
        %1372 = vmatprep.subr.bf16.mxu0 0
        %1373 = vmatpush1.bf16.msra.mxu0 %v1208
        %1374 = vmatprep.subr.bf16.mxu0 0
        %1375 = vmatpush1.bf16.msra.mxu0 %v1209
        %1376 = vmatprep.subr.bf16.mxu0 0
        %1377 = vmatpush1.bf16.msra.mxu0 %v1210
        %1378 = vmatprep.subr.bf16.mxu0 0
        %1379 = vmatpush1.bf16.msra.mxu0 %v1211
        %1380 = vmatprep.subr.bf16.mxu0 0
        %1381 = vmatpush1.bf16.msra.mxu0 %v1212
        %1382 = vmatprep.mubr.bf16.mxu0 %v790
        %1383 = vmatmul.mubr.bf16.gmra.mrb[0].mxu0 %v789
        %v1384 = vpop.f32.mrb[0].mxu0
        %v1385 = vadd.f32 %v1344, %v1384
        %v1386 = vpop.f32.mrb[0].mxu0
        %v1387 = vpop.f32.mrb[0].mxu0
        %v1388 = vadd.f32 %v1347, %v1387
        %v1389 = vpop.f32.mrb[0].mxu0
        %1390 = vdwg.mxu0
        %1391 = vmatprep.subr.bf16.mxu0 0
        %1392 = vmatpush1.bf16.msra.mxu0 %v1213
        %1393 = vmatprep.subr.bf16.mxu0 0
        %1394 = vmatpush1.bf16.msra.mxu0 %v1214
        %1395 = vmatprep.subr.bf16.mxu0 0
        %1396 = vmatpush1.bf16.msra.mxu0 %v1215
        %1397 = vmatprep.subr.bf16.mxu0 0
        %1398 = vmatpush1.bf16.msra.mxu0 %v1216
        %1399 = vmatprep.subr.bf16.mxu0 0
        %1400 = vmatpush1.bf16.msra.mxu0 %v1217
        %1401 = vmatprep.subr.bf16.mxu0 0
        %1402 = vmatpush1.bf16.msra.mxu0 %v1218
        %1403 = vmatprep.subr.bf16.mxu0 0
        %1404 = vmatpush1.bf16.msra.mxu0 %v1219
        %1405 = vmatprep.subr.bf16.mxu0 0
        %1406 = vmatpush1.bf16.msra.mxu0 %v1220
        %1407 = vmatprep.subr.bf16.mxu0 0
        %1408 = vmatpush1.bf16.msra.mxu0 %v1221
        %1409 = vmatprep.subr.bf16.mxu0 0
        %1410 = vmatpush1.bf16.msra.mxu0 %v1222
        %1411 = vmatprep.subr.bf16.mxu0 0
        %1412 = vmatpush1.bf16.msra.mxu0 %v1223
        %1413 = vmatprep.subr.bf16.mxu0 0
        %1414 = vmatpush1.bf16.msra.mxu0 %v1224
        %1415 = vmatprep.subr.bf16.mxu0 0
        %1416 = vmatpush1.bf16.msra.mxu0 %v1225
        %1417 = vmatprep.subr.bf16.mxu0 0
        %1418 = vmatpush1.bf16.msra.mxu0 %v1226
        %1419 = vmatprep.subr.bf16.mxu0 0
        %1420 = vmatpush1.bf16.msra.mxu0 %v1227
        %1421 = vmatprep.subr.bf16.mxu0 0
        %1422 = vmatpush1.bf16.msra.mxu0 %v1228
        %1423 = vmatprep.mubr.bf16.mxu0 %v792
        %1424 = vmatmul.mubr.bf16.gmra.mrb[0].mxu0 %v791
        %v1425 = vpop.f32.mrb[0].mxu0
        %v1426 = vadd.f32 %v1385, %v1425
        %v1427 = vpop.f32.mrb[0].mxu0
        %v1428 = vpop.f32.mrb[0].mxu0
        %v1429 = vadd.f32 %v1388, %v1428
        %v1430 = vpop.f32.mrb[0].mxu0
        %1431 = vdwg.mxu0
        %1432 = vmatprep.subr.bf16.mxu0 0
        %1433 = vmatpush1.bf16.msra.mxu0 %v1229
        %1434 = vmatprep.subr.bf16.mxu0 0
        %1435 = vmatpush1.bf16.msra.mxu0 %v1230
        %1436 = vmatprep.subr.bf16.mxu0 0
        %1437 = vmatpush1.bf16.msra.mxu0 %v1231
        %1438 = vmatprep.subr.bf16.mxu0 0
        %1439 = vmatpush1.bf16.msra.mxu0 %v1232
        %1440 = vmatprep.subr.bf16.mxu0 0
        %1441 = vmatpush1.bf16.msra.mxu0 %v1233
        %1442 = vmatprep.subr.bf16.mxu0 0
        %1443 = vmatpush1.bf16.msra.mxu0 %v1234
        %1444 = vmatprep.subr.bf16.mxu0 0
        %1445 = vmatpush1.bf16.msra.mxu0 %v1235
        %1446 = vmatprep.subr.bf16.mxu0 0
        %1447 = vmatpush1.bf16.msra.mxu0 %v1236
        %1448 = vmatprep.subr.bf16.mxu0 0
        %1449 = vmatpush1.bf16.msra.mxu0 %v1237
        %1450 = vmatprep.subr.bf16.mxu0 0
        %1451 = vmatpush1.bf16.msra.mxu0 %v1238
        %1452 = vmatprep.subr.bf16.mxu0 0
        %1453 = vmatpush1.bf16.msra.mxu0 %v1239
        %1454 = vmatprep.subr.bf16.mxu0 0
        %1455 = vmatpush1.bf16.msra.mxu0 %v1240
        %1456 = vmatprep.subr.bf16.mxu0 0
        %1457 = vmatpush1.bf16.msra.mxu0 %v1241
        %1458 = vmatprep.subr.bf16.mxu0 0
        %1459 = vmatpush1.bf16.msra.mxu0 %v1242
        %1460 = vmatprep.subr.bf16.mxu0 0
        %1461 = vmatpush1.bf16.msra.mxu0 %v1243
        %1462 = vmatprep.subr.bf16.mxu0 0
        %1463 = vmatpush1.bf16.msra.mxu0 %v1244
        %1464 = vmatprep.mubr.bf16.mxu0 %v794
        %1465 = vmatmul.mubr.bf16.gmra.mrb[0].mxu0 %v793
        %v1466 = vpop.f32.mrb[0].mxu0
        %v1467 = vadd.f32 %v1426, %v1466
        %v1468 = vpop.f32.mrb[0].mxu0
        %v1469 = vpop.f32.mrb[0].mxu0
        %v1470 = vadd.f32 %v1429, %v1469
        %v1471 = vpop.f32.mrb[0].mxu0
        %1472 = vdwg.mxu0
        %v1473 = vadd.f32 %v795, %v1467
        %v1474 = vadd.f32 %v796, %v1470
        %1475 = vst.msk [vmem:[#allocation2] sm:$0xff] %vm595, %v1473
        %1476 = vst.msk [vmem:[#allocation2 + $0x8] sm:$0xff] %vm595, %v1474
        %p1477 = scmp.eq.s32.totalorder %s32, 1
        // Predicated region
        $region81: #{encoder_llata_forward.5} parent=47 // pred_check
          %p1478 = pneg %p1477
        $region82: #{encoder_llata_forward.5} parent=47 // pred_check_branch
          %1480 = sbr.rel (%p1478) target = $region84
        $region83: #{encoder_llata_forward.5} parent=47 // pred_region
          %v1481 = vld [vmem:[#allocation3] sm:$0xf]
          %v1482 = vld [vmem:[#allocation3 + $0x4] sm:$0xf]
          %v1483 = vunpack.c.l.bf16 %v1481
          %v1484 = vunpack.c.l.bf16 %v1482
          %v1485 = vld [vmem:[#allocation2] sm:$0xff]
          %v1486 = vld [vmem:[#allocation2 + $0x8] sm:$0xff]
          %v1487 = vadd.f32 %v1483, %v1485
          %v1488 = vadd.f32 %v1484, %v1486
          %v1489 = vld [vmem:[#allocation11] sm:$0x1]
          %v1491 = vlaneseq
          %v1492 = vshrl.u32 %v1491, 7
          %v1493 = vsub.s32 0, %v1492
          %v1494 = vrot.slane %v1489, %v1493
          %v1496 = vadd.f32 %v1487, %v1494
          %v1497 = vadd.f32 %v1488, %v1494
          %v1498 = vsel %vm595, %v1496, 0.0
          %1499 = vadd.xlane.f32.xlu0 %v1498
          %v1500 = vpop.xlane.xlu0 %1499
          %v1501 = vsel %vm595, %v1497, 0.0
          %1502 = vadd.xlane.f32.xlu0 %v1501
          %v1503 = vpop.xlane.xlu0 %1502
          %v1504 = vrcp.pop 32.0
          %v1505 = vmul.f32 %v1500, %v1504
          %v1506 = vmul.f32 %v1503, %v1504
          %v1507 = vsub.f32 %v1496, %v1505
          %v1508 = vsub.f32 %v1497, %v1506
          %v1509 = vmul.f32 %v1507, %v1507
          %v1510 = vmul.f32 %v1508, %v1508
          %v1511 = vsel %vm595, %v1509, 0.0
          %1512 = vadd.xlane.f32.xlu0 %v1511
          %v1513 = vpop.xlane.xlu0 %1512
          %v1514 = vsel %vm595, %v1510, 0.0
          %1515 = vadd.xlane.f32.xlu0 %v1514
          %v1516 = vpop.xlane.xlu0 %1515
          %v1517 = vmul.f32 %v1513, %v1504
          %v1518 = vmul.f32 %v1516, %v1504
          %v1519 = vadd.f32 %v1517, 1e-05
          %v1520 = vadd.f32 %v1518, 1e-05
          %v1521 = vrsqrt.pop %v1519
          %v1522 = vrsqrt.pop %v1520
          %v1523 = vmul.f32 %v1507, %v1521
          %v1524 = vmul.f32 %v1508, %v1522
          %v1525 = vld [vmem:[#allocation12] sm:$0x1]
          %v1527 = vlaneseq
          %v1528 = vshrl.u32 %v1527, 7
          %v1529 = vsub.s32 0, %v1528
          %v1530 = vrot.slane %v1525, %v1529
          %v1532 = vmul.f32 %v1523, %v1530
          %v1533 = vmul.f32 %v1524, %v1530
          %v1534 = vld [vmem:[#allocation14] sm:$0x1]
          %v1536 = vlaneseq
          %v1537 = vshrl.u32 %v1536, 7
          %v1538 = vsub.s32 0, %v1537
          %v1539 = vrot.slane %v1534, %v1538
          %v1541 = vadd.f32 %v1532, %v1539
          %v1542 = vadd.f32 %v1533, %v1539
          %1543 = vst.msk [vmem:[#allocation15] sm:$0xff] %vm595, %v1541
          %1544 = vst.msk [vmem:[#allocation15 + $0x8] sm:$0xff] %vm595, %v1542
        $region84: #{encoder_llata_forward.5} parent=47 // pred_fallthru
          _
        // Predicated region
        $region85: #{encoder_llata_forward.5} parent=47 // pred_check
          %p1545 = pneg %p224
        $region86: #{encoder_llata_forward.5} parent=47 // pred_check_branch
          %1547 = sbr.rel (%p1545) target = $region88
        $region87: #{encoder_llata_forward.5} parent=47 // pred_region
          %s1548 = smul.u32 2, %s31
          %s1550 = ssub.s32 256, 256
          %1551 = vsyncadd [#allocation5], %s1550
          %s1552 = smul.addr %s1548, 128
          %s1553 = scalar_lea.hbm %s7, %s1552
          %s1554 = sshll.u32 [#allocation15], 4
          %s1555 = int_to_ptr.vmem [resolvable:$true] %s1554
          %1560 = dma.vmem_to_hbm [thread:$0]  %s1555, 256, %s1553, [#allocation5], 128, 128, 8
        $region88: #{encoder_llata_forward.5} parent=47 // pred_fallthru
          _
        // Predicated region
        $region89: #{encoder_llata_forward.5} parent=47 // pred_check
          %p1561 = pneg %p224
        $region90: #{encoder_llata_forward.5} parent=47 // pred_check_branch
          %1563 = sbr.rel (%p1561) target = $region92
        $region91: #{encoder_llata_forward.5} parent=47 // pred_region
          %1564 = dma.done [#allocation5], 256
        $region92: #{encoder_llata_forward.5} parent=47 // pred_fallthru
          _
      $region48: #{encoder_llata_forward.5} parent=5 // pred_fallthru
        _
      %p1565 = scmp.le.s32.totalorder 2, %s22
      // Predicated region
      $region93: #{encoder_llata_forward.5} parent=5 // pred_check
        %p1566 = pneg %p1565
      $region94: #{encoder_llata_forward.5} parent=5 // pred_check_branch
        %1568 = sbr.rel (%p1566) target = $region96
      $region95: #{encoder_llata_forward.5} parent=5 // pred_region
        %s1569 = ssub.s32 %s22, 2
      $region96: #{encoder_llata_forward.5} parent=5 // pred_fallthru
        _
    $region6: #{encoder_llata_forward.5} parent=1 // loop_footer
      %s26 = sadd.s32 1, %s22
    $region7: #{encoder_llata_forward.5} parent=1 // loop_footer_branch
      %21 = sbr.rel target = $region3
    $region8: #{encoder_llata_forward.5} parent=1 // loop_exit
      _
    %1570 = vsyncpa [#allocation4], 1
    %s1571 = scalar_lea.sflag [#allocation4], 1
    %1572 = vsyncpa %s1571, 1
    %1573 = vsyncpa [#allocation7], 1
    %s1574 = scalar_lea.sflag [#allocation7], 1
    %1575 = vsyncpa %s1574, 1
    %1576 = vsyncpa [#allocation10], 1
    %s1577 = scalar_lea.sflag [#allocation10], 1
    %1578 = vsyncpa %s1577, 1
    %1579 = vsyncpa [#allocation13], 1
    %1580 = vsyncpa [#allocation5], 1
    %s1581 = scalar_lea.sflag [#allocation5], 1
    %1582 = vsyncpa %s1581, 1

</llo_original>
